<compile_context>
chip_gen: v6e
topology: v6e:2x2x1
jax: 0.10.0
libtpu: 0.0.40
codegen_flags: <defaults>
</compile_context>

<pallas_src>
import functools

import jax
import jax.numpy as jnp
from jax import lax
from jax.experimental import pallas as pl
from jax.experimental.pallas import tpu as pltpu


def _rup(n, m):
    return -(-n // m) * m


def _erf(x):
    # Abramowitz & Stegun 7.1.26 rational approximation (|err| < 1.5e-7),
    # built only from ops with guaranteed Mosaic lowerings (exp / mul / add /
    # select).  Keeps torch.nn.GELU()'s exact-erf semantics to f32 precision.
    a1, a2, a3, a4, a5 = (0.254829592, -0.284496736, 1.421413741,
                          -1.453152027, 1.061405429)
    p = 0.3275911
    z = jnp.abs(x)
    t = 1.0 / (1.0 + p * z)
    poly = ((((a5 * t + a4) * t + a3) * t + a2) * t + a1) * t
    y = 1.0 - poly * jnp.exp(-z * z)
    return jnp.where(x >= 0.0, y, -y)


def _gelu(x):
    # exact (erf-based) GELU == torch.nn.GELU() default
    return 0.5 * x * (1.0 + _erf(x * 0.7071067811865476))


def spatial_block_kernel(
    xav_ref, nz_ref,
    w1_ref, w2_ref, w3_ref, w4a_ref, w4b_ref,
    cols_ref, seg_ref, segT_ref,
    o_ref,
    *, col_off, nz_split, inv_p, eps,
):
    # seg : (b_tile*Pp, btp) f32 0/1 indicator -> per-sample lane sums.
    # segT: (btp, b_tile*Pp) f32 -> broadcast per-sample scalars back to lanes.
    # Both have zero rows/cols at spatial-pad lanes, so pad lanes never
    # contaminate the statistics and are re-zeroed by every norm.
    seg = seg_ref[...]
    segT = segT_ref[...]

    def col(name):
        off, c = col_off[name]
        return cols_ref[off:off + c, :]          # (c, 1) f32

    def conv_norm_gelu(act, w_ref, g, b):
        # 1x1 conv == channel matmul over the whole (Cin, b_tile*P) slab:
        # a single MXU push with effective N = b_tile*P lanes.
        h = jnp.dot(w_ref[...], act.astype(jnp.bfloat16),
                    preferred_element_type=jnp.float32)
        # InstanceNorm2d(affine=True): per-sample / per-channel stats via the
        # (otherwise idle) MXU instead of cross-lane XLU reductions.
        s1 = jnp.dot(h, seg, preferred_element_type=jnp.float32) * inv_p
        s2 = jnp.dot(h * h, seg, preferred_element_type=jnp.float32) * inv_p
        var = s2 - s1 * s1                       # biased, as in InstanceNorm
        scale = g * lax.rsqrt(var + eps)         # (C, btp)
        shift = b - scale * s1
        hn = (h * jnp.dot(scale, segT, preferred_element_type=jnp.float32)
              + jnp.dot(shift, segT, preferred_element_type=jnp.float32))
        return _gelu(hn)

    c1p, c2p, c3p = nz_split

    # layers1 (fused [x, attachedvec] contraction; attachedvec noise was
    # already added in the wrapper).  Pre-norm conv biases are omitted: a
    # per-channel constant is exactly removed by the InstanceNorm mean.
    h1 = conv_norm_gelu(xav_ref[...], w1_ref, col("g1"), col("be1"))
    h1 = h1 + nz_ref[0:c1p, :].astype(jnp.float32)                 # add_noise

    h2 = conv_norm_gelu(h1, w2_ref, col("g2"), col("be2"))
    h2 = h2 + nz_ref[c1p:c1p + c2p, :].astype(jnp.float32)         # add_noise

    h3 = conv_norm_gelu(h2, w3_ref, col("g3"), col("be3"))
    h3 = h3 + nz_ref[c1p + c2p:c1p + c2p + c3p, :].astype(jnp.float32)

    # layers4: conv -> norm -> GELU -> conv (+ b4b, the only live bias)
    h4 = conv_norm_gelu(h3, w4a_ref, col("g4"), col("be4"))
    out = jnp.dot(w4b_ref[...], h4.astype(jnp.bfloat16),
                  preferred_element_type=jnp.float32) + col("b4b")
    o_ref[...] = out.astype(o_ref.dtype)


def init_params(key, L, out_dim):
    """PyTorch-native parameter shapes: conv weight (Cout, Cin), bias (Cout,).
    b1/b2/b3/b4a are kept for module fidelity but are mathematically no-ops
    (cancelled by the following InstanceNorm) and are not sent to the kernel."""
    Cx = 4 * L + 2
    Ca = 4 * out_dim
    C1, C2, C3, C4 = 4 * L, 3 * L, 2 * L, L
    ks = jax.random.split(key, 10)

    def w(k, cout, cin):
        return 0.1 * jax.random.normal(k, (cout, cin), jnp.float32)

    def b(k, c):
        return 0.1 * jax.random.normal(k, (c,), jnp.float32)

    return dict(
        w1=w(ks[0], C1, Cx + Ca), b1=b(ks[1], C1),
        g1=jnp.ones((C1,), jnp.float32), be1=jnp.zeros((C1,), jnp.float32),
        w2=w(ks[2], C2, C1), b2=b(ks[3], C2),
        g2=jnp.ones((C2,), jnp.float32), be2=jnp.zeros((C2,), jnp.float32),
        w3=w(ks[4], C3, C2), b3=b(ks[5], C3),
        g3=jnp.ones((C3,), jnp.float32), be3=jnp.zeros((C3,), jnp.float32),
        w4a=w(ks[6], C4, C3), b4a=b(ks[7], C4),
        g4=jnp.ones((C4,), jnp.float32), be4=jnp.zeros((C4,), jnp.float32),
        w4b=w(ks[8], out_dim, C4), b4b=b(ks[9], out_dim),
    )


def spatial_block_forward(x_nchw, av_nchw, params, noise_key, L, out_dim,
                          b_tile=2):
    N, Cx, H, W = x_nchw.shape
    Ca = av_nchw.shape[1]
    assert Cx == 4 * L + 2 and Ca == 4 * out_dim
    assert N % b_tile == 0, "batch must be divisible by b_tile"

    C1, C2, C3, C4 = 4 * L, 3 * L, 2 * L, L
    C1p, C2p, C3p, C4p = (_rup(c, 8) for c in (C1, C2, C3, C4))
    Coutp = _rup(out_dim, 8)
    Ctot = Cx + Ca
    Ctotp = _rup(Ctot, 8)
    P = H * W
    Pp = _rup(P, 128)               # lane-dense spatial dim
    bP = b_tile * Pp
    btp = _rup(b_tile, 8)           # pad the tiny stats dim so matmuls stay >=8 wide

    k_av, k_h = jax.random.split(noise_key)

    # --- add_noise(attachedvec, 0.1): done in the wrapper, off the EUP slot.
    av = av_nchw + 0.1 * jax.random.normal(k_av, av_nchw.shape, jnp.float32)

    # --- input slab: (N, C, H, W) -> (C, N*Pp), channels on sublanes,
    #     batch*spatial on lanes; channel/spatial zero-padding keeps padded
    #     rows/lanes inert through the whole chain.
    xav = jnp.concatenate([x_nchw.reshape(N, Cx, P), av.reshape(N, Ca, P)], axis=1)
    xav = jnp.pad(xav, ((0, 0), (0, Ctotp - Ctot), (0, Pp - P)))
    xav = xav.transpose(1, 0, 2).reshape(Ctotp, N * Pp).astype(jnp.bfloat16)

    # --- pre-scaled (x0.1) hidden-layer noise, packed into one bf16 slab.
    Cnz = C1p + C2p + C3p
    nz = (0.1 * jax.random.normal(k_h, (Cnz, N * Pp), jnp.float32)).astype(jnp.bfloat16)

    # --- weights: zero-pad channel dims to 8k, bf16 for the MXU.
    def padw(w, cop, cip):
        co, ci = w.shape
        return jnp.pad(w, ((0, cop - co), (0, cip - ci))).astype(jnp.bfloat16)

    w1 = padw(params["w1"], C1p, Ctotp)
    w2 = padw(params["w2"], C2p, C1p)
    w3 = padw(params["w3"], C3p, C2p)
    w4a = padw(params["w4a"], C4p, C3p)
    w4b = padw(params["w4b"], Coutp, C4p)

    # --- pack all per-channel column params (gamma/beta/b4b) into one array.
    seg_defs = [("g1", C1p), ("be1", C1p), ("g2", C2p), ("be2", C2p),
                ("g3", C3p), ("be3", C3p), ("g4", C4p), ("be4", C4p),
                ("b4b", Coutp)]
    col_off, pieces, off = {}, [], 0
    for name, cp in seg_defs:
        v = params[name].astype(jnp.float32)
        pieces.append(jnp.pad(v, (0, cp - v.shape[0])))
        col_off[name] = (off, cp)
        off += cp
    cols = jnp.concatenate(pieces).reshape(-1, 1)

    # --- 0/1 indicator matrices for the segmented (per-sample) InstanceNorm
    #     reduction / broadcast; spatial-pad lanes are masked out.
    lane = jnp.arange(bP)
    seg = ((lane[:, None] // Pp == jnp.arange(btp)[None, :])
           & ((lane % Pp) < P)[:, None]).astype(jnp.float32)
    segT = seg.T

    kernel = functools.partial(
        spatial_block_kernel,
        col_off=col_off,
        nz_split=(C1p, C2p, C3p),
        inv_p=float(1.0 / P),
        eps=1e-5,
    )

    def lane_spec(c):
        return pl.BlockSpec((c, bP), lambda i: (0, i))

    def full_spec(shape):
        return pl.BlockSpec(shape, lambda i, _nd=len(shape): (0,) * _nd)

    out_p = pl.pallas_call(
        kernel,
        out_shape=jax.ShapeDtypeStruct((Coutp, N * Pp), jnp.float32),
        grid_spec=pltpu.PrefetchScalarGridSpec(
            num_scalar_prefetch=0,
            grid=(N // b_tile,),
            in_specs=[
                lane_spec(Ctotp),                 # xav slab
                lane_spec(Cnz),                   # packed hidden-layer noise
                full_spec(w1.shape), full_spec(w2.shape), full_spec(w3.shape),
                full_spec(w4a.shape), full_spec(w4b.shape),
                full_spec(cols.shape),
                full_spec(seg.shape), full_spec(segT.shape),
            ],
            out_specs=lane_spec(Coutp),
        ),
        compiler_params=pltpu.CompilerParams(
            dimension_semantics=("parallel",),
        ),
    )(xav, nz, w1, w2, w3, w4a, w4b, cols, seg, segT)

    # drop channel/lane padding; back to NCHW (free reshapes + one transpose)
    out = out_p.reshape(Coutp, N, Pp)[:out_dim, :, :P]
    return out.transpose(1, 0, 2).reshape(N, out_dim, H, W)


if __name__ == "__main__":
    L, out_dim = 4, 3                  # x channels = 4L+2 = 18, attachedvec = 12
    N, H, W = 8, 16, 16                # P = 256 lanes; b_tile=2 -> 4 parallel steps
    Cx, Ca = 4 * L + 2, 4 * out_dim

    key = jax.random.PRNGKey(0)
    kx, ka, kp, kn = jax.random.split(key, 4)
    x = jax.random.normal(kx, (N, Cx, H, W), jnp.float32)
    attachedvec = jax.random.normal(ka, (N, Ca, H, W), jnp.float32)
    params = init_params(kp, L, out_dim)

    out = spatial_block_forward(x, attachedvec, params, kn,
                                L=L, out_dim=out_dim, b_tile=2)
    jax.block_until_ready(out)
    assert out.shape == (N, out_dim, H, W), out.shape
    assert bool(jnp.all(jnp.isfinite(out)))
    print("KERNEL_OK")
</pallas_src>

<mosaic_0001>
module attributes {stable_mosaic.version = 11 : i64} {
  func.func @spatial_block_kernel(%arg0: i32, %arg1: memref<32x512xbf16, #tpu.memory_space<vmem>>, %arg2: memref<40x512xbf16, #tpu.memory_space<vmem>>, %arg3: memref<16x32xbf16, #tpu.memory_space<vmem>>, %arg4: memref<16x16xbf16, #tpu.memory_space<vmem>>, %arg5: memref<8x16xbf16, #tpu.memory_space<vmem>>, %arg6: memref<8x8xbf16, #tpu.memory_space<vmem>>, %arg7: memref<8x8xbf16, #tpu.memory_space<vmem>>, %arg8: memref<104x1xf32, #tpu.memory_space<vmem>>, %arg9: memref<512x8xf32, #tpu.memory_space<vmem>>, %arg10: memref<8x512xf32, #tpu.memory_space<vmem>>, %arg11: memref<8x512xf32, #tpu.memory_space<vmem>>) attributes {dimension_semantics = [#tpu.dimension_semantics<parallel>], iteration_bounds = array<i64: 4>, scalar_prefetch = 0 : i64, scratch_operands = 0 : i64, tpu.core_type = #tpu.core_type<tc>, window_params = [{transform_indices = @transform_0, window_bounds = array<i64: 32, 512>}, {transform_indices = @transform_1, window_bounds = array<i64: 40, 512>}, {pipeline_mode = #tpu.pipeline_mode<synchronous>, transform_indices = @transform_2, window_bounds = array<i64: 16, 32>}, {pipeline_mode = #tpu.pipeline_mode<synchronous>, transform_indices = @transform_3, window_bounds = array<i64: 16, 16>}, {pipeline_mode = #tpu.pipeline_mode<synchronous>, transform_indices = @transform_4, window_bounds = array<i64: 8, 16>}, {pipeline_mode = #tpu.pipeline_mode<synchronous>, transform_indices = @transform_5, window_bounds = array<i64: 8, 8>}, {pipeline_mode = #tpu.pipeline_mode<synchronous>, transform_indices = @transform_6, window_bounds = array<i64: 8, 8>}, {pipeline_mode = #tpu.pipeline_mode<synchronous>, transform_indices = @transform_7, window_bounds = array<i64: 104, 1>}, {pipeline_mode = #tpu.pipeline_mode<synchronous>, transform_indices = @transform_8, window_bounds = array<i64: 512, 8>}, {pipeline_mode = #tpu.pipeline_mode<synchronous>, transform_indices = @transform_9, window_bounds = array<i64: 8, 512>}, {transform_indices = @transform_10, window_bounds = array<i64: 8, 512>}]} {
    %c0 = arith.constant 0 : index
    %c0_0 = arith.constant 0 : index
    %0 = vector.load %arg9[%c0, %c0_0] : memref<512x8xf32, #tpu.memory_space<vmem>>, vector<512x8xf32>
    %c0_1 = arith.constant 0 : index
    %c0_2 = arith.constant 0 : index
    %1 = vector.load %arg10[%c0_1, %c0_2] : memref<8x512xf32, #tpu.memory_space<vmem>>, vector<8x512xf32>
    %c0_3 = arith.constant 0 : index
    %c0_4 = arith.constant 0 : index
    %2 = vector.load %arg1[%c0_3, %c0_4] : memref<32x512xbf16, #tpu.memory_space<vmem>>, vector<32x512xbf16>
    %c0_5 = arith.constant 0 : index
    %c0_6 = arith.constant 0 : index
    %3 = vector.load %arg8[%c0_5, %c0_6] : memref<104x1xf32, #tpu.memory_space<vmem>>, vector<16x1xf32>
    %c16 = arith.constant 16 : index
    %c0_7 = arith.constant 0 : index
    %4 = vector.load %arg8[%c16, %c0_7] : memref<104x1xf32, #tpu.memory_space<vmem>>, vector<16x1xf32>
    %c0_8 = arith.constant 0 : index
    %c0_9 = arith.constant 0 : index
    %5 = vector.load %arg3[%c0_8, %c0_9] : memref<16x32xbf16, #tpu.memory_space<vmem>>, vector<16x32xbf16>
    %cst = arith.constant dense<0.000000e+00> : vector<16x512xf32>
    %6 = tpu.matmul %5, %2, %cst {dimension_numbers = #tpu.dot_dimension_numbers<[1], [0], [0], [1], [0, 0, 1, 1], [], []>} : vector<16x32xbf16>, vector<32x512xbf16>, vector<16x512xf32> -> vector<16x512xf32>
    %cst_10 = arith.constant dense<0.000000e+00> : vector<16x8xf32>
    %7 = tpu.matmul %6, %0, %cst_10 {dimension_numbers = #tpu.dot_dimension_numbers<[1], [0], [0], [1], [0, 0, 1, 1], [], []>} : vector<16x512xf32>, vector<512x8xf32>, vector<16x8xf32> -> vector<16x8xf32>
    %cst_11 = arith.constant 3.906250e-03 : f32
    %8 = vector.broadcast %cst_11 : f32 to vector<16x8xf32>
    %9 = arith.mulf %7, %8 : vector<16x8xf32>
    %10 = arith.mulf %6, %6 : vector<16x512xf32>
    %cst_12 = arith.constant dense<0.000000e+00> : vector<16x8xf32>
    %11 = tpu.matmul %10, %0, %cst_12 {dimension_numbers = #tpu.dot_dimension_numbers<[1], [0], [0], [1], [0, 0, 1, 1], [], []>} : vector<16x512xf32>, vector<512x8xf32>, vector<16x8xf32> -> vector<16x8xf32>
    %cst_13 = arith.constant 3.906250e-03 : f32
    %12 = vector.broadcast %cst_13 : f32 to vector<16x8xf32>
    %13 = arith.mulf %11, %12 : vector<16x8xf32>
    %14 = arith.mulf %9, %9 : vector<16x8xf32>
    %15 = arith.subf %13, %14 : vector<16x8xf32>
    %cst_14 = arith.constant 9.99999974E-6 : f32
    %16 = vector.broadcast %cst_14 : f32 to vector<16x8xf32>
    %17 = arith.addf %15, %16 : vector<16x8xf32>
    %18 = math.rsqrt %17 : vector<16x8xf32>
    %19 = vector.broadcast %3 : vector<16x1xf32> to vector<16x8xf32>
    %20 = arith.mulf %19, %18 : vector<16x8xf32>
    %21 = arith.mulf %20, %9 : vector<16x8xf32>
    %22 = vector.broadcast %4 : vector<16x1xf32> to vector<16x8xf32>
    %23 = arith.subf %22, %21 : vector<16x8xf32>
    %cst_15 = arith.constant dense<0.000000e+00> : vector<16x512xf32>
    %24 = tpu.matmul %20, %1, %cst_15 {dimension_numbers = #tpu.dot_dimension_numbers<[1], [0], [0], [1], [0, 0, 1, 1], [], []>} : vector<16x8xf32>, vector<8x512xf32>, vector<16x512xf32> -> vector<16x512xf32>
    %25 = arith.mulf %6, %24 : vector<16x512xf32>
    %cst_16 = arith.constant dense<0.000000e+00> : vector<16x512xf32>
    %26 = tpu.matmul %23, %1, %cst_16 {dimension_numbers = #tpu.dot_dimension_numbers<[1], [0], [0], [1], [0, 0, 1, 1], [], []>} : vector<16x8xf32>, vector<8x512xf32>, vector<16x512xf32> -> vector<16x512xf32>
    %27 = arith.addf %25, %26 : vector<16x512xf32>
    %cst_17 = arith.constant 5.000000e-01 : f32
    %28 = vector.broadcast %cst_17 : f32 to vector<16x512xf32>
    %29 = arith.mulf %28, %27 : vector<16x512xf32>
    %cst_18 = arith.constant 0.707106769 : f32
    %30 = vector.broadcast %cst_18 : f32 to vector<16x512xf32>
    %31 = arith.mulf %27, %30 : vector<16x512xf32>
    %32 = math.absf %31 : vector<16x512xf32>
    %cst_19 = arith.constant 0.327591091 : f32
    %33 = vector.broadcast %cst_19 : f32 to vector<16x512xf32>
    %34 = arith.mulf %33, %32 : vector<16x512xf32>
    %cst_20 = arith.constant 1.000000e+00 : f32
    %35 = vector.broadcast %cst_20 : f32 to vector<16x512xf32>
    %36 = arith.addf %35, %34 : vector<16x512xf32>
    %cst_21 = arith.constant 1.000000e+00 : f32
    %37 = vector.broadcast %cst_21 : f32 to vector<16x512xf32>
    %38 = arith.divf %37, %36 : vector<16x512xf32>
    %cst_22 = arith.constant 1.06140542 : f32
    %39 = vector.broadcast %cst_22 : f32 to vector<16x512xf32>
    %40 = arith.mulf %39, %38 : vector<16x512xf32>
    %cst_23 = arith.constant -1.45315206 : f32
    %41 = vector.broadcast %cst_23 : f32 to vector<16x512xf32>
    %42 = arith.addf %40, %41 : vector<16x512xf32>
    %43 = arith.mulf %42, %38 : vector<16x512xf32>
    %cst_24 = arith.constant 1.42141378 : f32
    %44 = vector.broadcast %cst_24 : f32 to vector<16x512xf32>
    %45 = arith.addf %43, %44 : vector<16x512xf32>
    %46 = arith.mulf %45, %38 : vector<16x512xf32>
    %cst_25 = arith.constant -0.284496725 : f32
    %47 = vector.broadcast %cst_25 : f32 to vector<16x512xf32>
    %48 = arith.addf %46, %47 : vector<16x512xf32>
    %49 = arith.mulf %48, %38 : vector<16x512xf32>
    %cst_26 = arith.constant 0.254829586 : f32
    %50 = vector.broadcast %cst_26 : f32 to vector<16x512xf32>
    %51 = arith.addf %49, %50 : vector<16x512xf32>
    %52 = arith.mulf %51, %38 : vector<16x512xf32>
    %cst_27 = arith.constant 0.000000e+00 : f32
    %53 = vector.broadcast %cst_27 : f32 to vector<16x512xf32>
    %54 = arith.subf %53, %32 : vector<16x512xf32>
    %55 = arith.mulf %54, %32 : vector<16x512xf32>
    %56 = math.exp %55 : vector<16x512xf32>
    %57 = arith.mulf %52, %56 : vector<16x512xf32>
    %cst_28 = arith.constant 1.000000e+00 : f32
    %58 = vector.broadcast %cst_28 : f32 to vector<16x512xf32>
    %59 = arith.subf %58, %57 : vector<16x512xf32>
    %cst_29 = arith.constant 0.000000e+00 : f32
    %60 = vector.broadcast %cst_29 : f32 to vector<16x512xf32>
    %61 = arith.cmpf oge, %31, %60 : vector<16x512xf32>
    %cst_30 = arith.constant 0.000000e+00 : f32
    %62 = vector.broadcast %cst_30 : f32 to vector<16x512xf32>
    %63 = arith.subf %62, %59 : vector<16x512xf32>
    %64 = arith.select %61, %59, %63 : vector<16x512xi1>, vector<16x512xf32>
    %cst_31 = arith.constant 1.000000e+00 : f32
    %65 = vector.broadcast %cst_31 : f32 to vector<16x512xf32>
    %66 = arith.addf %65, %64 : vector<16x512xf32>
    %67 = arith.mulf %29, %66 : vector<16x512xf32>
    %c0_32 = arith.constant 0 : index
    %c0_33 = arith.constant 0 : index
    %68 = vector.load %arg2[%c0_32, %c0_33] : memref<40x512xbf16, #tpu.memory_space<vmem>>, vector<16x512xbf16>
    %69 = arith.extf %68 : vector<16x512xbf16> to vector<16x512xf32>
    %70 = arith.addf %67, %69 : vector<16x512xf32>
    %c32 = arith.constant 32 : index
    %c0_34 = arith.constant 0 : index
    %71 = vector.load %arg8[%c32, %c0_34] : memref<104x1xf32, #tpu.memory_space<vmem>>, vector<16x1xf32>
    %c48 = arith.constant 48 : index
    %c0_35 = arith.constant 0 : index
    %72 = vector.load %arg8[%c48, %c0_35] : memref<104x1xf32, #tpu.memory_space<vmem>>, vector<16x1xf32>
    %c0_36 = arith.constant 0 : index
    %c0_37 = arith.constant 0 : index
    %73 = vector.load %arg4[%c0_36, %c0_37] : memref<16x16xbf16, #tpu.memory_space<vmem>>, vector<16x16xbf16>
    %74 = arith.truncf %70 : vector<16x512xf32> to vector<16x512xbf16>
    %cst_38 = arith.constant dense<0.000000e+00> : vector<16x512xf32>
    %75 = tpu.matmul %73, %74, %cst_38 {dimension_numbers = #tpu.dot_dimension_numbers<[1], [0], [0], [1], [0, 0, 1, 1], [], []>} : vector<16x16xbf16>, vector<16x512xbf16>, vector<16x512xf32> -> vector<16x512xf32>
    %cst_39 = arith.constant dense<0.000000e+00> : vector<16x8xf32>
    %76 = tpu.matmul %75, %0, %cst_39 {dimension_numbers = #tpu.dot_dimension_numbers<[1], [0], [0], [1], [0, 0, 1, 1], [], []>} : vector<16x512xf32>, vector<512x8xf32>, vector<16x8xf32> -> vector<16x8xf32>
    %cst_40 = arith.constant 3.906250e-03 : f32
    %77 = vector.broadcast %cst_40 : f32 to vector<16x8xf32>
    %78 = arith.mulf %76, %77 : vector<16x8xf32>
    %79 = arith.mulf %75, %75 : vector<16x512xf32>
    %cst_41 = arith.constant dense<0.000000e+00> : vector<16x8xf32>
    %80 = tpu.matmul %79, %0, %cst_41 {dimension_numbers = #tpu.dot_dimension_numbers<[1], [0], [0], [1], [0, 0, 1, 1], [], []>} : vector<16x512xf32>, vector<512x8xf32>, vector<16x8xf32> -> vector<16x8xf32>
    %cst_42 = arith.constant 3.906250e-03 : f32
    %81 = vector.broadcast %cst_42 : f32 to vector<16x8xf32>
    %82 = arith.mulf %80, %81 : vector<16x8xf32>
    %83 = arith.mulf %78, %78 : vector<16x8xf32>
    %84 = arith.subf %82, %83 : vector<16x8xf32>
    %cst_43 = arith.constant 9.99999974E-6 : f32
    %85 = vector.broadcast %cst_43 : f32 to vector<16x8xf32>
    %86 = arith.addf %84, %85 : vector<16x8xf32>
    %87 = math.rsqrt %86 : vector<16x8xf32>
    %88 = vector.broadcast %71 : vector<16x1xf32> to vector<16x8xf32>
    %89 = arith.mulf %88, %87 : vector<16x8xf32>
    %90 = arith.mulf %89, %78 : vector<16x8xf32>
    %91 = vector.broadcast %72 : vector<16x1xf32> to vector<16x8xf32>
    %92 = arith.subf %91, %90 : vector<16x8xf32>
    %cst_44 = arith.constant dense<0.000000e+00> : vector<16x512xf32>
    %93 = tpu.matmul %89, %1, %cst_44 {dimension_numbers = #tpu.dot_dimension_numbers<[1], [0], [0], [1], [0, 0, 1, 1], [], []>} : vector<16x8xf32>, vector<8x512xf32>, vector<16x512xf32> -> vector<16x512xf32>
    %94 = arith.mulf %75, %93 : vector<16x512xf32>
    %cst_45 = arith.constant dense<0.000000e+00> : vector<16x512xf32>
    %95 = tpu.matmul %92, %1, %cst_45 {dimension_numbers = #tpu.dot_dimension_numbers<[1], [0], [0], [1], [0, 0, 1, 1], [], []>} : vector<16x8xf32>, vector<8x512xf32>, vector<16x512xf32> -> vector<16x512xf32>
    %96 = arith.addf %94, %95 : vector<16x512xf32>
    %cst_46 = arith.constant 5.000000e-01 : f32
    %97 = vector.broadcast %cst_46 : f32 to vector<16x512xf32>
    %98 = arith.mulf %97, %96 : vector<16x512xf32>
    %cst_47 = arith.constant 0.707106769 : f32
    %99 = vector.broadcast %cst_47 : f32 to vector<16x512xf32>
    %100 = arith.mulf %96, %99 : vector<16x512xf32>
    %101 = math.absf %100 : vector<16x512xf32>
    %cst_48 = arith.constant 0.327591091 : f32
    %102 = vector.broadcast %cst_48 : f32 to vector<16x512xf32>
    %103 = arith.mulf %102, %101 : vector<16x512xf32>
    %cst_49 = arith.constant 1.000000e+00 : f32
    %104 = vector.broadcast %cst_49 : f32 to vector<16x512xf32>
    %105 = arith.addf %104, %103 : vector<16x512xf32>
    %cst_50 = arith.constant 1.000000e+00 : f32
    %106 = vector.broadcast %cst_50 : f32 to vector<16x512xf32>
    %107 = arith.divf %106, %105 : vector<16x512xf32>
    %cst_51 = arith.constant 1.06140542 : f32
    %108 = vector.broadcast %cst_51 : f32 to vector<16x512xf32>
    %109 = arith.mulf %108, %107 : vector<16x512xf32>
    %cst_52 = arith.constant -1.45315206 : f32
    %110 = vector.broadcast %cst_52 : f32 to vector<16x512xf32>
    %111 = arith.addf %109, %110 : vector<16x512xf32>
    %112 = arith.mulf %111, %107 : vector<16x512xf32>
    %cst_53 = arith.constant 1.42141378 : f32
    %113 = vector.broadcast %cst_53 : f32 to vector<16x512xf32>
    %114 = arith.addf %112, %113 : vector<16x512xf32>
    %115 = arith.mulf %114, %107 : vector<16x512xf32>
    %cst_54 = arith.constant -0.284496725 : f32
    %116 = vector.broadcast %cst_54 : f32 to vector<16x512xf32>
    %117 = arith.addf %115, %116 : vector<16x512xf32>
    %118 = arith.mulf %117, %107 : vector<16x512xf32>
    %cst_55 = arith.constant 0.254829586 : f32
    %119 = vector.broadcast %cst_55 : f32 to vector<16x512xf32>
    %120 = arith.addf %118, %119 : vector<16x512xf32>
    %121 = arith.mulf %120, %107 : vector<16x512xf32>
    %cst_56 = arith.constant 0.000000e+00 : f32
    %122 = vector.broadcast %cst_56 : f32 to vector<16x512xf32>
    %123 = arith.subf %122, %101 : vector<16x512xf32>
    %124 = arith.mulf %123, %101 : vector<16x512xf32>
    %125 = math.exp %124 : vector<16x512xf32>
    %126 = arith.mulf %121, %125 : vector<16x512xf32>
    %cst_57 = arith.constant 1.000000e+00 : f32
    %127 = vector.broadcast %cst_57 : f32 to vector<16x512xf32>
    %128 = arith.subf %127, %126 : vector<16x512xf32>
    %cst_58 = arith.constant 0.000000e+00 : f32
    %129 = vector.broadcast %cst_58 : f32 to vector<16x512xf32>
    %130 = arith.cmpf oge, %100, %129 : vector<16x512xf32>
    %cst_59 = arith.constant 0.000000e+00 : f32
    %131 = vector.broadcast %cst_59 : f32 to vector<16x512xf32>
    %132 = arith.subf %131, %128 : vector<16x512xf32>
    %133 = arith.select %130, %128, %132 : vector<16x512xi1>, vector<16x512xf32>
    %cst_60 = arith.constant 1.000000e+00 : f32
    %134 = vector.broadcast %cst_60 : f32 to vector<16x512xf32>
    %135 = arith.addf %134, %133 : vector<16x512xf32>
    %136 = arith.mulf %98, %135 : vector<16x512xf32>
    %c16_61 = arith.constant 16 : index
    %c0_62 = arith.constant 0 : index
    %137 = vector.load %arg2[%c16_61, %c0_62] : memref<40x512xbf16, #tpu.memory_space<vmem>>, vector<16x512xbf16>
    %138 = arith.extf %137 : vector<16x512xbf16> to vector<16x512xf32>
    %139 = arith.addf %136, %138 : vector<16x512xf32>
    %c64 = arith.constant 64 : index
    %c0_63 = arith.constant 0 : index
    %140 = vector.load %arg8[%c64, %c0_63] : memref<104x1xf32, #tpu.memory_space<vmem>>, vector<8x1xf32>
    %c72 = arith.constant 72 : index
    %c0_64 = arith.constant 0 : index
    %141 = vector.load %arg8[%c72, %c0_64] : memref<104x1xf32, #tpu.memory_space<vmem>>, vector<8x1xf32>
    %c0_65 = arith.constant 0 : index
    %c0_66 = arith.constant 0 : index
    %142 = vector.load %arg5[%c0_65, %c0_66] : memref<8x16xbf16, #tpu.memory_space<vmem>>, vector<8x16xbf16>
    %143 = arith.truncf %139 : vector<16x512xf32> to vector<16x512xbf16>
    %cst_67 = arith.constant dense<0.000000e+00> : vector<8x512xf32>
    %144 = tpu.matmul %142, %143, %cst_67 {dimension_numbers = #tpu.dot_dimension_numbers<[1], [0], [0], [1], [0, 0, 1, 1], [], []>} : vector<8x16xbf16>, vector<16x512xbf16>, vector<8x512xf32> -> vector<8x512xf32>
    %cst_68 = arith.constant dense<0.000000e+00> : vector<8x8xf32>
    %145 = tpu.matmul %144, %0, %cst_68 {dimension_numbers = #tpu.dot_dimension_numbers<[1], [0], [0], [1], [0, 0, 1, 1], [], []>} : vector<8x512xf32>, vector<512x8xf32>, vector<8x8xf32> -> vector<8x8xf32>
    %cst_69 = arith.constant 3.906250e-03 : f32
    %146 = vector.broadcast %cst_69 : f32 to vector<8x8xf32>
    %147 = arith.mulf %145, %146 : vector<8x8xf32>
    %148 = arith.mulf %144, %144 : vector<8x512xf32>
    %cst_70 = arith.constant dense<0.000000e+00> : vector<8x8xf32>
    %149 = tpu.matmul %148, %0, %cst_70 {dimension_numbers = #tpu.dot_dimension_numbers<[1], [0], [0], [1], [0, 0, 1, 1], [], []>} : vector<8x512xf32>, vector<512x8xf32>, vector<8x8xf32> -> vector<8x8xf32>
    %cst_71 = arith.constant 3.906250e-03 : f32
    %150 = vector.broadcast %cst_71 : f32 to vector<8x8xf32>
    %151 = arith.mulf %149, %150 : vector<8x8xf32>
    %152 = arith.mulf %147, %147 : vector<8x8xf32>
    %153 = arith.subf %151, %152 : vector<8x8xf32>
    %cst_72 = arith.constant 9.99999974E-6 : f32
    %154 = vector.broadcast %cst_72 : f32 to vector<8x8xf32>
    %155 = arith.addf %153, %154 : vector<8x8xf32>
    %156 = math.rsqrt %155 : vector<8x8xf32>
    %157 = vector.broadcast %140 : vector<8x1xf32> to vector<8x8xf32>
    %158 = arith.mulf %157, %156 : vector<8x8xf32>
    %159 = arith.mulf %158, %147 : vector<8x8xf32>
    %160 = vector.broadcast %141 : vector<8x1xf32> to vector<8x8xf32>
    %161 = arith.subf %160, %159 : vector<8x8xf32>
    %cst_73 = arith.constant dense<0.000000e+00> : vector<8x512xf32>
    %162 = tpu.matmul %158, %1, %cst_73 {dimension_numbers = #tpu.dot_dimension_numbers<[1], [0], [0], [1], [0, 0, 1, 1], [], []>} : vector<8x8xf32>, vector<8x512xf32>, vector<8x512xf32> -> vector<8x512xf32>
    %163 = arith.mulf %144, %162 : vector<8x512xf32>
    %cst_74 = arith.constant dense<0.000000e+00> : vector<8x512xf32>
    %164 = tpu.matmul %161, %1, %cst_74 {dimension_numbers = #tpu.dot_dimension_numbers<[1], [0], [0], [1], [0, 0, 1, 1], [], []>} : vector<8x8xf32>, vector<8x512xf32>, vector<8x512xf32> -> vector<8x512xf32>
    %165 = arith.addf %163, %164 : vector<8x512xf32>
    %cst_75 = arith.constant 5.000000e-01 : f32
    %166 = vector.broadcast %cst_75 : f32 to vector<8x512xf32>
    %167 = arith.mulf %166, %165 : vector<8x512xf32>
    %cst_76 = arith.constant 0.707106769 : f32
    %168 = vector.broadcast %cst_76 : f32 to vector<8x512xf32>
    %169 = arith.mulf %165, %168 : vector<8x512xf32>
    %170 = math.absf %169 : vector<8x512xf32>
    %cst_77 = arith.constant 0.327591091 : f32
    %171 = vector.broadcast %cst_77 : f32 to vector<8x512xf32>
    %172 = arith.mulf %171, %170 : vector<8x512xf32>
    %cst_78 = arith.constant 1.000000e+00 : f32
    %173 = vector.broadcast %cst_78 : f32 to vector<8x512xf32>
    %174 = arith.addf %173, %172 : vector<8x512xf32>
    %cst_79 = arith.constant 1.000000e+00 : f32
    %175 = vector.broadcast %cst_79 : f32 to vector<8x512xf32>
    %176 = arith.divf %175, %174 : vector<8x512xf32>
    %cst_80 = arith.constant 1.06140542 : f32
    %177 = vector.broadcast %cst_80 : f32 to vector<8x512xf32>
    %178 = arith.mulf %177, %176 : vector<8x512xf32>
    %cst_81 = arith.constant -1.45315206 : f32
    %179 = vector.broadcast %cst_81 : f32 to vector<8x512xf32>
    %180 = arith.addf %178, %179 : vector<8x512xf32>
    %181 = arith.mulf %180, %176 : vector<8x512xf32>
    %cst_82 = arith.constant 1.42141378 : f32
    %182 = vector.broadcast %cst_82 : f32 to vector<8x512xf32>
    %183 = arith.addf %181, %182 : vector<8x512xf32>
    %184 = arith.mulf %183, %176 : vector<8x512xf32>
    %cst_83 = arith.constant -0.284496725 : f32
    %185 = vector.broadcast %cst_83 : f32 to vector<8x512xf32>
    %186 = arith.addf %184, %185 : vector<8x512xf32>
    %187 = arith.mulf %186, %176 : vector<8x512xf32>
    %cst_84 = arith.constant 0.254829586 : f32
    %188 = vector.broadcast %cst_84 : f32 to vector<8x512xf32>
    %189 = arith.addf %187, %188 : vector<8x512xf32>
    %190 = arith.mulf %189, %176 : vector<8x512xf32>
    %cst_85 = arith.constant 0.000000e+00 : f32
    %191 = vector.broadcast %cst_85 : f32 to vector<8x512xf32>
    %192 = arith.subf %191, %170 : vector<8x512xf32>
    %193 = arith.mulf %192, %170 : vector<8x512xf32>
    %194 = math.exp %193 : vector<8x512xf32>
    %195 = arith.mulf %190, %194 : vector<8x512xf32>
    %cst_86 = arith.constant 1.000000e+00 : f32
    %196 = vector.broadcast %cst_86 : f32 to vector<8x512xf32>
    %197 = arith.subf %196, %195 : vector<8x512xf32>
    %cst_87 = arith.constant 0.000000e+00 : f32
    %198 = vector.broadcast %cst_87 : f32 to vector<8x512xf32>
    %199 = arith.cmpf oge, %169, %198 : vector<8x512xf32>
    %cst_88 = arith.constant 0.000000e+00 : f32
    %200 = vector.broadcast %cst_88 : f32 to vector<8x512xf32>
    %201 = arith.subf %200, %197 : vector<8x512xf32>
    %202 = arith.select %199, %197, %201 : vector<8x512xi1>, vector<8x512xf32>
    %cst_89 = arith.constant 1.000000e+00 : f32
    %203 = vector.broadcast %cst_89 : f32 to vector<8x512xf32>
    %204 = arith.addf %203, %202 : vector<8x512xf32>
    %205 = arith.mulf %167, %204 : vector<8x512xf32>
    %c32_90 = arith.constant 32 : index
    %c0_91 = arith.constant 0 : index
    %206 = vector.load %arg2[%c32_90, %c0_91] : memref<40x512xbf16, #tpu.memory_space<vmem>>, vector<8x512xbf16>
    %207 = arith.extf %206 : vector<8x512xbf16> to vector<8x512xf32>
    %208 = arith.addf %205, %207 : vector<8x512xf32>
    %c80 = arith.constant 80 : index
    %c0_92 = arith.constant 0 : index
    %209 = vector.load %arg8[%c80, %c0_92] : memref<104x1xf32, #tpu.memory_space<vmem>>, vector<8x1xf32>
    %c88 = arith.constant 88 : index
    %c0_93 = arith.constant 0 : index
    %210 = vector.load %arg8[%c88, %c0_93] : memref<104x1xf32, #tpu.memory_space<vmem>>, vector<8x1xf32>
    %c0_94 = arith.constant 0 : index
    %c0_95 = arith.constant 0 : index
    %211 = vector.load %arg6[%c0_94, %c0_95] : memref<8x8xbf16, #tpu.memory_space<vmem>>, vector<8x8xbf16>
    %212 = arith.truncf %208 : vector<8x512xf32> to vector<8x512xbf16>
    %cst_96 = arith.constant dense<0.000000e+00> : vector<8x512xf32>
    %213 = tpu.matmul %211, %212, %cst_96 {dimension_numbers = #tpu.dot_dimension_numbers<[1], [0], [0], [1], [0, 0, 1, 1], [], []>} : vector<8x8xbf16>, vector<8x512xbf16>, vector<8x512xf32> -> vector<8x512xf32>
    %cst_97 = arith.constant dense<0.000000e+00> : vector<8x8xf32>
    %214 = tpu.matmul %213, %0, %cst_97 {dimension_numbers = #tpu.dot_dimension_numbers<[1], [0], [0], [1], [0, 0, 1, 1], [], []>} : vector<8x512xf32>, vector<512x8xf32>, vector<8x8xf32> -> vector<8x8xf32>
    %cst_98 = arith.constant 3.906250e-03 : f32
    %215 = vector.broadcast %cst_98 : f32 to vector<8x8xf32>
    %216 = arith.mulf %214, %215 : vector<8x8xf32>
    %217 = arith.mulf %213, %213 : vector<8x512xf32>
    %cst_99 = arith.constant dense<0.000000e+00> : vector<8x8xf32>
    %218 = tpu.matmul %217, %0, %cst_99 {dimension_numbers = #tpu.dot_dimension_numbers<[1], [0], [0], [1], [0, 0, 1, 1], [], []>} : vector<8x512xf32>, vector<512x8xf32>, vector<8x8xf32> -> vector<8x8xf32>
    %cst_100 = arith.constant 3.906250e-03 : f32
    %219 = vector.broadcast %cst_100 : f32 to vector<8x8xf32>
    %220 = arith.mulf %218, %219 : vector<8x8xf32>
    %221 = arith.mulf %216, %216 : vector<8x8xf32>
    %222 = arith.subf %220, %221 : vector<8x8xf32>
    %cst_101 = arith.constant 9.99999974E-6 : f32
    %223 = vector.broadcast %cst_101 : f32 to vector<8x8xf32>
    %224 = arith.addf %222, %223 : vector<8x8xf32>
    %225 = math.rsqrt %224 : vector<8x8xf32>
    %226 = vector.broadcast %209 : vector<8x1xf32> to vector<8x8xf32>
    %227 = arith.mulf %226, %225 : vector<8x8xf32>
    %228 = arith.mulf %227, %216 : vector<8x8xf32>
    %229 = vector.broadcast %210 : vector<8x1xf32> to vector<8x8xf32>
    %230 = arith.subf %229, %228 : vector<8x8xf32>
    %cst_102 = arith.constant dense<0.000000e+00> : vector<8x512xf32>
    %231 = tpu.matmul %227, %1, %cst_102 {dimension_numbers = #tpu.dot_dimension_numbers<[1], [0], [0], [1], [0, 0, 1, 1], [], []>} : vector<8x8xf32>, vector<8x512xf32>, vector<8x512xf32> -> vector<8x512xf32>
    %232 = arith.mulf %213, %231 : vector<8x512xf32>
    %cst_103 = arith.constant dense<0.000000e+00> : vector<8x512xf32>
    %233 = tpu.matmul %230, %1, %cst_103 {dimension_numbers = #tpu.dot_dimension_numbers<[1], [0], [0], [1], [0, 0, 1, 1], [], []>} : vector<8x8xf32>, vector<8x512xf32>, vector<8x512xf32> -> vector<8x512xf32>
    %234 = arith.addf %232, %233 : vector<8x512xf32>
    %cst_104 = arith.constant 5.000000e-01 : f32
    %235 = vector.broadcast %cst_104 : f32 to vector<8x512xf32>
    %236 = arith.mulf %235, %234 : vector<8x512xf32>
    %cst_105 = arith.constant 0.707106769 : f32
    %237 = vector.broadcast %cst_105 : f32 to vector<8x512xf32>
    %238 = arith.mulf %234, %237 : vector<8x512xf32>
    %239 = math.absf %238 : vector<8x512xf32>
    %cst_106 = arith.constant 0.327591091 : f32
    %240 = vector.broadcast %cst_106 : f32 to vector<8x512xf32>
    %241 = arith.mulf %240, %239 : vector<8x512xf32>
    %cst_107 = arith.constant 1.000000e+00 : f32
    %242 = vector.broadcast %cst_107 : f32 to vector<8x512xf32>
    %243 = arith.addf %242, %241 : vector<8x512xf32>
    %cst_108 = arith.constant 1.000000e+00 : f32
    %244 = vector.broadcast %cst_108 : f32 to vector<8x512xf32>
    %245 = arith.divf %244, %243 : vector<8x512xf32>
    %cst_109 = arith.constant 1.06140542 : f32
    %246 = vector.broadcast %cst_109 : f32 to vector<8x512xf32>
    %247 = arith.mulf %246, %245 : vector<8x512xf32>
    %cst_110 = arith.constant -1.45315206 : f32
    %248 = vector.broadcast %cst_110 : f32 to vector<8x512xf32>
    %249 = arith.addf %247, %248 : vector<8x512xf32>
    %250 = arith.mulf %249, %245 : vector<8x512xf32>
    %cst_111 = arith.constant 1.42141378 : f32
    %251 = vector.broadcast %cst_111 : f32 to vector<8x512xf32>
    %252 = arith.addf %250, %251 : vector<8x512xf32>
    %253 = arith.mulf %252, %245 : vector<8x512xf32>
    %cst_112 = arith.constant -0.284496725 : f32
    %254 = vector.broadcast %cst_112 : f32 to vector<8x512xf32>
    %255 = arith.addf %253, %254 : vector<8x512xf32>
    %256 = arith.mulf %255, %245 : vector<8x512xf32>
    %cst_113 = arith.constant 0.254829586 : f32
    %257 = vector.broadcast %cst_113 : f32 to vector<8x512xf32>
    %258 = arith.addf %256, %257 : vector<8x512xf32>
    %259 = arith.mulf %258, %245 : vector<8x512xf32>
    %cst_114 = arith.constant 0.000000e+00 : f32
    %260 = vector.broadcast %cst_114 : f32 to vector<8x512xf32>
    %261 = arith.subf %260, %239 : vector<8x512xf32>
    %262 = arith.mulf %261, %239 : vector<8x512xf32>
    %263 = math.exp %262 : vector<8x512xf32>
    %264 = arith.mulf %259, %263 : vector<8x512xf32>
    %cst_115 = arith.constant 1.000000e+00 : f32
    %265 = vector.broadcast %cst_115 : f32 to vector<8x512xf32>
    %266 = arith.subf %265, %264 : vector<8x512xf32>
    %cst_116 = arith.constant 0.000000e+00 : f32
    %267 = vector.broadcast %cst_116 : f32 to vector<8x512xf32>
    %268 = arith.cmpf oge, %238, %267 : vector<8x512xf32>
    %cst_117 = arith.constant 0.000000e+00 : f32
    %269 = vector.broadcast %cst_117 : f32 to vector<8x512xf32>
    %270 = arith.subf %269, %266 : vector<8x512xf32>
    %271 = arith.select %268, %266, %270 : vector<8x512xi1>, vector<8x512xf32>
    %cst_118 = arith.constant 1.000000e+00 : f32
    %272 = vector.broadcast %cst_118 : f32 to vector<8x512xf32>
    %273 = arith.addf %272, %271 : vector<8x512xf32>
    %274 = arith.mulf %236, %273 : vector<8x512xf32>
    %c0_119 = arith.constant 0 : index
    %c0_120 = arith.constant 0 : index
    %275 = vector.load %arg7[%c0_119, %c0_120] : memref<8x8xbf16, #tpu.memory_space<vmem>>, vector<8x8xbf16>
    %276 = arith.truncf %274 : vector<8x512xf32> to vector<8x512xbf16>
    %cst_121 = arith.constant dense<0.000000e+00> : vector<8x512xf32>
    %277 = tpu.matmul %275, %276, %cst_121 {dimension_numbers = #tpu.dot_dimension_numbers<[1], [0], [0], [1], [0, 0, 1, 1], [], []>} : vector<8x8xbf16>, vector<8x512xbf16>, vector<8x512xf32> -> vector<8x512xf32>
    %c96 = arith.constant 96 : index
    %c0_122 = arith.constant 0 : index
    %278 = vector.load %arg8[%c96, %c0_122] : memref<104x1xf32, #tpu.memory_space<vmem>>, vector<8x1xf32>
    %279 = vector.broadcast %278 : vector<8x1xf32> to vector<8x512xf32>
    %280 = arith.addf %277, %279 : vector<8x512xf32>
    %c0_123 = arith.constant 0 : index
    %c0_124 = arith.constant 0 : index
    %281 = vector.load %arg11[%c0_123, %c0_124] : memref<8x512xf32, #tpu.memory_space<vmem>>, vector<8x512xf32>
    tpu.vector_store %arg11[%c0_123, %c0_124], %280 {strides = array<i32>} : memref<8x512xf32, #tpu.memory_space<vmem>>, vector<8x512xf32>,
    return
  }
  func.func @transform_0(%arg0: i32) -> (i32, i32) {
    %c0_i32 = arith.constant 0 : i32
    %c0_i32_0 = arith.constant 0 : i32
    return %c0_i32, %arg0 : i32, i32
  }
  func.func @transform_1(%arg0: i32) -> (i32, i32) {
    %c0_i32 = arith.constant 0 : i32
    %c0_i32_0 = arith.constant 0 : i32
    return %c0_i32, %arg0 : i32, i32
  }
  func.func @transform_2(%arg0: i32) -> (i32, i32) {
    %c0_i32 = arith.constant 0 : i32
    %c0_i32_0 = arith.constant 0 : i32
    %c0_i32_1 = arith.constant 0 : i32
    return %c0_i32, %c0_i32_0 : i32, i32
  }
  func.func @transform_3(%arg0: i32) -> (i32, i32) {
    %c0_i32 = arith.constant 0 : i32
    %c0_i32_0 = arith.constant 0 : i32
    %c0_i32_1 = arith.constant 0 : i32
    return %c0_i32, %c0_i32_0 : i32, i32
  }
  func.func @transform_4(%arg0: i32) -> (i32, i32) {
    %c0_i32 = arith.constant 0 : i32
    %c0_i32_0 = arith.constant 0 : i32
    %c0_i32_1 = arith.constant 0 : i32
    return %c0_i32, %c0_i32_0 : i32, i32
  }
  func.func @transform_5(%arg0: i32) -> (i32, i32) {
    %c0_i32 = arith.constant 0 : i32
    %c0_i32_0 = arith.constant 0 : i32
    %c0_i32_1 = arith.constant 0 : i32
    return %c0_i32, %c0_i32_0 : i32, i32
  }
  func.func @transform_6(%arg0: i32) -> (i32, i32) {
    %c0_i32 = arith.constant 0 : i32
    %c0_i32_0 = arith.constant 0 : i32
    %c0_i32_1 = arith.constant 0 : i32
    return %c0_i32, %c0_i32_0 : i32, i32
  }
  func.func @transform_7(%arg0: i32) -> (i32, i32) {
    %c0_i32 = arith.constant 0 : i32
    %c0_i32_0 = arith.constant 0 : i32
    %c0_i32_1 = arith.constant 0 : i32
    return %c0_i32, %c0_i32_0 : i32, i32
  }
  func.func @transform_8(%arg0: i32) -> (i32, i32) {
    %c0_i32 = arith.constant 0 : i32
    %c0_i32_0 = arith.constant 0 : i32
    %c0_i32_1 = arith.constant 0 : i32
    return %c0_i32, %c0_i32_0 : i32, i32
  }
  func.func @transform_9(%arg0: i32) -> (i32, i32) {
    %c0_i32 = arith.constant 0 : i32
    %c0_i32_0 = arith.constant 0 : i32
    %c0_i32_1 = arith.constant 0 : i32
    return %c0_i32, %c0_i32_0 : i32, i32
  }
  func.func @transform_10(%arg0: i32) -> (i32, i32) {
    %c0_i32 = arith.constant 0 : i32
    %c0_i32_0 = arith.constant 0 : i32
    return %c0_i32, %arg0 : i32, i32
  }
}

</mosaic_0001>

<llo_original>
// kernel: tpu_custom_call.1
$region0: #{tpu_custom_call.1}
  #allocation0 [shape = 'u32[]', space=smem, size = 0x4, offset = 0x4, fixed_abs, tag = 'smem constant byte address 0x4 - core index']
  #allocation1 [shape = 'u32[144,128]{1,0:T(1,128)}', space=vmem, size = 0x12000, scoped, tag = 'internal scratch']
  %s0 = inlined_call_operand.vmem [shape: bf16[32,2048], index: 0, kind: input, shape index: {}]
  %s1 = inlined_call_operand.vmem [shape: bf16[40,2048], index: 1, kind: input, shape index: {}]
  %s2 = inlined_call_operand.vmem [shape: bf16[16,32], index: 2, kind: input, shape index: {}]
  %s3 = inlined_call_operand.hbm [shape: bf16[16,16], index: 3, kind: input, shape index: {}]
  %s4 = inlined_call_operand.vmem [shape: bf16[8,16], index: 4, kind: input, shape index: {}]
  %s5 = inlined_call_operand.vmem [shape: bf16[8,8], index: 5, kind: input, shape index: {}]
  %s6 = inlined_call_operand.hbm [shape: bf16[8,8], index: 6, kind: input, shape index: {}]
  %s7 = inlined_call_operand.vmem [shape: f32[104,1], index: 7, kind: input, shape index: {}]
  %s8 = inlined_call_operand.vmem [shape: f32[512,8], index: 8, kind: input, shape index: {}]
  %s9 = inlined_call_operand.vmem [shape: f32[8,512], index: 9, kind: input, shape index: {}]
  %s10 = inlined_call_operand.hbm [shape: f32[8,2048], index: 10, kind: output, shape index: {}]
  %s11 = sld [smem:[#allocation0]]
  $region127: #{tpu_custom_call.1} parent=0
    _
  %s13 = ssub.s32 1, %s11
  %s14 = scalar_select 0, %s13, %s11
  $region1: #{tpu_custom_call.1} parent=0
    #allocation2 [shape = 'u8[65536]{0}', space=vmem, size = 0x10000, scoped, tag = 'input window, operand 0']
    #allocation3 [shape = 'u8[81920]{0}', space=vmem, size = 0x14000, scoped, tag = 'input window, operand 1']
    #allocation4 [shape = 'u8[4096]{0}', space=vmem, size = 0x1000, scoped, tag = 'input window, operand 3, single buffered']
    #allocation5 [shape = 's32[2]{0}', space=sflag, size = 0x8, scoped, tag = 'scoped memory for tpu_custom_call.1']
    #allocation6 [shape = 's32[2]{0}', space=sflag, size = 0x8, scoped, tag = 'scoped memory for tpu_custom_call.1']
    #allocation7 [shape = 'u8[2048]{0}', space=vmem, size = 0x800, scoped, tag = 'input window, operand 6, single buffered']
    #allocation8 [shape = 's32[1]{0}', space=sflag, size = 0x4, scoped, tag = 'scoped memory for tpu_custom_call.1']
    #allocation9 [shape = 'u8[32768]{0}', space=vmem, size = 0x8000, scoped, tag = 'output window, operand 0']
    %15 = vsyncpa [#allocation5], 0
    %16 = vsyncpa [#allocation8], 0
    %17 = vsyncpa [#allocation6], 0
    %s18 = scalar_lea.sflag [#allocation6], 1
    %19 = vsyncpa %s18, 0
    loop: start=0, step=1, limit=6
    $region2: #{tpu_custom_call.1} parent=1 // loop_pre_header
      _
    $region3: #{tpu_custom_call.1} parent=1 // loop_header
      %s21 = sphi 0, %s25
      %p22 = scmp.ge.s32.totalorder %s21, 6
      %s31 = sphi 0, %s33
      %s34 = sphi 0, %s31
      %s35 = sphi 0, %s34
      %s51 = sphi 0, %s35
      %s57 = sphi 0, %s59
      %s60 = sphi 0, %s57
      %s61 = sphi 0, %s60
      %s77 = sphi 0, %s61
      %s81 = sphi 0, %s81
      %s83 = sphi 0, %s81
      %s84 = sphi 0, %s83
      %s98 = sphi 0, %s84
      %s102 = sphi 0, %s102
      %s104 = sphi 0, %s102
      %s105 = sphi 0, %s104
      %s119 = sphi 0, %s105
      %s123 = sphi 0, %s123
      %s125 = sphi 0, %s123
      %s126 = sphi 0, %s125
      %s140 = sphi 0, %s126
      %s144 = sphi 0, %s144
      %s146 = sphi 0, %s144
      %s147 = sphi 0, %s146
      %s161 = sphi 0, %s147
      %s165 = sphi 0, %s165
      %s167 = sphi 0, %s165
      %s168 = sphi 0, %s167
      %s182 = sphi 0, %s168
      %s186 = sphi 0, %s186
      %s188 = sphi 0, %s186
      %s189 = sphi 0, %s188
      %s203 = sphi 0, %s189
      %s207 = sphi 0, %s207
      %s209 = sphi 0, %s207
      %s210 = sphi 0, %s209
      %s224 = sphi 0, %s210
      %s228 = sphi 0, %s228
      %s230 = sphi 0, %s228
      %s231 = sphi 0, %s230
      %s245 = sphi 0, %s231
      %s251 = sphi 0, %s253
      %s254 = sphi 0, %s251
      %s255 = sphi 0, %s254
      %s271 = sphi 0, %s255
    $region4: #{tpu_custom_call.1} parent=1 // loop_header_branch
      %24 = sbr.rel (%p22) target = $region8
    $region5: #{tpu_custom_call.1} parent=1 // loop_body
      %s26 = ssub.s32 %s21, 1
      %s27 = ssub.s32 %s21, 2
      %s28 = sadd.s32 %s21, 1
      %s29 = ssub.s32 %s21, %s28
      %p30 = scmp.eq.s32.totalorder %s29, 0
      %s32 = sadd.s32 %s31, 1
      %s33 = scalar_select %p30, %s31, %s32
      %p36 = pneg %p30
      %p37 = scmp.eq.s32.totalorder %s21, 3
      %p38 = por %p36, %p37
      %p39 = scmp.ne.s32.totalorder %s31, %s34
      %p40 = scmp.eq.s32.totalorder %s21, 0
      %p41 = por %p39, %p40
      %p42 = scmp.ne.s32.totalorder %s31, %s34
      %p43 = scmp.eq.s32.totalorder %s26, 3
      %p44 = por %p42, %p43
      %p45 = scmp.ne.s32.totalorder %s34, %s35
      %p46 = scmp.eq.s32.totalorder %s26, 0
      %p47 = por %p45, %p46
      %p48 = scmp.ne.s32.totalorder %s34, %s35
      %p49 = scmp.eq.s32.totalorder %s27, 3
      %p50 = por %p48, %p49
      %p52 = scmp.ne.s32.totalorder %s35, %s51
      %p53 = scmp.eq.s32.totalorder %s27, 0
      %p54 = por %p52, %p53
      %s55 = ssub.s32 %s21, %s28
      %p56 = scmp.eq.s32.totalorder %s55, 0
      %s58 = sadd.s32 %s57, 1
      %s59 = scalar_select %p56, %s57, %s58
      %p62 = pneg %p56
      %p63 = scmp.eq.s32.totalorder %s21, 3
      %p64 = por %p62, %p63
      %p65 = scmp.ne.s32.totalorder %s57, %s60
      %p66 = scmp.eq.s32.totalorder %s21, 0
      %p67 = por %p65, %p66
      %p68 = scmp.ne.s32.totalorder %s57, %s60
      %p69 = scmp.eq.s32.totalorder %s26, 3
      %p70 = por %p68, %p69
      %p71 = scmp.ne.s32.totalorder %s60, %s61
      %p72 = scmp.eq.s32.totalorder %s26, 0
      %p73 = por %p71, %p72
      %p74 = scmp.ne.s32.totalorder %s60, %s61
      %p75 = scmp.eq.s32.totalorder %s27, 3
      %p76 = por %p74, %p75
      %p78 = scmp.ne.s32.totalorder %s61, %s77
      %p79 = scmp.eq.s32.totalorder %s27, 0
      %p80 = por %p78, %p79
      %s82 = sadd.s32 %s81, 1
      %p85 = scmp.eq.s32.totalorder %s21, 3
      %p86 = scmp.ne.s32.totalorder %s81, %s83
      %p87 = scmp.eq.s32.totalorder %s21, 0
      %p88 = por %p86, %p87
      %p89 = scmp.ne.s32.totalorder %s81, %s83
      %p90 = scmp.eq.s32.totalorder %s26, 3
      %p91 = por %p89, %p90
      %p92 = scmp.ne.s32.totalorder %s83, %s84
      %p93 = scmp.eq.s32.totalorder %s26, 0
      %p94 = por %p92, %p93
      %p95 = scmp.ne.s32.totalorder %s83, %s84
      %p96 = scmp.eq.s32.totalorder %s27, 3
      %p97 = por %p95, %p96
      %p99 = scmp.ne.s32.totalorder %s84, %s98
      %p100 = scmp.eq.s32.totalorder %s27, 0
      %p101 = por %p99, %p100
      %s103 = sadd.s32 %s102, 1
      %p106 = scmp.eq.s32.totalorder %s21, 3
      %p107 = scmp.ne.s32.totalorder %s102, %s104
      %p108 = scmp.eq.s32.totalorder %s21, 0
      %p109 = por %p107, %p108
      %p110 = scmp.ne.s32.totalorder %s102, %s104
      %p111 = scmp.eq.s32.totalorder %s26, 3
      %p112 = por %p110, %p111
      %p113 = scmp.ne.s32.totalorder %s104, %s105
      %p114 = scmp.eq.s32.totalorder %s26, 0
      %p115 = por %p113, %p114
      %p116 = scmp.ne.s32.totalorder %s104, %s105
      %p117 = scmp.eq.s32.totalorder %s27, 3
      %p118 = por %p116, %p117
      %p120 = scmp.ne.s32.totalorder %s105, %s119
      %p121 = scmp.eq.s32.totalorder %s27, 0
      %p122 = por %p120, %p121
      %s124 = sadd.s32 %s123, 1
      %p127 = scmp.eq.s32.totalorder %s21, 3
      %p128 = scmp.ne.s32.totalorder %s123, %s125
      %p129 = scmp.eq.s32.totalorder %s21, 0
      %p130 = por %p128, %p129
      %p131 = scmp.ne.s32.totalorder %s123, %s125
      %p132 = scmp.eq.s32.totalorder %s26, 3
      %p133 = por %p131, %p132
      %p134 = scmp.ne.s32.totalorder %s125, %s126
      %p135 = scmp.eq.s32.totalorder %s26, 0
      %p136 = por %p134, %p135
      %p137 = scmp.ne.s32.totalorder %s125, %s126
      %p138 = scmp.eq.s32.totalorder %s27, 3
      %p139 = por %p137, %p138
      %p141 = scmp.ne.s32.totalorder %s126, %s140
      %p142 = scmp.eq.s32.totalorder %s27, 0
      %p143 = por %p141, %p142
      %s145 = sadd.s32 %s144, 1
      %p148 = scmp.eq.s32.totalorder %s21, 3
      %p149 = scmp.ne.s32.totalorder %s144, %s146
      %p150 = scmp.eq.s32.totalorder %s21, 0
      %p151 = por %p149, %p150
      %p152 = scmp.ne.s32.totalorder %s144, %s146
      %p153 = scmp.eq.s32.totalorder %s26, 3
      %p154 = por %p152, %p153
      %p155 = scmp.ne.s32.totalorder %s146, %s147
      %p156 = scmp.eq.s32.totalorder %s26, 0
      %p157 = por %p155, %p156
      %p158 = scmp.ne.s32.totalorder %s146, %s147
      %p159 = scmp.eq.s32.totalorder %s27, 3
      %p160 = por %p158, %p159
      %p162 = scmp.ne.s32.totalorder %s147, %s161
      %p163 = scmp.eq.s32.totalorder %s27, 0
      %p164 = por %p162, %p163
      %s166 = sadd.s32 %s165, 1
      %p169 = scmp.eq.s32.totalorder %s21, 3
      %p170 = scmp.ne.s32.totalorder %s165, %s167
      %p171 = scmp.eq.s32.totalorder %s21, 0
      %p172 = por %p170, %p171
      %p173 = scmp.ne.s32.totalorder %s165, %s167
      %p174 = scmp.eq.s32.totalorder %s26, 3
      %p175 = por %p173, %p174
      %p176 = scmp.ne.s32.totalorder %s167, %s168
      %p177 = scmp.eq.s32.totalorder %s26, 0
      %p178 = por %p176, %p177
      %p179 = scmp.ne.s32.totalorder %s167, %s168
      %p180 = scmp.eq.s32.totalorder %s27, 3
      %p181 = por %p179, %p180
      %p183 = scmp.ne.s32.totalorder %s168, %s182
      %p184 = scmp.eq.s32.totalorder %s27, 0
      %p185 = por %p183, %p184
      %s187 = sadd.s32 %s186, 1
      %p190 = scmp.eq.s32.totalorder %s21, 3
      %p191 = scmp.ne.s32.totalorder %s186, %s188
      %p192 = scmp.eq.s32.totalorder %s21, 0
      %p193 = por %p191, %p192
      %p194 = scmp.ne.s32.totalorder %s186, %s188
      %p195 = scmp.eq.s32.totalorder %s26, 3
      %p196 = por %p194, %p195
      %p197 = scmp.ne.s32.totalorder %s188, %s189
      %p198 = scmp.eq.s32.totalorder %s26, 0
      %p199 = por %p197, %p198
      %p200 = scmp.ne.s32.totalorder %s188, %s189
      %p201 = scmp.eq.s32.totalorder %s27, 3
      %p202 = por %p200, %p201
      %p204 = scmp.ne.s32.totalorder %s189, %s203
      %p205 = scmp.eq.s32.totalorder %s27, 0
      %p206 = por %p204, %p205
      %s208 = sadd.s32 %s207, 1
      %p211 = scmp.eq.s32.totalorder %s21, 3
      %p212 = scmp.ne.s32.totalorder %s207, %s209
      %p213 = scmp.eq.s32.totalorder %s21, 0
      %p214 = por %p212, %p213
      %p215 = scmp.ne.s32.totalorder %s207, %s209
      %p216 = scmp.eq.s32.totalorder %s26, 3
      %p217 = por %p215, %p216
      %p218 = scmp.ne.s32.totalorder %s209, %s210
      %p219 = scmp.eq.s32.totalorder %s26, 0
      %p220 = por %p218, %p219
      %p221 = scmp.ne.s32.totalorder %s209, %s210
      %p222 = scmp.eq.s32.totalorder %s27, 3
      %p223 = por %p221, %p222
      %p225 = scmp.ne.s32.totalorder %s210, %s224
      %p226 = scmp.eq.s32.totalorder %s27, 0
      %p227 = por %p225, %p226
      %s229 = sadd.s32 %s228, 1
      %p232 = scmp.eq.s32.totalorder %s21, 3
      %p233 = scmp.ne.s32.totalorder %s228, %s230
      %p234 = scmp.eq.s32.totalorder %s21, 0
      %p235 = por %p233, %p234
      %p236 = scmp.ne.s32.totalorder %s228, %s230
      %p237 = scmp.eq.s32.totalorder %s26, 3
      %p238 = por %p236, %p237
      %p239 = scmp.ne.s32.totalorder %s230, %s231
      %p240 = scmp.eq.s32.totalorder %s26, 0
      %p241 = por %p239, %p240
      %p242 = scmp.ne.s32.totalorder %s230, %s231
      %p243 = scmp.eq.s32.totalorder %s27, 3
      %p244 = por %p242, %p243
      %p246 = scmp.ne.s32.totalorder %s231, %s245
      %p247 = scmp.eq.s32.totalorder %s27, 0
      %p248 = por %p246, %p247
      %s249 = ssub.s32 %s21, %s28
      %p250 = scmp.eq.s32.totalorder %s249, 0
      %s252 = sadd.s32 %s251, 1
      %s253 = scalar_select %p250, %s251, %s252
      %p256 = pneg %p250
      %p257 = scmp.eq.s32.totalorder %s21, 3
      %p258 = por %p256, %p257
      %p259 = scmp.ne.s32.totalorder %s251, %s254
      %p260 = scmp.eq.s32.totalorder %s21, 0
      %p261 = por %p259, %p260
      %p262 = scmp.ne.s32.totalorder %s251, %s254
      %p263 = scmp.eq.s32.totalorder %s26, 3
      %p264 = por %p262, %p263
      %p265 = scmp.ne.s32.totalorder %s254, %s255
      %p266 = scmp.eq.s32.totalorder %s26, 0
      %p267 = por %p265, %p266
      %p268 = scmp.ne.s32.totalorder %s254, %s255
      %p269 = scmp.eq.s32.totalorder %s27, 3
      %p270 = por %p268, %p269
      %p272 = scmp.ne.s32.totalorder %s255, %s271
      %p273 = scmp.eq.s32.totalorder %s27, 0
      %p274 = por %p272, %p273
      %p275 = scmp.le.s32.totalorder 1, %s21
      %p276 = scmp.lt.s32.totalorder %s21, 5
      %p277 = pnand %p275, %p276
      %p278 = pneg %p277
      // Predicated region
      $region9: #{tpu_custom_call.1} parent=5 // pred_check
        _
      $region10: #{tpu_custom_call.1} parent=5 // pred_check_branch
        %280 = sbr.rel (%p277) target = $region12
      $region11: #{tpu_custom_call.1} parent=5 // pred_region
        %s281 = ssub.s32 %s21, 1
        // Predicated region
        $region13: #{tpu_custom_call.1} parent=11 // pred_check
          %p282 = pneg %p94
        $region14: #{tpu_custom_call.1} parent=11 // pred_check_branch
          %284 = sbr.rel (%p282) target = $region16
        $region15: #{tpu_custom_call.1} parent=11 // pred_region
          _
        $region16: #{tpu_custom_call.1} parent=11 // pred_fallthru
          _
        // Predicated region
        $region17: #{tpu_custom_call.1} parent=11 // pred_check
          %p285 = pneg %p115
        $region18: #{tpu_custom_call.1} parent=11 // pred_check_branch
          %287 = sbr.rel (%p285) target = $region20
        $region19: #{tpu_custom_call.1} parent=11 // pred_region
          %s289 = ssub.s32 128, 128
          %290 = vsyncadd [#allocation5], %s289
          %s291 = sshll.u32 [#allocation4], 4
          %s292 = int_to_ptr.vmem [resolvable:$true] %s291
          %297 = dma.hbm_to_vmem [thread:$0]  %s3, 128, %s292, [#allocation5], 64, 64, 4
        $region20: #{tpu_custom_call.1} parent=11 // pred_fallthru
          _
        // Predicated region
        $region21: #{tpu_custom_call.1} parent=11 // pred_check
          %p298 = pneg %p136
        $region22: #{tpu_custom_call.1} parent=11 // pred_check_branch
          %300 = sbr.rel (%p298) target = $region24
        $region23: #{tpu_custom_call.1} parent=11 // pred_region
          _
        $region24: #{tpu_custom_call.1} parent=11 // pred_fallthru
          _
        // Predicated region
        $region25: #{tpu_custom_call.1} parent=11 // pred_check
          %p301 = pneg %p157
        $region26: #{tpu_custom_call.1} parent=11 // pred_check_branch
          %303 = sbr.rel (%p301) target = $region28
        $region27: #{tpu_custom_call.1} parent=11 // pred_region
          _
        $region28: #{tpu_custom_call.1} parent=11 // pred_fallthru
          _
        // Predicated region
        $region29: #{tpu_custom_call.1} parent=11 // pred_check
          %p304 = pneg %p178
        $region30: #{tpu_custom_call.1} parent=11 // pred_check_branch
          %306 = sbr.rel (%p304) target = $region32
        $region31: #{tpu_custom_call.1} parent=11 // pred_region
          %s308 = ssub.s32 64, 64
          %309 = vsyncadd [#allocation8], %s308
          %s311 = sshll.u32 [#allocation7], 4
          %s312 = int_to_ptr.vmem [resolvable:$true] %s311
          %314 = dma.hbm_to_vmem [thread:$0]  %s6, 64, %s312, [#allocation8]
        $region32: #{tpu_custom_call.1} parent=11 // pred_fallthru
          _
        // Predicated region
        $region33: #{tpu_custom_call.1} parent=11 // pred_check
          %p315 = pneg %p199
        $region34: #{tpu_custom_call.1} parent=11 // pred_check_branch
          %317 = sbr.rel (%p315) target = $region36
        $region35: #{tpu_custom_call.1} parent=11 // pred_region
          _
        $region36: #{tpu_custom_call.1} parent=11 // pred_fallthru
          _
        // Predicated region
        $region37: #{tpu_custom_call.1} parent=11 // pred_check
          %p318 = pneg %p220
        $region38: #{tpu_custom_call.1} parent=11 // pred_check_branch
          %320 = sbr.rel (%p318) target = $region40
        $region39: #{tpu_custom_call.1} parent=11 // pred_region
          _
        $region40: #{tpu_custom_call.1} parent=11 // pred_fallthru
          _
        // Predicated region
        $region41: #{tpu_custom_call.1} parent=11 // pred_check
          %p321 = pneg %p241
        $region42: #{tpu_custom_call.1} parent=11 // pred_check_branch
          %323 = sbr.rel (%p321) target = $region44
        $region43: #{tpu_custom_call.1} parent=11 // pred_region
          _
        $region44: #{tpu_custom_call.1} parent=11 // pred_fallthru
          _
      $region12: #{tpu_custom_call.1} parent=5 // pred_fallthru
        _
      %p324 = scmp.lt.s32.totalorder %s21, 4
      // Predicated region
      $region45: #{tpu_custom_call.1} parent=5 // pred_check
        %p325 = pneg %p324
      $region46: #{tpu_custom_call.1} parent=5 // pred_check_branch
        %327 = sbr.rel (%p325) target = $region48
      $region47: #{tpu_custom_call.1} parent=5 // pred_region
        // Predicated region
        $region49: #{tpu_custom_call.1} parent=47 // pred_check
          %p328 = pneg %p41
        $region50: #{tpu_custom_call.1} parent=47 // pred_check_branch
          %330 = sbr.rel (%p328) target = $region52
        $region51: #{tpu_custom_call.1} parent=47 // pred_region
          %s331 = sand.u32 %s31, 1
          %s332 = sand.u32 %s31, 1
          %s333 = smul.addr %s332, 64
          %s334 = scalar_lea.vmem [#allocation2], %s333
          %s335 = smul.u32 4, %s21
          %s336 = smul.addr %s335, 4
          %s337 = scalar_lea.vmem %s0, %s336
          // Predicated region
          $region53: #{tpu_custom_call.1} parent=51 // pred_check
            _
          $region54: #{tpu_custom_call.1} parent=51 // pred_check_branch
            %339 = sbr.rel (0) target = $region56
          $region55: #{tpu_custom_call.1} parent=51 // pred_region
            // Predicated region
            $region57: #{tpu_custom_call.1} parent=55 // pred_check
              _
            $region58: #{tpu_custom_call.1} parent=55 // pred_check_branch
              %341 = sbr.rel (0) target = $region60
            $region59: #{tpu_custom_call.1} parent=55 // pred_region
              loop: start=0, step=1, limit=1
              $region61: #{tpu_custom_call.1} parent=59 // loop_pre_header
                _
              $region62: #{tpu_custom_call.1} parent=59 // loop_header
                %s343 = sphi 0, %s347
                %p344 = scmp.ge.s32.totalorder %s343, 1
                %s348 = sphi %s337, %s337
                %s349 = sphi %s334, %s334
              $region63: #{tpu_custom_call.1} parent=59 // loop_header_branch
                %346 = sbr.rel (%p344) target = $region67
              $region64: #{tpu_custom_call.1} parent=59 // loop_body
                %v350 = vld [vmem:[%s348] sm:$0xff]
                %351 = vst [vmem:[%s349] sm:$0xff] %v350
                %v352 = vld [vmem:[%s348 + $0x8] sm:$0xff]
                %353 = vst [vmem:[%s349 + $0x8] sm:$0xff] %v352
                %v354 = vld [vmem:[%s348 + $0x40] sm:$0xff]
                %355 = vst [vmem:[%s349 + $0x10] sm:$0xff] %v354
                %v356 = vld [vmem:[%s348 + $0x48] sm:$0xff]
                %357 = vst [vmem:[%s349 + $0x18] sm:$0xff] %v356
                %v358 = vld [vmem:[%s348 + $0x80] sm:$0xff]
                %359 = vst [vmem:[%s349 + $0x20] sm:$0xff] %v358
                %v360 = vld [vmem:[%s348 + $0x88] sm:$0xff]
                %361 = vst [vmem:[%s349 + $0x28] sm:$0xff] %v360
                %v362 = vld [vmem:[%s348 + $0xc0] sm:$0xff]
                %363 = vst [vmem:[%s349 + $0x30] sm:$0xff] %v362
                %v364 = vld [vmem:[%s348 + $0xc8] sm:$0xff]
                %365 = vst [vmem:[%s349 + $0x38] sm:$0xff] %v364
              $region65: #{tpu_custom_call.1} parent=59 // loop_footer
                %s347 = sadd.s32 1, %s343
              $region66: #{tpu_custom_call.1} parent=59 // loop_footer_branch
                %342 = sbr.rel target = $region62
              $region67: #{tpu_custom_call.1} parent=59 // loop_exit
                _
            $region60: #{tpu_custom_call.1} parent=55 // pred_fallthru
              _
            // Predicated region
            $region68: #{tpu_custom_call.1} parent=55 // pred_check
              _
            $region69: #{tpu_custom_call.1} parent=55 // pred_check_branch
              %367 = sbr.rel target = $region71
            $region70: #{tpu_custom_call.1} parent=55 // pred_region
              _
            $region71: #{tpu_custom_call.1} parent=55 // pred_fallthru
              _
          $region56: #{tpu_custom_call.1} parent=51 // pred_fallthru
            _
          %368 = vnop
        $region52: #{tpu_custom_call.1} parent=47 // pred_fallthru
          _
        // Predicated region
        $region72: #{tpu_custom_call.1} parent=47 // pred_check
          %p369 = pneg %p67
        $region73: #{tpu_custom_call.1} parent=47 // pred_check_branch
          %371 = sbr.rel (%p369) target = $region75
        $region74: #{tpu_custom_call.1} parent=47 // pred_region
          %s372 = sand.u32 %s57, 1
          %s373 = sand.u32 %s57, 1
          %s374 = smul.addr %s373, 80
          %s375 = scalar_lea.vmem [#allocation3], %s374
          %s376 = smul.u32 4, %s21
          %s377 = smul.addr %s376, 4
          %s378 = scalar_lea.vmem %s1, %s377
          // Predicated region
          $region76: #{tpu_custom_call.1} parent=74 // pred_check
            _
          $region77: #{tpu_custom_call.1} parent=74 // pred_check_branch
            %380 = sbr.rel (0) target = $region79
          $region78: #{tpu_custom_call.1} parent=74 // pred_region
            // Predicated region
            $region80: #{tpu_custom_call.1} parent=78 // pred_check
              _
            $region81: #{tpu_custom_call.1} parent=78 // pred_check_branch
              %382 = sbr.rel (0) target = $region83
            $region82: #{tpu_custom_call.1} parent=78 // pred_region
              loop: start=0, step=1, limit=1
              $region84: #{tpu_custom_call.1} parent=82 // loop_pre_header
                _
              $region85: #{tpu_custom_call.1} parent=82 // loop_header
                %s384 = sphi 0, %s388
                %p385 = scmp.ge.s32.totalorder %s384, 1
                %s389 = sphi %s378, %s378
                %s390 = sphi %s375, %s375
              $region86: #{tpu_custom_call.1} parent=82 // loop_header_branch
                %387 = sbr.rel (%p385) target = $region90
              $region87: #{tpu_custom_call.1} parent=82 // loop_body
                %v391 = vld [vmem:[%s389] sm:$0xff]
                %392 = vst [vmem:[%s390] sm:$0xff] %v391
                %v393 = vld [vmem:[%s389 + $0x8] sm:$0xff]
                %394 = vst [vmem:[%s390 + $0x8] sm:$0xff] %v393
                %v395 = vld [vmem:[%s389 + $0x40] sm:$0xff]
                %396 = vst [vmem:[%s390 + $0x10] sm:$0xff] %v395
                %v397 = vld [vmem:[%s389 + $0x48] sm:$0xff]
                %398 = vst [vmem:[%s390 + $0x18] sm:$0xff] %v397
                %v399 = vld [vmem:[%s389 + $0x80] sm:$0xff]
                %400 = vst [vmem:[%s390 + $0x20] sm:$0xff] %v399
                %v401 = vld [vmem:[%s389 + $0x88] sm:$0xff]
                %402 = vst [vmem:[%s390 + $0x28] sm:$0xff] %v401
                %v403 = vld [vmem:[%s389 + $0xc0] sm:$0xff]
                %404 = vst [vmem:[%s390 + $0x30] sm:$0xff] %v403
                %v405 = vld [vmem:[%s389 + $0xc8] sm:$0xff]
                %406 = vst [vmem:[%s390 + $0x38] sm:$0xff] %v405
                %v407 = vld [vmem:[%s389 + $0x100] sm:$0xff]
                %408 = vst [vmem:[%s390 + $0x40] sm:$0xff] %v407
                %v409 = vld [vmem:[%s389 + $0x108] sm:$0xff]
                %410 = vst [vmem:[%s390 + $0x48] sm:$0xff] %v409
              $region88: #{tpu_custom_call.1} parent=82 // loop_footer
                %s388 = sadd.s32 1, %s384
              $region89: #{tpu_custom_call.1} parent=82 // loop_footer_branch
                %383 = sbr.rel target = $region85
              $region90: #{tpu_custom_call.1} parent=82 // loop_exit
                _
            $region83: #{tpu_custom_call.1} parent=78 // pred_fallthru
              _
            // Predicated region
            $region91: #{tpu_custom_call.1} parent=78 // pred_check
              _
            $region92: #{tpu_custom_call.1} parent=78 // pred_check_branch
              %412 = sbr.rel target = $region94
            $region93: #{tpu_custom_call.1} parent=78 // pred_region
              _
            $region94: #{tpu_custom_call.1} parent=78 // pred_fallthru
              _
          $region79: #{tpu_custom_call.1} parent=74 // pred_fallthru
            _
          %413 = vnop
        $region75: #{tpu_custom_call.1} parent=47 // pred_fallthru
          _
      $region48: #{tpu_custom_call.1} parent=5 // pred_fallthru
        _
      %p414 = scmp.le.s32.totalorder 1, %s21
      %p415 = scmp.lt.s32.totalorder %s21, 5
      %p416 = pnand %p414, %p415
      %p417 = pneg %p416
      // Predicated region
      $region95: #{tpu_custom_call.1} parent=5 // pred_check
        _
      $region96: #{tpu_custom_call.1} parent=5 // pred_check_branch
        %419 = sbr.rel (%p416) target = $region98
      $region97: #{tpu_custom_call.1} parent=5 // pred_region
        %s420 = ssub.s32 %s21, 1
        %s421 = sand.u32 %s34, 1
        %s422 = sand.u32 %s34, 1
        %s423 = smul.addr %s422, 64
        %s424 = scalar_lea.vmem [#allocation2], %s423
        // Predicated region
        $region99: #{tpu_custom_call.1} parent=97 // pred_check
          %p425 = pneg %p47
        $region100: #{tpu_custom_call.1} parent=97 // pred_check_branch
          %427 = sbr.rel (%p425) target = $region102
        $region101: #{tpu_custom_call.1} parent=97 // pred_region
          _
        $region102: #{tpu_custom_call.1} parent=97 // pred_fallthru
          _
        %s428 = sand.u32 %s60, 1
        %s429 = sand.u32 %s60, 1
        %s430 = smul.addr %s429, 80
        %s431 = scalar_lea.vmem [#allocation3], %s430
        // Predicated region
        $region103: #{tpu_custom_call.1} parent=97 // pred_check
          %p432 = pneg %p73
        $region104: #{tpu_custom_call.1} parent=97 // pred_check_branch
          %434 = sbr.rel (%p432) target = $region106
        $region105: #{tpu_custom_call.1} parent=97 // pred_region
          _
        $region106: #{tpu_custom_call.1} parent=97 // pred_fallthru
          _
        // Predicated region
        $region107: #{tpu_custom_call.1} parent=97 // pred_check
          %p435 = pneg %p115
        $region108: #{tpu_custom_call.1} parent=97 // pred_check_branch
          %437 = sbr.rel (%p435) target = $region110
        $region109: #{tpu_custom_call.1} parent=97 // pred_region
          %438 = dma.done [#allocation5], 128
        $region110: #{tpu_custom_call.1} parent=97 // pred_fallthru
          _
        // Predicated region
        $region111: #{tpu_custom_call.1} parent=97 // pred_check
          %p439 = pneg %p178
        $region112: #{tpu_custom_call.1} parent=97 // pred_check_branch
          %441 = sbr.rel (%p439) target = $region114
        $region113: #{tpu_custom_call.1} parent=97 // pred_region
          %442 = dma.done [#allocation8], 64
        $region114: #{tpu_custom_call.1} parent=97 // pred_fallthru
          _
        %s443 = sand.u32 %s34, 1
        %s444 = sand.u32 %s34, 1
        %s445 = smul.addr %s444, 64
        %s446 = scalar_lea.vmem [#allocation2], %s445
        %p447 = pneg %p47
        %p448 = pneg %p44
        %s449 = sand.u32 %s60, 1
        %s450 = sand.u32 %s60, 1
        %s451 = smul.addr %s450, 80
        %s452 = scalar_lea.vmem [#allocation3], %s451
        %p453 = pneg %p73
        %p454 = pneg %p70
        %p455 = pneg %p94
        %p456 = pneg %p91
        %p457 = pneg %p115
        %p458 = pneg %p112
        %p459 = pneg %p136
        %p460 = pneg %p133
        %p461 = pneg %p157
        %p462 = pneg %p154
        %p463 = pneg %p178
        %p464 = pneg %p175
        %p465 = pneg %p199
        %p466 = pneg %p196
        %p467 = pneg %p220
        %p468 = pneg %p217
        %p469 = pneg %p241
        %p470 = pneg %p238
        %p471 = pneg %p267
        %p472 = pneg %p264
        %s473 = sand.u32 %s254, 1
        %s474 = scalar_lea.sflag [#allocation6], %s473
        %s475 = sand.u32 %s254, 1
        %s476 = smul.addr %s475, 32
        %s477 = scalar_lea.vmem [#allocation9], %s476
        %s478 = smul.u32 4, %s26
        %s479 = smul.u32 4, %s26
        %s480 = smul.u32 4, %s26
        %v482 = vld [vmem:[%s8] sm:$0xff]
        %v483 = vld [vmem:[%s8 + $0x8] sm:$0xff]
        %v484 = vld [vmem:[%s8 + $0x10] sm:$0xff]
        %v485 = vld [vmem:[%s8 + $0x18] sm:$0xff]
        %v486 = vld [vmem:[%s8 + $0x20] sm:$0xff]
        %v487 = vld [vmem:[%s8 + $0x28] sm:$0xff]
        %v488 = vld [vmem:[%s8 + $0x30] sm:$0xff]
        %v489 = vld [vmem:[%s8 + $0x38] sm:$0xff]
        %v490 = vld [vmem:[%s8 + $0x40] sm:$0xff]
        %v491 = vld [vmem:[%s8 + $0x48] sm:$0xff]
        %v492 = vld [vmem:[%s8 + $0x50] sm:$0xff]
        %v493 = vld [vmem:[%s8 + $0x58] sm:$0xff]
        %v494 = vld [vmem:[%s8 + $0x60] sm:$0xff]
        %v495 = vld [vmem:[%s8 + $0x68] sm:$0xff]
        %v496 = vld [vmem:[%s8 + $0x70] sm:$0xff]
        %v497 = vld [vmem:[%s8 + $0x78] sm:$0xff]
        %v498 = vld [vmem:[%s8 + $0x80] sm:$0xff]
        %v499 = vld [vmem:[%s8 + $0x88] sm:$0xff]
        %v500 = vld [vmem:[%s8 + $0x90] sm:$0xff]
        %v501 = vld [vmem:[%s8 + $0x98] sm:$0xff]
        %v502 = vld [vmem:[%s8 + $0xa0] sm:$0xff]
        %v503 = vld [vmem:[%s8 + $0xa8] sm:$0xff]
        %v504 = vld [vmem:[%s8 + $0xb0] sm:$0xff]
        %v505 = vld [vmem:[%s8 + $0xb8] sm:$0xff]
        %v506 = vld [vmem:[%s8 + $0xc0] sm:$0xff]
        %v507 = vld [vmem:[%s8 + $0xc8] sm:$0xff]
        %v508 = vld [vmem:[%s8 + $0xd0] sm:$0xff]
        %v509 = vld [vmem:[%s8 + $0xd8] sm:$0xff]
        %v510 = vld [vmem:[%s8 + $0xe0] sm:$0xff]
        %v511 = vld [vmem:[%s8 + $0xe8] sm:$0xff]
        %v512 = vld [vmem:[%s8 + $0xf0] sm:$0xff]
        %v513 = vld [vmem:[%s8 + $0xf8] sm:$0xff]
        %v514 = vld [vmem:[%s8 + $0x100] sm:$0xff]
        %v515 = vld [vmem:[%s8 + $0x108] sm:$0xff]
        %v516 = vld [vmem:[%s8 + $0x110] sm:$0xff]
        %v517 = vld [vmem:[%s8 + $0x118] sm:$0xff]
        %v518 = vld [vmem:[%s8 + $0x120] sm:$0xff]
        %v519 = vld [vmem:[%s8 + $0x128] sm:$0xff]
        %v520 = vld [vmem:[%s8 + $0x130] sm:$0xff]
        %v521 = vld [vmem:[%s8 + $0x138] sm:$0xff]
        %v522 = vld [vmem:[%s8 + $0x140] sm:$0xff]
        %v523 = vld [vmem:[%s8 + $0x148] sm:$0xff]
        %v524 = vld [vmem:[%s8 + $0x150] sm:$0xff]
        %v525 = vld [vmem:[%s8 + $0x158] sm:$0xff]
        %v526 = vld [vmem:[%s8 + $0x160] sm:$0xff]
        %v527 = vld [vmem:[%s8 + $0x168] sm:$0xff]
        %v528 = vld [vmem:[%s8 + $0x170] sm:$0xff]
        %v529 = vld [vmem:[%s8 + $0x178] sm:$0xff]
        %v530 = vld [vmem:[%s8 + $0x180] sm:$0xff]
        %v531 = vld [vmem:[%s8 + $0x188] sm:$0xff]
        %v532 = vld [vmem:[%s8 + $0x190] sm:$0xff]
        %v533 = vld [vmem:[%s8 + $0x198] sm:$0xff]
        %v534 = vld [vmem:[%s8 + $0x1a0] sm:$0xff]
        %v535 = vld [vmem:[%s8 + $0x1a8] sm:$0xff]
        %v536 = vld [vmem:[%s8 + $0x1b0] sm:$0xff]
        %v537 = vld [vmem:[%s8 + $0x1b8] sm:$0xff]
        %v538 = vld [vmem:[%s8 + $0x1c0] sm:$0xff]
        %v539 = vld [vmem:[%s8 + $0x1c8] sm:$0xff]
        %v540 = vld [vmem:[%s8 + $0x1d0] sm:$0xff]
        %v541 = vld [vmem:[%s8 + $0x1d8] sm:$0xff]
        %v542 = vld [vmem:[%s8 + $0x1e0] sm:$0xff]
        %v543 = vld [vmem:[%s8 + $0x1e8] sm:$0xff]
        %v544 = vld [vmem:[%s8 + $0x1f0] sm:$0xff]
        %v545 = vld [vmem:[%s8 + $0x1f8] sm:$0xff]
        %v546 = vld [vmem:[%s9] sm:$0xff]
        %v547 = vld [vmem:[%s9 + $0x8] sm:$0xff]
        %v548 = vld [vmem:[%s9 + $0x10] sm:$0xff]
        %v549 = vld [vmem:[%s9 + $0x18] sm:$0xff]
        %v550 = vld [vmem:[%s424] sm:$0xff]
        %v551 = vld [vmem:[%s424 + $0x8] sm:$0xff]
        %v552 = vld [vmem:[%s424 + $0x10] sm:$0xff]
        %v553 = vld [vmem:[%s424 + $0x18] sm:$0xff]
        %v554 = vld [vmem:[%s424 + $0x20] sm:$0xff]
        %v555 = vld [vmem:[%s424 + $0x28] sm:$0xff]
        %v556 = vld [vmem:[%s424 + $0x30] sm:$0xff]
        %v557 = vld [vmem:[%s424 + $0x38] sm:$0xff]
        %v558 = vld [vmem:[%s7] sm:$0xff]
        %v559 = vld [vmem:[%s7 + $0x8] sm:$0xff]
        %v560 = vld [vmem:[%s7 + $0x10] sm:$0xff]
        %v561 = vld [vmem:[%s7 + $0x18] sm:$0xff]
        %v562 = vld [vmem:[%s2] sm:$0xf]
        %v563 = vld [vmem:[%s2 + $0x4] sm:$0xf]
        %v566 = vunpack.c.l.b16 %v562
        %v567 = vunpack.c.l.b16 %v563
        %v568 = vpack.c.b16 %v567, %v566
        %v577 = vunpack.c.l.b16 %v550
        %v578 = vunpack.c.h.b16 %v550
        %v579 = vunpack.c.l.b16 %v551
        %v580 = vunpack.c.h.b16 %v551
        %v581 = vunpack.c.l.b16 %v552
        %v582 = vunpack.c.h.b16 %v552
        %v583 = vunpack.c.l.b16 %v553
        %v584 = vunpack.c.h.b16 %v553
        %v585 = vunpack.c.l.b16 %v554
        %v586 = vunpack.c.h.b16 %v554
        %v587 = vunpack.c.l.b16 %v555
        %v588 = vunpack.c.h.b16 %v555
        %v589 = vunpack.c.l.b16 %v556
        %v590 = vunpack.c.h.b16 %v556
        %v591 = vunpack.c.l.b16 %v557
        %v592 = vunpack.c.h.b16 %v557
        %v593 = vpack.c.b16 %v581, %v577
        %v594 = vpack.c.b16 %v582, %v578
        %v595 = vpack.c.b16 %v583, %v579
        %v596 = vpack.c.b16 %v584, %v580
        %v597 = vpack.c.b16 %v589, %v585
        %v598 = vpack.c.b16 %v590, %v586
        %v599 = vpack.c.b16 %v591, %v587
        %v600 = vpack.c.b16 %v592, %v588
        %vm609 = vcmask 261120
        %v611 = vsel %vm609, %v568, 0
        %613 = vmatprep.subr.bf16.mxu0 0
        %614 = vmatpush1.bf16.msra.mxu0 0
        %615 = vmatprep.subr.bf16.mxu0 0
        %616 = vmatpush1.bf16.msra.mxu0 0
        %617 = vmatprep.subr.bf16.mxu0 0
        %618 = vmatpush1.bf16.msra.mxu0 0
        %619 = vmatprep.subr.bf16.mxu0 0
        %620 = vmatpush1.bf16.msra.mxu0 0
        %621 = vmatprep.subr.bf16.mxu0 0
        %622 = vmatpush1.bf16.msra.mxu0 0
        %623 = vmatprep.subr.bf16.mxu0 0
        %624 = vmatpush1.bf16.msra.mxu0 0
        %625 = vmatprep.subr.bf16.mxu0 %v598
        %626 = vmatpush1.bf16.msra.mxu0 %v597
        %627 = vmatprep.subr.bf16.mxu0 %v594
        %628 = vmatpush1.bf16.msra.mxu0 %v593
        %629 = vmatprep.subr.bf16.mxu0 0
        %630 = vmatpush2.bf16.msra.mxu0 0
        %631 = vmatprep.subr.bf16.mxu0 0
        %632 = vmatpush2.bf16.msra.mxu0 0
        %633 = vmatprep.subr.bf16.mxu0 0
        %634 = vmatpush2.bf16.msra.mxu0 0
        %635 = vmatprep.subr.bf16.mxu0 0
        %636 = vmatpush2.bf16.msra.mxu0 0
        %637 = vmatprep.subr.bf16.mxu0 0
        %638 = vmatpush2.bf16.msra.mxu0 0
        %639 = vmatprep.subr.bf16.mxu0 0
        %640 = vmatpush2.bf16.msra.mxu0 0
        %641 = vmatprep.subr.bf16.mxu0 0
        %642 = vmatpush2.bf16.msra.mxu0 0
        %643 = vmatprep.subr.bf16.mxu0 0
        %644 = vmatpush2.bf16.msra.mxu0 0
        %645 = vmatprep.mubr.bf16.mxu0 0
        %646 = vmatmul.mubr.bf16.gmra.mxu0 %v611
        %v647 = vpop.f32.mrf.mxu0
        %v648 = vadd.f32 0.0, %v647
        %v649 = vpop.f32.mrf.mxu0
        %v650 = vadd.f32 0.0, %v649
        %v651 = vpop.f32.mrf.mxu0
        %v652 = vadd.f32 0.0, %v651
        %v653 = vpop.f32.mrf.mxu0
        %v654 = vadd.f32 0.0, %v653
        %655 = vdwg.mxu0
        %656 = vmatprep.subr.bf16.mxu0 0
        %657 = vmatpush1.bf16.msra.mxu0 0
        %658 = vmatprep.subr.bf16.mxu0 0
        %659 = vmatpush1.bf16.msra.mxu0 0
        %660 = vmatprep.subr.bf16.mxu0 0
        %661 = vmatpush1.bf16.msra.mxu0 0
        %662 = vmatprep.subr.bf16.mxu0 0
        %663 = vmatpush1.bf16.msra.mxu0 0
        %664 = vmatprep.subr.bf16.mxu0 0
        %665 = vmatpush1.bf16.msra.mxu0 0
        %666 = vmatprep.subr.bf16.mxu0 0
        %667 = vmatpush1.bf16.msra.mxu0 0
        %668 = vmatprep.subr.bf16.mxu0 %v600
        %669 = vmatpush1.bf16.msra.mxu0 %v599
        %670 = vmatprep.subr.bf16.mxu0 %v596
        %671 = vmatpush1.bf16.msra.mxu0 %v595
        %672 = vmatprep.subr.bf16.mxu0 0
        %673 = vmatpush2.bf16.msra.mxu0 0
        %674 = vmatprep.subr.bf16.mxu0 0
        %675 = vmatpush2.bf16.msra.mxu0 0
        %676 = vmatprep.subr.bf16.mxu0 0
        %677 = vmatpush2.bf16.msra.mxu0 0
        %678 = vmatprep.subr.bf16.mxu0 0
        %679 = vmatpush2.bf16.msra.mxu0 0
        %680 = vmatprep.subr.bf16.mxu0 0
        %681 = vmatpush2.bf16.msra.mxu0 0
        %682 = vmatprep.subr.bf16.mxu0 0
        %683 = vmatpush2.bf16.msra.mxu0 0
        %684 = vmatprep.subr.bf16.mxu0 0
        %685 = vmatpush2.bf16.msra.mxu0 0
        %686 = vmatprep.subr.bf16.mxu0 0
        %687 = vmatpush2.bf16.msra.mxu0 0
        %688 = vmatprep.mubr.bf16.mxu0 0
        %689 = vmatmul.mubr.bf16.gmra.mxu0 %v611
        %v690 = vpop.f32.mrf.mxu0
        %v691 = vadd.f32 0.0, %v690
        %v692 = vpop.f32.mrf.mxu0
        %v693 = vadd.f32 0.0, %v692
        %v694 = vpop.f32.mrf.mxu0
        %v695 = vadd.f32 0.0, %v694
        %v696 = vpop.f32.mrf.mxu0
        %v697 = vadd.f32 0.0, %v696
        %698 = vdwg.mxu0
        %699 = vmatprep.subr.mxu0 0.0
        %700 = vmatpush1.msra.mxu0 %v497
        %701 = vmatprep.subr.mxu0 0.0
        %702 = vmatpush1.msra.mxu0 %v496
        %703 = vmatprep.subr.mxu0 0.0
        %704 = vmatpush1.msra.mxu0 %v495
        %705 = vmatprep.subr.mxu0 0.0
        %706 = vmatpush1.msra.mxu0 %v494
        %707 = vmatprep.subr.mxu0 0.0
        %708 = vmatpush1.msra.mxu0 %v493
        %709 = vmatprep.subr.mxu0 0.0
        %710 = vmatpush1.msra.mxu0 %v492
        %711 = vmatprep.subr.mxu0 0.0
        %712 = vmatpush1.msra.mxu0 %v491
        %713 = vmatprep.subr.mxu0 0.0
        %714 = vmatpush1.msra.mxu0 %v490
        %715 = vmatprep.subr.mxu0 0.0
        %716 = vmatpush1.msra.mxu0 %v489
        %717 = vmatprep.subr.mxu0 0.0
        %718 = vmatpush1.msra.mxu0 %v488
        %719 = vmatprep.subr.mxu0 0.0
        %720 = vmatpush1.msra.mxu0 %v487
        %721 = vmatprep.subr.mxu0 0.0
        %722 = vmatpush1.msra.mxu0 %v486
        %723 = vmatprep.subr.mxu0 0.0
        %724 = vmatpush1.msra.mxu0 %v485
        %725 = vmatprep.subr.mxu0 0.0
        %726 = vmatpush1.msra.mxu0 %v484
        %727 = vmatprep.subr.mxu0 0.0
        %728 = vmatpush1.msra.mxu0 %v483
        %729 = vmatprep.subr.mxu0 0.0
        %730 = vmatpush1.msra.mxu0 %v482
        %731 = vmatprep.subr.mxu0 0.0
        %732 = vmatpush2.msra.mxu0 %v513
        %733 = vmatprep.subr.mxu0 0.0
        %734 = vmatpush2.msra.mxu0 %v512
        %735 = vmatprep.subr.mxu0 0.0
        %736 = vmatpush2.msra.mxu0 %v511
        %737 = vmatprep.subr.mxu0 0.0
        %738 = vmatpush2.msra.mxu0 %v510
        %739 = vmatprep.subr.mxu0 0.0
        %740 = vmatpush2.msra.mxu0 %v509
        %741 = vmatprep.subr.mxu0 0.0
        %742 = vmatpush2.msra.mxu0 %v508
        %743 = vmatprep.subr.mxu0 0.0
        %744 = vmatpush2.msra.mxu0 %v507
        %745 = vmatprep.subr.mxu0 0.0
        %746 = vmatpush2.msra.mxu0 %v506
        %747 = vmatprep.subr.mxu0 0.0
        %748 = vmatpush2.msra.mxu0 %v505
        %749 = vmatprep.subr.mxu0 0.0
        %750 = vmatpush2.msra.mxu0 %v504
        %751 = vmatprep.subr.mxu0 0.0
        %752 = vmatpush2.msra.mxu0 %v503
        %753 = vmatprep.subr.mxu0 0.0
        %754 = vmatpush2.msra.mxu0 %v502
        %755 = vmatprep.subr.mxu0 0.0
        %756 = vmatpush2.msra.mxu0 %v501
        %757 = vmatprep.subr.mxu0 0.0
        %758 = vmatpush2.msra.mxu0 %v500
        %759 = vmatprep.subr.mxu0 0.0
        %760 = vmatpush2.msra.mxu0 %v499
        %761 = vmatprep.subr.mxu0 0.0
        %762 = vmatpush2.msra.mxu0 %v498
        %763 = vmatprep.mubr.f32.mxu0 %v650
        %764 = vmatmul.mubr.f32.gmra.mxu0 %v648
        %v765 = vpop.f32.mrf.mxu0
        %v766 = vadd.f32 0.0, %v765
        %v767 = vpop.f32.mrf.mxu0
        %768 = vmatprep.mubr.f32.mxu0 %v654
        %769 = vmatmul.mubr.f32.gmra.mxu0 %v652
        %v770 = vpop.f32.mrf.mxu0
        %v771 = vadd.f32 0.0, %v770
        %v772 = vpop.f32.mrf.mxu0
        %773 = vdwg.mxu0
        %774 = vmatprep.subr.mxu0 0.0
        %775 = vmatpush1.msra.mxu0 %v529
        %776 = vmatprep.subr.mxu0 0.0
        %777 = vmatpush1.msra.mxu0 %v528
        %778 = vmatprep.subr.mxu0 0.0
        %779 = vmatpush1.msra.mxu0 %v527
        %780 = vmatprep.subr.mxu0 0.0
        %781 = vmatpush1.msra.mxu0 %v526
        %782 = vmatprep.subr.mxu0 0.0
        %783 = vmatpush1.msra.mxu0 %v525
        %784 = vmatprep.subr.mxu0 0.0
        %785 = vmatpush1.msra.mxu0 %v524
        %786 = vmatprep.subr.mxu0 0.0
        %787 = vmatpush1.msra.mxu0 %v523
        %788 = vmatprep.subr.mxu0 0.0
        %789 = vmatpush1.msra.mxu0 %v522
        %790 = vmatprep.subr.mxu0 0.0
        %791 = vmatpush1.msra.mxu0 %v521
        %792 = vmatprep.subr.mxu0 0.0
        %793 = vmatpush1.msra.mxu0 %v520
        %794 = vmatprep.subr.mxu0 0.0
        %795 = vmatpush1.msra.mxu0 %v519
        %796 = vmatprep.subr.mxu0 0.0
        %797 = vmatpush1.msra.mxu0 %v518
        %798 = vmatprep.subr.mxu0 0.0
        %799 = vmatpush1.msra.mxu0 %v517
        %800 = vmatprep.subr.mxu0 0.0
        %801 = vmatpush1.msra.mxu0 %v516
        %802 = vmatprep.subr.mxu0 0.0
        %803 = vmatpush1.msra.mxu0 %v515
        %804 = vmatprep.subr.mxu0 0.0
        %805 = vmatpush1.msra.mxu0 %v514
        %806 = vmatprep.subr.mxu0 0.0
        %807 = vmatpush2.msra.mxu0 %v545
        %808 = vmatprep.subr.mxu0 0.0
        %809 = vmatpush2.msra.mxu0 %v544
        %810 = vmatprep.subr.mxu0 0.0
        %811 = vmatpush2.msra.mxu0 %v543
        %812 = vmatprep.subr.mxu0 0.0
        %813 = vmatpush2.msra.mxu0 %v542
        %814 = vmatprep.subr.mxu0 0.0
        %815 = vmatpush2.msra.mxu0 %v541
        %816 = vmatprep.subr.mxu0 0.0
        %817 = vmatpush2.msra.mxu0 %v540
        %818 = vmatprep.subr.mxu0 0.0
        %819 = vmatpush2.msra.mxu0 %v539
        %820 = vmatprep.subr.mxu0 0.0
        %821 = vmatpush2.msra.mxu0 %v538
        %822 = vmatprep.subr.mxu0 0.0
        %823 = vmatpush2.msra.mxu0 %v537
        %824 = vmatprep.subr.mxu0 0.0
        %825 = vmatpush2.msra.mxu0 %v536
        %826 = vmatprep.subr.mxu0 0.0
        %827 = vmatpush2.msra.mxu0 %v535
        %828 = vmatprep.subr.mxu0 0.0
        %829 = vmatpush2.msra.mxu0 %v534
        %830 = vmatprep.subr.mxu0 0.0
        %831 = vmatpush2.msra.mxu0 %v533
        %832 = vmatprep.subr.mxu0 0.0
        %833 = vmatpush2.msra.mxu0 %v532
        %834 = vmatprep.subr.mxu0 0.0
        %835 = vmatpush2.msra.mxu0 %v531
        %836 = vmatprep.subr.mxu0 0.0
        %837 = vmatpush2.msra.mxu0 %v530
        %838 = vmatprep.mubr.f32.mxu0 %v693
        %839 = vmatmul.mubr.f32.gmra.mxu0 %v691
        %v840 = vpop.f32.mrf.mxu0
        %v841 = vadd.f32 %v766, %v840
        %v842 = vpop.f32.mrf.mxu0
        %843 = vmatprep.mubr.f32.mxu0 %v697
        %844 = vmatmul.mubr.f32.gmra.mxu0 %v695
        %v845 = vpop.f32.mrf.mxu0
        %v846 = vadd.f32 %v771, %v845
        %v847 = vpop.f32.mrf.mxu0
        %848 = vdwg.mxu0
        %v849 = vmul.f32 %v841, 0.00390625
        %v850 = vmul.f32 %v846, 0.00390625
        %v851 = vmul.f32 %v648, %v648
        %v852 = vmul.f32 %v650, %v650
        %v853 = vmul.f32 %v691, %v691
        %v854 = vmul.f32 %v693, %v693
        %v855 = vmul.f32 %v652, %v652
        %v856 = vmul.f32 %v654, %v654
        %v857 = vmul.f32 %v695, %v695
        %v858 = vmul.f32 %v697, %v697
        %859 = vmatprep.subr.mxu0 0.0
        %860 = vmatpush1.msra.mxu0 %v497
        %861 = vmatprep.subr.mxu0 0.0
        %862 = vmatpush1.msra.mxu0 %v496
        %863 = vmatprep.subr.mxu0 0.0
        %864 = vmatpush1.msra.mxu0 %v495
        %865 = vmatprep.subr.mxu0 0.0
        %866 = vmatpush1.msra.mxu0 %v494
        %867 = vmatprep.subr.mxu0 0.0
        %868 = vmatpush1.msra.mxu0 %v493
        %869 = vmatprep.subr.mxu0 0.0
        %870 = vmatpush1.msra.mxu0 %v492
        %871 = vmatprep.subr.mxu0 0.0
        %872 = vmatpush1.msra.mxu0 %v491
        %873 = vmatprep.subr.mxu0 0.0
        %874 = vmatpush1.msra.mxu0 %v490
        %875 = vmatprep.subr.mxu0 0.0
        %876 = vmatpush1.msra.mxu0 %v489
        %877 = vmatprep.subr.mxu0 0.0
        %878 = vmatpush1.msra.mxu0 %v488
        %879 = vmatprep.subr.mxu0 0.0
        %880 = vmatpush1.msra.mxu0 %v487
        %881 = vmatprep.subr.mxu0 0.0
        %882 = vmatpush1.msra.mxu0 %v486
        %883 = vmatprep.subr.mxu0 0.0
        %884 = vmatpush1.msra.mxu0 %v485
        %885 = vmatprep.subr.mxu0 0.0
        %886 = vmatpush1.msra.mxu0 %v484
        %887 = vmatprep.subr.mxu0 0.0
        %888 = vmatpush1.msra.mxu0 %v483
        %889 = vmatprep.subr.mxu0 0.0
        %890 = vmatpush1.msra.mxu0 %v482
        %891 = vmatprep.subr.mxu0 0.0
        %892 = vmatpush2.msra.mxu0 %v513
        %893 = vmatprep.subr.mxu0 0.0
        %894 = vmatpush2.msra.mxu0 %v512
        %895 = vmatprep.subr.mxu0 0.0
        %896 = vmatpush2.msra.mxu0 %v511
        %897 = vmatprep.subr.mxu0 0.0
        %898 = vmatpush2.msra.mxu0 %v510
        %899 = vmatprep.subr.mxu0 0.0
        %900 = vmatpush2.msra.mxu0 %v509
        %901 = vmatprep.subr.mxu0 0.0
        %902 = vmatpush2.msra.mxu0 %v508
        %903 = vmatprep.subr.mxu0 0.0
        %904 = vmatpush2.msra.mxu0 %v507
        %905 = vmatprep.subr.mxu0 0.0
        %906 = vmatpush2.msra.mxu0 %v506
        %907 = vmatprep.subr.mxu0 0.0
        %908 = vmatpush2.msra.mxu0 %v505
        %909 = vmatprep.subr.mxu0 0.0
        %910 = vmatpush2.msra.mxu0 %v504
        %911 = vmatprep.subr.mxu0 0.0
        %912 = vmatpush2.msra.mxu0 %v503
        %913 = vmatprep.subr.mxu0 0.0
        %914 = vmatpush2.msra.mxu0 %v502
        %915 = vmatprep.subr.mxu0 0.0
        %916 = vmatpush2.msra.mxu0 %v501
        %917 = vmatprep.subr.mxu0 0.0
        %918 = vmatpush2.msra.mxu0 %v500
        %919 = vmatprep.subr.mxu0 0.0
        %920 = vmatpush2.msra.mxu0 %v499
        %921 = vmatprep.subr.mxu0 0.0
        %922 = vmatpush2.msra.mxu0 %v498
        %923 = vmatprep.mubr.f32.mxu0 %v852
        %924 = vmatmul.mubr.f32.gmra.mxu0 %v851
        %v925 = vpop.f32.mrf.mxu0
        %v926 = vadd.f32 0.0, %v925
        %v927 = vpop.f32.mrf.mxu0
        %928 = vmatprep.mubr.f32.mxu0 %v856
        %929 = vmatmul.mubr.f32.gmra.mxu0 %v855
        %v930 = vpop.f32.mrf.mxu0
        %v931 = vadd.f32 0.0, %v930
        %v932 = vpop.f32.mrf.mxu0
        %933 = vdwg.mxu0
        %934 = vmatprep.subr.mxu0 0.0
        %935 = vmatpush1.msra.mxu0 %v529
        %936 = vmatprep.subr.mxu0 0.0
        %937 = vmatpush1.msra.mxu0 %v528
        %938 = vmatprep.subr.mxu0 0.0
        %939 = vmatpush1.msra.mxu0 %v527
        %940 = vmatprep.subr.mxu0 0.0
        %941 = vmatpush1.msra.mxu0 %v526
        %942 = vmatprep.subr.mxu0 0.0
        %943 = vmatpush1.msra.mxu0 %v525
        %944 = vmatprep.subr.mxu0 0.0
        %945 = vmatpush1.msra.mxu0 %v524
        %946 = vmatprep.subr.mxu0 0.0
        %947 = vmatpush1.msra.mxu0 %v523
        %948 = vmatprep.subr.mxu0 0.0
        %949 = vmatpush1.msra.mxu0 %v522
        %950 = vmatprep.subr.mxu0 0.0
        %951 = vmatpush1.msra.mxu0 %v521
        %952 = vmatprep.subr.mxu0 0.0
        %953 = vmatpush1.msra.mxu0 %v520
        %954 = vmatprep.subr.mxu0 0.0
        %955 = vmatpush1.msra.mxu0 %v519
        %956 = vmatprep.subr.mxu0 0.0
        %957 = vmatpush1.msra.mxu0 %v518
        %958 = vmatprep.subr.mxu0 0.0
        %959 = vmatpush1.msra.mxu0 %v517
        %960 = vmatprep.subr.mxu0 0.0
        %961 = vmatpush1.msra.mxu0 %v516
        %962 = vmatprep.subr.mxu0 0.0
        %963 = vmatpush1.msra.mxu0 %v515
        %964 = vmatprep.subr.mxu0 0.0
        %965 = vmatpush1.msra.mxu0 %v514
        %966 = vmatprep.subr.mxu0 0.0
        %967 = vmatpush2.msra.mxu0 %v545
        %968 = vmatprep.subr.mxu0 0.0
        %969 = vmatpush2.msra.mxu0 %v544
        %970 = vmatprep.subr.mxu0 0.0
        %971 = vmatpush2.msra.mxu0 %v543
        %972 = vmatprep.subr.mxu0 0.0
        %973 = vmatpush2.msra.mxu0 %v542
        %974 = vmatprep.subr.mxu0 0.0
        %975 = vmatpush2.msra.mxu0 %v541
        %976 = vmatprep.subr.mxu0 0.0
        %977 = vmatpush2.msra.mxu0 %v540
        %978 = vmatprep.subr.mxu0 0.0
        %979 = vmatpush2.msra.mxu0 %v539
        %980 = vmatprep.subr.mxu0 0.0
        %981 = vmatpush2.msra.mxu0 %v538
        %982 = vmatprep.subr.mxu0 0.0
        %983 = vmatpush2.msra.mxu0 %v537
        %984 = vmatprep.subr.mxu0 0.0
        %985 = vmatpush2.msra.mxu0 %v536
        %986 = vmatprep.subr.mxu0 0.0
        %987 = vmatpush2.msra.mxu0 %v535
        %988 = vmatprep.subr.mxu0 0.0
        %989 = vmatpush2.msra.mxu0 %v534
        %990 = vmatprep.subr.mxu0 0.0
        %991 = vmatpush2.msra.mxu0 %v533
        %992 = vmatprep.subr.mxu0 0.0
        %993 = vmatpush2.msra.mxu0 %v532
        %994 = vmatprep.subr.mxu0 0.0
        %995 = vmatpush2.msra.mxu0 %v531
        %996 = vmatprep.subr.mxu0 0.0
        %997 = vmatpush2.msra.mxu0 %v530
        %998 = vmatprep.mubr.f32.mxu0 %v854
        %999 = vmatmul.mubr.f32.gmra.mxu0 %v853
        %v1000 = vpop.f32.mrf.mxu0
        %v1001 = vadd.f32 %v926, %v1000
        %v1002 = vpop.f32.mrf.mxu0
        %1003 = vmatprep.mubr.f32.mxu0 %v858
        %1004 = vmatmul.mubr.f32.gmra.mxu0 %v857
        %v1005 = vpop.f32.mrf.mxu0
        %v1006 = vadd.f32 %v931, %v1005
        %v1007 = vpop.f32.mrf.mxu0
        %1008 = vdwg.mxu0
        %v1009 = vmul.f32 %v1001, 0.00390625
        %v1010 = vmul.f32 %v1006, 0.00390625
        %v1011 = vmul.f32 %v849, %v849
        %v1012 = vmul.f32 %v850, %v850
        %v1013 = vsub.f32 %v1009, %v1011
        %v1014 = vsub.f32 %v1010, %v1012
        %v1015 = vadd.f32 %v1013, 1e-05
        %v1016 = vadd.f32 %v1014, 1e-05
        %v1017 = vrsqrt.pop %v1015
        %v1018 = vrsqrt.pop %v1016
        %1020 = vset.pattern.permute.xlu0 0
        %1021 = vperm.xlu0 %1020, %v558
        %v1022 = vpop.permute.xlu0 %1021
        %1025 = vset.pattern.permute.xlu0 0
        %1026 = vperm.xlu0 %1025, %v559
        %v1027 = vpop.permute.xlu0 %1026
        %v1029 = vmul.f32 %v1022, %v1017
        %v1030 = vmul.f32 %v1027, %v1018
        %v1031 = vmul.f32 %v1029, %v849
        %v1032 = vmul.f32 %v1030, %v850
        %1034 = vset.pattern.permute.xlu0 0
        %1035 = vperm.xlu0 %1034, %v560
        %v1036 = vpop.permute.xlu0 %1035
        %1039 = vset.pattern.permute.xlu0 0
        %1040 = vperm.xlu0 %1039, %v561
        %v1041 = vpop.permute.xlu0 %1040
        %v1043 = vsub.f32 %v1036, %v1031
        %v1044 = vsub.f32 %v1041, %v1032
        %vm1045 = vcmask 64512
        %v1047 = vsel %vm1045, %v1029, 0
        %v1050 = vsel %vm1045, %v1030, 0
        %1052 = vmatprep.subr.mxu0 0.0
        %1053 = vmatpush1.msra.mxu0 0.0
        %1054 = vmatprep.subr.mxu0 0.0
        %1055 = vmatpush1.msra.mxu0 0.0
        %1056 = vmatprep.subr.mxu0 0.0
        %1057 = vmatpush1.msra.mxu0 0.0
        %1058 = vmatprep.subr.mxu0 0.0
        %1059 = vmatpush1.msra.mxu0 0.0
        %1060 = vmatprep.subr.mxu0 0.0
        %1061 = vmatpush1.msra.mxu0 0.0
        %1062 = vmatprep.subr.mxu0 0.0
        %1063 = vmatpush1.msra.mxu0 0.0
        %1064 = vmatprep.subr.mxu0 0.0
        %1065 = vmatpush1.msra.mxu0 0.0
        %1066 = vmatprep.subr.mxu0 0.0
        %1067 = vmatpush1.msra.mxu0 0.0
        %1068 = vmatprep.subr.mxu0 0.0
        %1069 = vmatpush1.msra.mxu0 0.0
        %1070 = vmatprep.subr.mxu0 0.0
        %1071 = vmatpush1.msra.mxu0 0.0
        %1072 = vmatprep.subr.mxu0 0.0
        %1073 = vmatpush1.msra.mxu0 0.0
        %1074 = vmatprep.subr.mxu0 0.0
        %1075 = vmatpush1.msra.mxu0 0.0
        %1076 = vmatprep.subr.mxu0 0.0
        %1077 = vmatpush1.msra.mxu0 0.0
        %1078 = vmatprep.subr.mxu0 0.0
        %1079 = vmatpush1.msra.mxu0 0.0
        %1080 = vmatprep.subr.mxu0 0.0
        %1081 = vmatpush1.msra.mxu0 0.0
        %1082 = vmatprep.subr.mxu0 %v547
        %1083 = vmatpush1.msra.mxu0 %v546
        %1084 = vmatprep.subr.mxu0 0.0
        %1085 = vmatpush2.msra.mxu0 0.0
        %1086 = vmatprep.subr.mxu0 0.0
        %1087 = vmatpush2.msra.mxu0 0.0
        %1088 = vmatprep.subr.mxu0 0.0
        %1089 = vmatpush2.msra.mxu0 0.0
        %1090 = vmatprep.subr.mxu0 0.0
        %1091 = vmatpush2.msra.mxu0 0.0
        %1092 = vmatprep.subr.mxu0 0.0
        %1093 = vmatpush2.msra.mxu0 0.0
        %1094 = vmatprep.subr.mxu0 0.0
        %1095 = vmatpush2.msra.mxu0 0.0
        %1096 = vmatprep.subr.mxu0 0.0
        %1097 = vmatpush2.msra.mxu0 0.0
        %1098 = vmatprep.subr.mxu0 0.0
        %1099 = vmatpush2.msra.mxu0 0.0
        %1100 = vmatprep.subr.mxu0 0.0
        %1101 = vmatpush2.msra.mxu0 0.0
        %1102 = vmatprep.subr.mxu0 0.0
        %1103 = vmatpush2.msra.mxu0 0.0
        %1104 = vmatprep.subr.mxu0 0.0
        %1105 = vmatpush2.msra.mxu0 0.0
        %1106 = vmatprep.subr.mxu0 0.0
        %1107 = vmatpush2.msra.mxu0 0.0
        %1108 = vmatprep.subr.mxu0 0.0
        %1109 = vmatpush2.msra.mxu0 0.0
        %1110 = vmatprep.subr.mxu0 0.0
        %1111 = vmatpush2.msra.mxu0 0.0
        %1112 = vmatprep.subr.mxu0 0.0
        %1113 = vmatpush2.msra.mxu0 0.0
        %1114 = vmatprep.subr.mxu0 0.0
        %1115 = vmatpush2.msra.mxu0 0.0
        %1116 = vmatprep.mubr.f32.mxu0 0.0
        %1117 = vmatmul.mubr.f32.gmra.mxu0 %v1047
        %v1118 = vpop.f32.mrf.mxu0
        %v1119 = vadd.f32 0.0, %v1118
        %v1120 = vpop.f32.mrf.mxu0
        %v1121 = vadd.f32 0.0, %v1120
        %1122 = vmatprep.mubr.f32.mxu0 0.0
        %1123 = vmatmul.mubr.f32.gmra.mxu0 %v1050
        %v1124 = vpop.f32.mrf.mxu0
        %v1125 = vadd.f32 0.0, %v1124
        %v1126 = vpop.f32.mrf.mxu0
        %v1127 = vadd.f32 0.0, %v1126
        %1128 = vdwg.mxu0
        %1129 = vmatprep.subr.mxu0 0.0
        %1130 = vmatpush1.msra.mxu0 0.0
        %1131 = vmatprep.subr.mxu0 0.0
        %1132 = vmatpush1.msra.mxu0 0.0
        %1133 = vmatprep.subr.mxu0 0.0
        %1134 = vmatpush1.msra.mxu0 0.0
        %1135 = vmatprep.subr.mxu0 0.0
        %1136 = vmatpush1.msra.mxu0 0.0
        %1137 = vmatprep.subr.mxu0 0.0
        %1138 = vmatpush1.msra.mxu0 0.0
        %1139 = vmatprep.subr.mxu0 0.0
        %1140 = vmatpush1.msra.mxu0 0.0
        %1141 = vmatprep.subr.mxu0 0.0
        %1142 = vmatpush1.msra.mxu0 0.0
        %1143 = vmatprep.subr.mxu0 0.0
        %1144 = vmatpush1.msra.mxu0 0.0
        %1145 = vmatprep.subr.mxu0 0.0
        %1146 = vmatpush1.msra.mxu0 0.0
        %1147 = vmatprep.subr.mxu0 0.0
        %1148 = vmatpush1.msra.mxu0 0.0
        %1149 = vmatprep.subr.mxu0 0.0
        %1150 = vmatpush1.msra.mxu0 0.0
        %1151 = vmatprep.subr.mxu0 0.0
        %1152 = vmatpush1.msra.mxu0 0.0
        %1153 = vmatprep.subr.mxu0 0.0
        %1154 = vmatpush1.msra.mxu0 0.0
        %1155 = vmatprep.subr.mxu0 0.0
        %1156 = vmatpush1.msra.mxu0 0.0
        %1157 = vmatprep.subr.mxu0 0.0
        %1158 = vmatpush1.msra.mxu0 0.0
        %1159 = vmatprep.subr.mxu0 %v549
        %1160 = vmatpush1.msra.mxu0 %v548
        %1161 = vmatprep.subr.mxu0 0.0
        %1162 = vmatpush2.msra.mxu0 0.0
        %1163 = vmatprep.subr.mxu0 0.0
        %1164 = vmatpush2.msra.mxu0 0.0
        %1165 = vmatprep.subr.mxu0 0.0
        %1166 = vmatpush2.msra.mxu0 0.0
        %1167 = vmatprep.subr.mxu0 0.0
        %1168 = vmatpush2.msra.mxu0 0.0
        %1169 = vmatprep.subr.mxu0 0.0
        %1170 = vmatpush2.msra.mxu0 0.0
        %1171 = vmatprep.subr.mxu0 0.0
        %1172 = vmatpush2.msra.mxu0 0.0
        %1173 = vmatprep.subr.mxu0 0.0
        %1174 = vmatpush2.msra.mxu0 0.0
        %1175 = vmatprep.subr.mxu0 0.0
        %1176 = vmatpush2.msra.mxu0 0.0
        %1177 = vmatprep.subr.mxu0 0.0
        %1178 = vmatpush2.msra.mxu0 0.0
        %1179 = vmatprep.subr.mxu0 0.0
        %1180 = vmatpush2.msra.mxu0 0.0
        %1181 = vmatprep.subr.mxu0 0.0
        %1182 = vmatpush2.msra.mxu0 0.0
        %1183 = vmatprep.subr.mxu0 0.0
        %1184 = vmatpush2.msra.mxu0 0.0
        %1185 = vmatprep.subr.mxu0 0.0
        %1186 = vmatpush2.msra.mxu0 0.0
        %1187 = vmatprep.subr.mxu0 0.0
        %1188 = vmatpush2.msra.mxu0 0.0
        %1189 = vmatprep.subr.mxu0 0.0
        %1190 = vmatpush2.msra.mxu0 0.0
        %1191 = vmatprep.subr.mxu0 0.0
        %1192 = vmatpush2.msra.mxu0 0.0
        %1193 = vmatprep.mubr.f32.mxu0 0.0
        %1194 = vmatmul.mubr.f32.gmra.mxu0 %v1047
        %v1195 = vpop.f32.mrf.mxu0
        %v1196 = vadd.f32 0.0, %v1195
        %v1197 = vpop.f32.mrf.mxu0
        %v1198 = vadd.f32 0.0, %v1197
        %1199 = vmatprep.mubr.f32.mxu0 0.0
        %1200 = vmatmul.mubr.f32.gmra.mxu0 %v1050
        %v1201 = vpop.f32.mrf.mxu0
        %v1202 = vadd.f32 0.0, %v1201
        %v1203 = vpop.f32.mrf.mxu0
        %v1204 = vadd.f32 0.0, %v1203
        %1205 = vdwg.mxu0
        %v1206 = vmul.f32 %v648, %v1119
        %v1207 = vmul.f32 %v650, %v1121
        %v1208 = vmul.f32 %v691, %v1196
        %v1209 = vmul.f32 %v693, %v1198
        %v1210 = vmul.f32 %v652, %v1125
        %v1211 = vmul.f32 %v654, %v1127
        %v1212 = vmul.f32 %v695, %v1202
        %v1213 = vmul.f32 %v697, %v1204
        %v1215 = vsel %vm1045, %v1043, 0
        %v1218 = vsel %vm1045, %v1044, 0
        %1220 = vmatprep.subr.mxu0 0.0
        %1221 = vmatpush1.msra.mxu0 0.0
        %1222 = vmatprep.subr.mxu0 0.0
        %1223 = vmatpush1.msra.mxu0 0.0
        %1224 = vmatprep.subr.mxu0 0.0
        %1225 = vmatpush1.msra.mxu0 0.0
        %1226 = vmatprep.subr.mxu0 0.0
        %1227 = vmatpush1.msra.mxu0 0.0
        %1228 = vmatprep.subr.mxu0 0.0
        %1229 = vmatpush1.msra.mxu0 0.0
        %1230 = vmatprep.subr.mxu0 0.0
        %1231 = vmatpush1.msra.mxu0 0.0
        %1232 = vmatprep.subr.mxu0 0.0
        %1233 = vmatpush1.msra.mxu0 0.0
        %1234 = vmatprep.subr.mxu0 0.0
        %1235 = vmatpush1.msra.mxu0 0.0
        %1236 = vmatprep.subr.mxu0 0.0
        %1237 = vmatpush1.msra.mxu0 0.0
        %1238 = vmatprep.subr.mxu0 0.0
        %1239 = vmatpush1.msra.mxu0 0.0
        %1240 = vmatprep.subr.mxu0 0.0
        %1241 = vmatpush1.msra.mxu0 0.0
        %1242 = vmatprep.subr.mxu0 0.0
        %1243 = vmatpush1.msra.mxu0 0.0
        %1244 = vmatprep.subr.mxu0 0.0
        %1245 = vmatpush1.msra.mxu0 0.0
        %1246 = vmatprep.subr.mxu0 0.0
        %1247 = vmatpush1.msra.mxu0 0.0
        %1248 = vmatprep.subr.mxu0 0.0
        %1249 = vmatpush1.msra.mxu0 0.0
        %1250 = vmatprep.subr.mxu0 %v547
        %1251 = vmatpush1.msra.mxu0 %v546
        %1252 = vmatprep.subr.mxu0 0.0
        %1253 = vmatpush2.msra.mxu0 0.0
        %1254 = vmatprep.subr.mxu0 0.0
        %1255 = vmatpush2.msra.mxu0 0.0
        %1256 = vmatprep.subr.mxu0 0.0
        %1257 = vmatpush2.msra.mxu0 0.0
        %1258 = vmatprep.subr.mxu0 0.0
        %1259 = vmatpush2.msra.mxu0 0.0
        %1260 = vmatprep.subr.mxu0 0.0
        %1261 = vmatpush2.msra.mxu0 0.0
        %1262 = vmatprep.subr.mxu0 0.0
        %1263 = vmatpush2.msra.mxu0 0.0
        %1264 = vmatprep.subr.mxu0 0.0
        %1265 = vmatpush2.msra.mxu0 0.0
        %1266 = vmatprep.subr.mxu0 0.0
        %1267 = vmatpush2.msra.mxu0 0.0
        %1268 = vmatprep.subr.mxu0 0.0
        %1269 = vmatpush2.msra.mxu0 0.0
        %1270 = vmatprep.subr.mxu0 0.0
        %1271 = vmatpush2.msra.mxu0 0.0
        %1272 = vmatprep.subr.mxu0 0.0
        %1273 = vmatpush2.msra.mxu0 0.0
        %1274 = vmatprep.subr.mxu0 0.0
        %1275 = vmatpush2.msra.mxu0 0.0
        %1276 = vmatprep.subr.mxu0 0.0
        %1277 = vmatpush2.msra.mxu0 0.0
        %1278 = vmatprep.subr.mxu0 0.0
        %1279 = vmatpush2.msra.mxu0 0.0
        %1280 = vmatprep.subr.mxu0 0.0
        %1281 = vmatpush2.msra.mxu0 0.0
        %1282 = vmatprep.subr.mxu0 0.0
        %1283 = vmatpush2.msra.mxu0 0.0
        %1284 = vmatprep.mubr.f32.mxu0 0.0
        %1285 = vmatmul.mubr.f32.gmra.mxu0 %v1215
        %v1286 = vpop.f32.mrf.mxu0
        %v1287 = vadd.f32 0.0, %v1286
        %v1288 = vpop.f32.mrf.mxu0
        %v1289 = vadd.f32 0.0, %v1288
        %1290 = vmatprep.mubr.f32.mxu0 0.0
        %1291 = vmatmul.mubr.f32.gmra.mxu0 %v1218
        %v1292 = vpop.f32.mrf.mxu0
        %v1293 = vadd.f32 0.0, %v1292
        %v1294 = vpop.f32.mrf.mxu0
        %v1295 = vadd.f32 0.0, %v1294
        %1296 = vdwg.mxu0
        %1297 = vmatprep.subr.mxu0 0.0
        %1298 = vmatpush1.msra.mxu0 0.0
        %1299 = vmatprep.subr.mxu0 0.0
        %1300 = vmatpush1.msra.mxu0 0.0
        %1301 = vmatprep.subr.mxu0 0.0
        %1302 = vmatpush1.msra.mxu0 0.0
        %1303 = vmatprep.subr.mxu0 0.0
        %1304 = vmatpush1.msra.mxu0 0.0
        %1305 = vmatprep.subr.mxu0 0.0
        %1306 = vmatpush1.msra.mxu0 0.0
        %1307 = vmatprep.subr.mxu0 0.0
        %1308 = vmatpush1.msra.mxu0 0.0
        %1309 = vmatprep.subr.mxu0 0.0
        %1310 = vmatpush1.msra.mxu0 0.0
        %1311 = vmatprep.subr.mxu0 0.0
        %1312 = vmatpush1.msra.mxu0 0.0
        %1313 = vmatprep.subr.mxu0 0.0
        %1314 = vmatpush1.msra.mxu0 0.0
        %1315 = vmatprep.subr.mxu0 0.0
        %1316 = vmatpush1.msra.mxu0 0.0
        %1317 = vmatprep.subr.mxu0 0.0
        %1318 = vmatpush1.msra.mxu0 0.0
        %1319 = vmatprep.subr.mxu0 0.0
        %1320 = vmatpush1.msra.mxu0 0.0
        %1321 = vmatprep.subr.mxu0 0.0
        %1322 = vmatpush1.msra.mxu0 0.0
        %1323 = vmatprep.subr.mxu0 0.0
        %1324 = vmatpush1.msra.mxu0 0.0
        %1325 = vmatprep.subr.mxu0 0.0
        %1326 = vmatpush1.msra.mxu0 0.0
        %1327 = vmatprep.subr.mxu0 %v549
        %1328 = vmatpush1.msra.mxu0 %v548
        %1329 = vmatprep.subr.mxu0 0.0
        %1330 = vmatpush2.msra.mxu0 0.0
        %1331 = vmatprep.subr.mxu0 0.0
        %1332 = vmatpush2.msra.mxu0 0.0
        %1333 = vmatprep.subr.mxu0 0.0
        %1334 = vmatpush2.msra.mxu0 0.0
        %1335 = vmatprep.subr.mxu0 0.0
        %1336 = vmatpush2.msra.mxu0 0.0
        %1337 = vmatprep.subr.mxu0 0.0
        %1338 = vmatpush2.msra.mxu0 0.0
        %1339 = vmatprep.subr.mxu0 0.0
        %1340 = vmatpush2.msra.mxu0 0.0
        %1341 = vmatprep.subr.mxu0 0.0
        %1342 = vmatpush2.msra.mxu0 0.0
        %1343 = vmatprep.subr.mxu0 0.0
        %1344 = vmatpush2.msra.mxu0 0.0
        %1345 = vmatprep.subr.mxu0 0.0
        %1346 = vmatpush2.msra.mxu0 0.0
        %1347 = vmatprep.subr.mxu0 0.0
        %1348 = vmatpush2.msra.mxu0 0.0
        %1349 = vmatprep.subr.mxu0 0.0
        %1350 = vmatpush2.msra.mxu0 0.0
        %1351 = vmatprep.subr.mxu0 0.0
        %1352 = vmatpush2.msra.mxu0 0.0
        %1353 = vmatprep.subr.mxu0 0.0
        %1354 = vmatpush2.msra.mxu0 0.0
        %1355 = vmatprep.subr.mxu0 0.0
        %1356 = vmatpush2.msra.mxu0 0.0
        %1357 = vmatprep.subr.mxu0 0.0
        %1358 = vmatpush2.msra.mxu0 0.0
        %1359 = vmatprep.subr.mxu0 0.0
        %1360 = vmatpush2.msra.mxu0 0.0
        %1361 = vmatprep.mubr.f32.mxu0 0.0
        %1362 = vmatmul.mubr.f32.gmra.mxu0 %v1215
        %v1363 = vpop.f32.mrf.mxu0
        %v1364 = vadd.f32 0.0, %v1363
        %v1365 = vpop.f32.mrf.mxu0
        %v1366 = vadd.f32 0.0, %v1365
        %1367 = vmatprep.mubr.f32.mxu0 0.0
        %1368 = vmatmul.mubr.f32.gmra.mxu0 %v1218
        %v1369 = vpop.f32.mrf.mxu0
        %v1370 = vadd.f32 0.0, %v1369
        %v1371 = vpop.f32.mrf.mxu0
        %v1372 = vadd.f32 0.0, %v1371
        %1373 = vdwg.mxu0
        %v1374 = vadd.f32 %v1206, %v1287
        %v1375 = vadd.f32 %v1207, %v1289
        %v1376 = vadd.f32 %v1208, %v1364
        %v1377 = vadd.f32 %v1209, %v1366
        %v1378 = vadd.f32 %v1210, %v1293
        %v1379 = vadd.f32 %v1211, %v1295
        %v1380 = vadd.f32 %v1212, %v1370
        %v1381 = vadd.f32 %v1213, %v1372
        %v1382 = vmul.f32 %v1374, 0.5
        %v1383 = vmul.f32 %v1375, 0.5
        %v1384 = vmul.f32 %v1376, 0.5
        %v1385 = vmul.f32 %v1377, 0.5
        %v1386 = vmul.f32 %v1378, 0.5
        %v1387 = vmul.f32 %v1379, 0.5
        %v1388 = vmul.f32 %v1380, 0.5
        %v1389 = vmul.f32 %v1381, 0.5
        %v1390 = vmul.f32 %v1374, 0.70710677
        %v1391 = vmul.f32 %v1375, 0.70710677
        %v1392 = vmul.f32 %v1376, 0.70710677
        %v1393 = vmul.f32 %v1377, 0.70710677
        %v1394 = vmul.f32 %v1378, 0.70710677
        %v1395 = vmul.f32 %v1379, 0.70710677
        %v1396 = vmul.f32 %v1380, 0.70710677
        %v1397 = vmul.f32 %v1381, 0.70710677
        %v1398 = vand.u32 2147483647, %v1390
        %v1399 = vand.u32 2147483647, %v1391
        %v1400 = vand.u32 2147483647, %v1392
        %v1401 = vand.u32 2147483647, %v1393
        %v1402 = vand.u32 2147483647, %v1394
        %v1403 = vand.u32 2147483647, %v1395
        %v1404 = vand.u32 2147483647, %v1396
        %v1405 = vand.u32 2147483647, %v1397
        %v1406 = vmul.f32 %v1398, 0.3275911
        %v1407 = vmul.f32 %v1399, 0.3275911
        %v1408 = vmul.f32 %v1400, 0.3275911
        %v1409 = vmul.f32 %v1401, 0.3275911
        %v1410 = vmul.f32 %v1402, 0.3275911
        %v1411 = vmul.f32 %v1403, 0.3275911
        %v1412 = vmul.f32 %v1404, 0.3275911
        %v1413 = vmul.f32 %v1405, 0.3275911
        %v1414 = vadd.f32 %v1406, 1.0
        %v1415 = vadd.f32 %v1407, 1.0
        %v1416 = vadd.f32 %v1408, 1.0
        %v1417 = vadd.f32 %v1409, 1.0
        %v1418 = vadd.f32 %v1410, 1.0
        %v1419 = vadd.f32 %v1411, 1.0
        %v1420 = vadd.f32 %v1412, 1.0
        %v1421 = vadd.f32 %v1413, 1.0
        %v1422 = vrcp.pop %v1414
        %v1423 = vmul.f32 1.0, %v1422
        %v1424 = vrcp.pop %v1415
        %v1425 = vmul.f32 1.0, %v1424
        %v1426 = vrcp.pop %v1416
        %v1427 = vmul.f32 1.0, %v1426
        %v1428 = vrcp.pop %v1417
        %v1429 = vmul.f32 1.0, %v1428
        %v1430 = vrcp.pop %v1418
        %v1431 = vmul.f32 1.0, %v1430
        %v1432 = vrcp.pop %v1419
        %v1433 = vmul.f32 1.0, %v1432
        %v1434 = vrcp.pop %v1420
        %v1435 = vmul.f32 1.0, %v1434
        %v1436 = vrcp.pop %v1421
        %v1437 = vmul.f32 1.0, %v1436
        %v1438 = vmul.f32 %v1423, 1.0614054
        %v1439 = vmul.f32 %v1425, 1.0614054
        %v1440 = vmul.f32 %v1427, 1.0614054
        %v1441 = vmul.f32 %v1429, 1.0614054
        %v1442 = vmul.f32 %v1431, 1.0614054
        %v1443 = vmul.f32 %v1433, 1.0614054
        %v1444 = vmul.f32 %v1435, 1.0614054
        %v1445 = vmul.f32 %v1437, 1.0614054
        %v1446 = vadd.f32 %v1438, -1.4531521
        %v1447 = vadd.f32 %v1439, -1.4531521
        %v1448 = vadd.f32 %v1440, -1.4531521
        %v1449 = vadd.f32 %v1441, -1.4531521
        %v1450 = vadd.f32 %v1442, -1.4531521
        %v1451 = vadd.f32 %v1443, -1.4531521
        %v1452 = vadd.f32 %v1444, -1.4531521
        %v1453 = vadd.f32 %v1445, -1.4531521
        %v1454 = vmul.f32 %v1446, %v1423
        %v1455 = vmul.f32 %v1447, %v1425
        %v1456 = vmul.f32 %v1448, %v1427
        %v1457 = vmul.f32 %v1449, %v1429
        %v1458 = vmul.f32 %v1450, %v1431
        %v1459 = vmul.f32 %v1451, %v1433
        %v1460 = vmul.f32 %v1452, %v1435
        %v1461 = vmul.f32 %v1453, %v1437
        %v1462 = vadd.f32 %v1454, 1.4214138
        %v1463 = vadd.f32 %v1455, 1.4214138
        %v1464 = vadd.f32 %v1456, 1.4214138
        %v1465 = vadd.f32 %v1457, 1.4214138
        %v1466 = vadd.f32 %v1458, 1.4214138
        %v1467 = vadd.f32 %v1459, 1.4214138
        %v1468 = vadd.f32 %v1460, 1.4214138
        %v1469 = vadd.f32 %v1461, 1.4214138
        %v1470 = vmul.f32 %v1462, %v1423
        %v1471 = vmul.f32 %v1463, %v1425
        %v1472 = vmul.f32 %v1464, %v1427
        %v1473 = vmul.f32 %v1465, %v1429
        %v1474 = vmul.f32 %v1466, %v1431
        %v1475 = vmul.f32 %v1467, %v1433
        %v1476 = vmul.f32 %v1468, %v1435
        %v1477 = vmul.f32 %v1469, %v1437
        %v1478 = vadd.f32 %v1470, -0.28449672
        %v1479 = vadd.f32 %v1471, -0.28449672
        %v1480 = vadd.f32 %v1472, -0.28449672
        %v1481 = vadd.f32 %v1473, -0.28449672
        %v1482 = vadd.f32 %v1474, -0.28449672
        %v1483 = vadd.f32 %v1475, -0.28449672
        %v1484 = vadd.f32 %v1476, -0.28449672
        %v1485 = vadd.f32 %v1477, -0.28449672
        %v1486 = vmul.f32 %v1478, %v1423
        %v1487 = vmul.f32 %v1479, %v1425
        %v1488 = vmul.f32 %v1480, %v1427
        %v1489 = vmul.f32 %v1481, %v1429
        %v1490 = vmul.f32 %v1482, %v1431
        %v1491 = vmul.f32 %v1483, %v1433
        %v1492 = vmul.f32 %v1484, %v1435
        %v1493 = vmul.f32 %v1485, %v1437
        %v1494 = vadd.f32 %v1486, 0.2548296
        %v1495 = vadd.f32 %v1487, 0.2548296
        %v1496 = vadd.f32 %v1488, 0.2548296
        %v1497 = vadd.f32 %v1489, 0.2548296
        %v1498 = vadd.f32 %v1490, 0.2548296
        %v1499 = vadd.f32 %v1491, 0.2548296
        %v1500 = vadd.f32 %v1492, 0.2548296
        %v1501 = vadd.f32 %v1493, 0.2548296
        %v1502 = vmul.f32 %v1494, %v1423
        %v1503 = vmul.f32 %v1495, %v1425
        %v1504 = vmul.f32 %v1496, %v1427
        %v1505 = vmul.f32 %v1497, %v1429
        %v1506 = vmul.f32 %v1498, %v1431
        %v1507 = vmul.f32 %v1499, %v1433
        %v1508 = vmul.f32 %v1500, %v1435
        %v1509 = vmul.f32 %v1501, %v1437
        %v1510 = vsub.f32 0.0, %v1398
        %v1511 = vsub.f32 0.0, %v1399
        %v1512 = vsub.f32 0.0, %v1400
        %v1513 = vsub.f32 0.0, %v1401
        %v1514 = vsub.f32 0.0, %v1402
        %v1515 = vsub.f32 0.0, %v1403
        %v1516 = vsub.f32 0.0, %v1404
        %v1517 = vsub.f32 0.0, %v1405
        %v1518 = vmul.f32 %v1510, %v1398
        %v1519 = vmul.f32 %v1511, %v1399
        %v1520 = vmul.f32 %v1512, %v1400
        %v1521 = vmul.f32 %v1513, %v1401
        %v1522 = vmul.f32 %v1514, %v1402
        %v1523 = vmul.f32 %v1515, %v1403
        %v1524 = vmul.f32 %v1516, %v1404
        %v1525 = vmul.f32 %v1517, %v1405
        %v1526 = vmul.f32 %v1518, 1.442695
        %v1527 = vpow.pop %v1526
        %v1528 = vmul.f32 %v1519, 1.442695
        %v1529 = vpow.pop %v1528
        %v1530 = vmul.f32 %v1520, 1.442695
        %v1531 = vpow.pop %v1530
        %v1532 = vmul.f32 %v1521, 1.442695
        %v1533 = vpow.pop %v1532
        %v1534 = vmul.f32 %v1522, 1.442695
        %v1535 = vpow.pop %v1534
        %v1536 = vmul.f32 %v1523, 1.442695
        %v1537 = vpow.pop %v1536
        %v1538 = vmul.f32 %v1524, 1.442695
        %v1539 = vpow.pop %v1538
        %v1540 = vmul.f32 %v1525, 1.442695
        %v1541 = vpow.pop %v1540
        %v1542 = vmul.f32 %v1502, %v1527
        %v1543 = vmul.f32 %v1503, %v1529
        %v1544 = vmul.f32 %v1504, %v1531
        %v1545 = vmul.f32 %v1505, %v1533
        %v1546 = vmul.f32 %v1506, %v1535
        %v1547 = vmul.f32 %v1507, %v1537
        %v1548 = vmul.f32 %v1508, %v1539
        %v1549 = vmul.f32 %v1509, %v1541
        %v1550 = vsub.f32 1.0, %v1542
        %v1551 = vsub.f32 1.0, %v1543
        %v1552 = vsub.f32 1.0, %v1544
        %v1553 = vsub.f32 1.0, %v1545
        %v1554 = vsub.f32 1.0, %v1546
        %v1555 = vsub.f32 1.0, %v1547
        %v1556 = vsub.f32 1.0, %v1548
        %v1557 = vsub.f32 1.0, %v1549
        %vm1558 = vcmp.ge.f32.partialorder %v1390, 0.0
        %vm1559 = vcmp.ge.f32.partialorder %v1391, 0.0
        %vm1560 = vcmp.ge.f32.partialorder %v1392, 0.0
        %vm1561 = vcmp.ge.f32.partialorder %v1393, 0.0
        %vm1562 = vcmp.ge.f32.partialorder %v1394, 0.0
        %vm1563 = vcmp.ge.f32.partialorder %v1395, 0.0
        %vm1564 = vcmp.ge.f32.partialorder %v1396, 0.0
        %vm1565 = vcmp.ge.f32.partialorder %v1397, 0.0
        %v1566 = vsub.f32 0.0, %v1550
        %v1567 = vsub.f32 0.0, %v1551
        %v1568 = vsub.f32 0.0, %v1552
        %v1569 = vsub.f32 0.0, %v1553
        %v1570 = vsub.f32 0.0, %v1554
        %v1571 = vsub.f32 0.0, %v1555
        %v1572 = vsub.f32 0.0, %v1556
        %v1573 = vsub.f32 0.0, %v1557
        %v1574 = vsel %vm1558, %v1550, %v1566
        %v1575 = vsel %vm1559, %v1551, %v1567
        %v1576 = vsel %vm1560, %v1552, %v1568
        %v1577 = vsel %vm1561, %v1553, %v1569
        %v1578 = vsel %vm1562, %v1554, %v1570
        %v1579 = vsel %vm1563, %v1555, %v1571
        %v1580 = vsel %vm1564, %v1556, %v1572
        %v1581 = vsel %vm1565, %v1557, %v1573
        %v1582 = vadd.f32 %v1574, 1.0
        %v1583 = vadd.f32 %v1575, 1.0
        %v1584 = vadd.f32 %v1576, 1.0
        %v1585 = vadd.f32 %v1577, 1.0
        %v1586 = vadd.f32 %v1578, 1.0
        %v1587 = vadd.f32 %v1579, 1.0
        %v1588 = vadd.f32 %v1580, 1.0
        %v1589 = vadd.f32 %v1581, 1.0
        %v1590 = vmul.f32 %v1382, %v1582
        %v1591 = vmul.f32 %v1383, %v1583
        %v1592 = vmul.f32 %v1384, %v1584
        %v1593 = vmul.f32 %v1385, %v1585
        %v1594 = vmul.f32 %v1386, %v1586
        %v1595 = vmul.f32 %v1387, %v1587
        %v1596 = vmul.f32 %v1388, %v1588
        %v1597 = vmul.f32 %v1389, %v1589
        %v1598 = vld [vmem:[%s431] sm:$0xff]
        %v1599 = vld [vmem:[%s431 + $0x8] sm:$0xff]
        %v1600 = vld [vmem:[%s431 + $0x10] sm:$0xff]
        %v1601 = vld [vmem:[%s431 + $0x18] sm:$0xff]
        %v1602 = vunpack.c.l.bf16 %v1598
        %v1603 = vunpack.c.h.bf16 %v1598
        %v1604 = vunpack.c.l.bf16 %v1599
        %v1605 = vunpack.c.h.bf16 %v1599
        %v1606 = vunpack.c.l.bf16 %v1600
        %v1607 = vunpack.c.h.bf16 %v1600
        %v1608 = vunpack.c.l.bf16 %v1601
        %v1609 = vunpack.c.h.bf16 %v1601
        %v1610 = vadd.f32 %v1590, %v1602
        %v1611 = vadd.f32 %v1591, %v1603
        %v1612 = vadd.f32 %v1592, %v1604
        %v1613 = vadd.f32 %v1593, %v1605
        %v1614 = vadd.f32 %v1594, %v1606
        %v1615 = vadd.f32 %v1595, %v1607
        %v1616 = vadd.f32 %v1596, %v1608
        %v1617 = vadd.f32 %v1597, %v1609
        %v1618 = vld [vmem:[%s7 + $0x20] sm:$0xff]
        %v1619 = vld [vmem:[%s7 + $0x28] sm:$0xff]
        %v1620 = vld [vmem:[%s7 + $0x30] sm:$0xff]
        %v1621 = vld [vmem:[%s7 + $0x38] sm:$0xff]
        %v1622 = vld [vmem:[#allocation4] sm:$0xf]
        %v1623 = vld [vmem:[#allocation4 + $0x4] sm:$0xf]
        %v1624 = vpack.c.bf16 %v1614, %v1610
        %v1625 = vpack.c.bf16 %v1615, %v1611
        %v1626 = vpack.c.bf16 %v1616, %v1612
        %v1627 = vpack.c.bf16 %v1617, %v1613
        %v1630 = vunpack.c.l.b16 %v1622
        %v1631 = vunpack.c.l.b16 %v1623
        %v1632 = vpack.c.b16 %v1631, %v1630
        %vm1633 = vcmask 130048
        %v1635 = vsel %vm1633, %v1632, 0
        %1637 = vmatprep.subr.bf16.mxu0 0
        %1638 = vmatpush1.bf16.msra.mxu0 0
        %1639 = vmatprep.subr.bf16.mxu0 0
        %1640 = vmatpush1.bf16.msra.mxu0 0
        %1641 = vmatprep.subr.bf16.mxu0 0
        %1642 = vmatpush1.bf16.msra.mxu0 0
        %1643 = vmatprep.subr.bf16.mxu0 0
        %1644 = vmatpush1.bf16.msra.mxu0 0
        %1645 = vmatprep.subr.bf16.mxu0 0
        %1646 = vmatpush1.bf16.msra.mxu0 0
        %1647 = vmatprep.subr.bf16.mxu0 0
        %1648 = vmatpush1.bf16.msra.mxu0 0
        %1649 = vmatprep.subr.bf16.mxu0 0
        %1650 = vmatpush1.bf16.msra.mxu0 0
        %1651 = vmatprep.subr.bf16.mxu0 %v1625
        %1652 = vmatpush1.bf16.msra.mxu0 %v1624
        %1653 = vmatprep.subr.bf16.mxu0 0
        %1654 = vmatpush2.bf16.msra.mxu0 0
        %1655 = vmatprep.subr.bf16.mxu0 0
        %1656 = vmatpush2.bf16.msra.mxu0 0
        %1657 = vmatprep.subr.bf16.mxu0 0
        %1658 = vmatpush2.bf16.msra.mxu0 0
        %1659 = vmatprep.subr.bf16.mxu0 0
        %1660 = vmatpush2.bf16.msra.mxu0 0
        %1661 = vmatprep.subr.bf16.mxu0 0
        %1662 = vmatpush2.bf16.msra.mxu0 0
        %1663 = vmatprep.subr.bf16.mxu0 0
        %1664 = vmatpush2.bf16.msra.mxu0 0
        %1665 = vmatprep.subr.bf16.mxu0 0
        %1666 = vmatpush2.bf16.msra.mxu0 0
        %1667 = vmatprep.subr.bf16.mxu0 0
        %1668 = vmatpush2.bf16.msra.mxu0 0
        %1669 = vmatprep.mubr.bf16.mxu0 0
        %1670 = vmatmul.mubr.bf16.gmra.mxu0 %v1635
        %v1671 = vpop.f32.mrf.mxu0
        %v1672 = vadd.f32 0.0, %v1671
        %v1673 = vpop.f32.mrf.mxu0
        %v1674 = vadd.f32 0.0, %v1673
        %v1675 = vpop.f32.mrf.mxu0
        %v1676 = vadd.f32 0.0, %v1675
        %v1677 = vpop.f32.mrf.mxu0
        %v1678 = vadd.f32 0.0, %v1677
        %1679 = vdwg.mxu0
        %1680 = vmatprep.subr.bf16.mxu0 0
        %1681 = vmatpush1.bf16.msra.mxu0 0
        %1682 = vmatprep.subr.bf16.mxu0 0
        %1683 = vmatpush1.bf16.msra.mxu0 0
        %1684 = vmatprep.subr.bf16.mxu0 0
        %1685 = vmatpush1.bf16.msra.mxu0 0
        %1686 = vmatprep.subr.bf16.mxu0 0
        %1687 = vmatpush1.bf16.msra.mxu0 0
        %1688 = vmatprep.subr.bf16.mxu0 0
        %1689 = vmatpush1.bf16.msra.mxu0 0
        %1690 = vmatprep.subr.bf16.mxu0 0
        %1691 = vmatpush1.bf16.msra.mxu0 0
        %1692 = vmatprep.subr.bf16.mxu0 0
        %1693 = vmatpush1.bf16.msra.mxu0 0
        %1694 = vmatprep.subr.bf16.mxu0 %v1627
        %1695 = vmatpush1.bf16.msra.mxu0 %v1626
        %1696 = vmatprep.subr.bf16.mxu0 0
        %1697 = vmatpush2.bf16.msra.mxu0 0
        %1698 = vmatprep.subr.bf16.mxu0 0
        %1699 = vmatpush2.bf16.msra.mxu0 0
        %1700 = vmatprep.subr.bf16.mxu0 0
        %1701 = vmatpush2.bf16.msra.mxu0 0
        %1702 = vmatprep.subr.bf16.mxu0 0
        %1703 = vmatpush2.bf16.msra.mxu0 0
        %1704 = vmatprep.subr.bf16.mxu0 0
        %1705 = vmatpush2.bf16.msra.mxu0 0
        %1706 = vmatprep.subr.bf16.mxu0 0
        %1707 = vmatpush2.bf16.msra.mxu0 0
        %1708 = vmatprep.subr.bf16.mxu0 0
        %1709 = vmatpush2.bf16.msra.mxu0 0
        %1710 = vmatprep.subr.bf16.mxu0 0
        %1711 = vmatpush2.bf16.msra.mxu0 0
        %1712 = vmatprep.mubr.bf16.mxu0 0
        %1713 = vmatmul.mubr.bf16.gmra.mxu0 %v1635
        %v1714 = vpop.f32.mrf.mxu0
        %v1715 = vadd.f32 0.0, %v1714
        %v1716 = vpop.f32.mrf.mxu0
        %v1717 = vadd.f32 0.0, %v1716
        %v1718 = vpop.f32.mrf.mxu0
        %v1719 = vadd.f32 0.0, %v1718
        %v1720 = vpop.f32.mrf.mxu0
        %v1721 = vadd.f32 0.0, %v1720
        %1722 = vdwg.mxu0
        %1723 = vmatprep.subr.mxu0 0.0
        %1724 = vmatpush1.msra.mxu0 %v497
        %1725 = vmatprep.subr.mxu0 0.0
        %1726 = vmatpush1.msra.mxu0 %v496
        %1727 = vmatprep.subr.mxu0 0.0
        %1728 = vmatpush1.msra.mxu0 %v495
        %1729 = vmatprep.subr.mxu0 0.0
        %1730 = vmatpush1.msra.mxu0 %v494
        %1731 = vmatprep.subr.mxu0 0.0
        %1732 = vmatpush1.msra.mxu0 %v493
        %1733 = vmatprep.subr.mxu0 0.0
        %1734 = vmatpush1.msra.mxu0 %v492
        %1735 = vmatprep.subr.mxu0 0.0
        %1736 = vmatpush1.msra.mxu0 %v491
        %1737 = vmatprep.subr.mxu0 0.0
        %1738 = vmatpush1.msra.mxu0 %v490
        %1739 = vmatprep.subr.mxu0 0.0
        %1740 = vmatpush1.msra.mxu0 %v489
        %1741 = vmatprep.subr.mxu0 0.0
        %1742 = vmatpush1.msra.mxu0 %v488
        %1743 = vmatprep.subr.mxu0 0.0
        %1744 = vmatpush1.msra.mxu0 %v487
        %1745 = vmatprep.subr.mxu0 0.0
        %1746 = vmatpush1.msra.mxu0 %v486
        %1747 = vmatprep.subr.mxu0 0.0
        %1748 = vmatpush1.msra.mxu0 %v485
        %1749 = vmatprep.subr.mxu0 0.0
        %1750 = vmatpush1.msra.mxu0 %v484
        %1751 = vmatprep.subr.mxu0 0.0
        %1752 = vmatpush1.msra.mxu0 %v483
        %1753 = vmatprep.subr.mxu0 0.0
        %1754 = vmatpush1.msra.mxu0 %v482
        %1755 = vmatprep.subr.mxu0 0.0
        %1756 = vmatpush2.msra.mxu0 %v513
        %1757 = vmatprep.subr.mxu0 0.0
        %1758 = vmatpush2.msra.mxu0 %v512
        %1759 = vmatprep.subr.mxu0 0.0
        %1760 = vmatpush2.msra.mxu0 %v511
        %1761 = vmatprep.subr.mxu0 0.0
        %1762 = vmatpush2.msra.mxu0 %v510
        %1763 = vmatprep.subr.mxu0 0.0
        %1764 = vmatpush2.msra.mxu0 %v509
        %1765 = vmatprep.subr.mxu0 0.0
        %1766 = vmatpush2.msra.mxu0 %v508
        %1767 = vmatprep.subr.mxu0 0.0
        %1768 = vmatpush2.msra.mxu0 %v507
        %1769 = vmatprep.subr.mxu0 0.0
        %1770 = vmatpush2.msra.mxu0 %v506
        %1771 = vmatprep.subr.mxu0 0.0
        %1772 = vmatpush2.msra.mxu0 %v505
        %1773 = vmatprep.subr.mxu0 0.0
        %1774 = vmatpush2.msra.mxu0 %v504
        %1775 = vmatprep.subr.mxu0 0.0
        %1776 = vmatpush2.msra.mxu0 %v503
        %1777 = vmatprep.subr.mxu0 0.0
        %1778 = vmatpush2.msra.mxu0 %v502
        %1779 = vmatprep.subr.mxu0 0.0
        %1780 = vmatpush2.msra.mxu0 %v501
        %1781 = vmatprep.subr.mxu0 0.0
        %1782 = vmatpush2.msra.mxu0 %v500
        %1783 = vmatprep.subr.mxu0 0.0
        %1784 = vmatpush2.msra.mxu0 %v499
        %1785 = vmatprep.subr.mxu0 0.0
        %1786 = vmatpush2.msra.mxu0 %v498
        %1787 = vmatprep.mubr.f32.mxu0 %v1674
        %1788 = vmatmul.mubr.f32.gmra.mxu0 %v1672
        %v1789 = vpop.f32.mrf.mxu0
        %v1790 = vadd.f32 0.0, %v1789
        %v1791 = vpop.f32.mrf.mxu0
        %1792 = vmatprep.mubr.f32.mxu0 %v1678
        %1793 = vmatmul.mubr.f32.gmra.mxu0 %v1676
        %v1794 = vpop.f32.mrf.mxu0
        %v1795 = vadd.f32 0.0, %v1794
        %v1796 = vpop.f32.mrf.mxu0
        %1797 = vdwg.mxu0
        %1798 = vmatprep.subr.mxu0 0.0
        %1799 = vmatpush1.msra.mxu0 %v529
        %1800 = vmatprep.subr.mxu0 0.0
        %1801 = vmatpush1.msra.mxu0 %v528
        %1802 = vmatprep.subr.mxu0 0.0
        %1803 = vmatpush1.msra.mxu0 %v527
        %1804 = vmatprep.subr.mxu0 0.0
        %1805 = vmatpush1.msra.mxu0 %v526
        %1806 = vmatprep.subr.mxu0 0.0
        %1807 = vmatpush1.msra.mxu0 %v525
        %1808 = vmatprep.subr.mxu0 0.0
        %1809 = vmatpush1.msra.mxu0 %v524
        %1810 = vmatprep.subr.mxu0 0.0
        %1811 = vmatpush1.msra.mxu0 %v523
        %1812 = vmatprep.subr.mxu0 0.0
        %1813 = vmatpush1.msra.mxu0 %v522
        %1814 = vmatprep.subr.mxu0 0.0
        %1815 = vmatpush1.msra.mxu0 %v521
        %1816 = vmatprep.subr.mxu0 0.0
        %1817 = vmatpush1.msra.mxu0 %v520
        %1818 = vmatprep.subr.mxu0 0.0
        %1819 = vmatpush1.msra.mxu0 %v519
        %1820 = vmatprep.subr.mxu0 0.0
        %1821 = vmatpush1.msra.mxu0 %v518
        %1822 = vmatprep.subr.mxu0 0.0
        %1823 = vmatpush1.msra.mxu0 %v517
        %1824 = vmatprep.subr.mxu0 0.0
        %1825 = vmatpush1.msra.mxu0 %v516
        %1826 = vmatprep.subr.mxu0 0.0
        %1827 = vmatpush1.msra.mxu0 %v515
        %1828 = vmatprep.subr.mxu0 0.0
        %1829 = vmatpush1.msra.mxu0 %v514
        %1830 = vmatprep.subr.mxu0 0.0
        %1831 = vmatpush2.msra.mxu0 %v545
        %1832 = vmatprep.subr.mxu0 0.0
        %1833 = vmatpush2.msra.mxu0 %v544
        %1834 = vmatprep.subr.mxu0 0.0
        %1835 = vmatpush2.msra.mxu0 %v543
        %1836 = vmatprep.subr.mxu0 0.0
        %1837 = vmatpush2.msra.mxu0 %v542
        %1838 = vmatprep.subr.mxu0 0.0
        %1839 = vmatpush2.msra.mxu0 %v541
        %1840 = vmatprep.subr.mxu0 0.0
        %1841 = vmatpush2.msra.mxu0 %v540
        %1842 = vmatprep.subr.mxu0 0.0
        %1843 = vmatpush2.msra.mxu0 %v539
        %1844 = vmatprep.subr.mxu0 0.0
        %1845 = vmatpush2.msra.mxu0 %v538
        %1846 = vmatprep.subr.mxu0 0.0
        %1847 = vmatpush2.msra.mxu0 %v537
        %1848 = vmatprep.subr.mxu0 0.0
        %1849 = vmatpush2.msra.mxu0 %v536
        %1850 = vmatprep.subr.mxu0 0.0
        %1851 = vmatpush2.msra.mxu0 %v535
        %1852 = vmatprep.subr.mxu0 0.0
        %1853 = vmatpush2.msra.mxu0 %v534
        %1854 = vmatprep.subr.mxu0 0.0
        %1855 = vmatpush2.msra.mxu0 %v533
        %1856 = vmatprep.subr.mxu0 0.0
        %1857 = vmatpush2.msra.mxu0 %v532
        %1858 = vmatprep.subr.mxu0 0.0
        %1859 = vmatpush2.msra.mxu0 %v531
        %1860 = vmatprep.subr.mxu0 0.0
        %1861 = vmatpush2.msra.mxu0 %v530
        %1862 = vmatprep.mubr.f32.mxu0 %v1717
        %1863 = vmatmul.mubr.f32.gmra.mxu0 %v1715
        %v1864 = vpop.f32.mrf.mxu0
        %v1865 = vadd.f32 %v1790, %v1864
        %v1866 = vpop.f32.mrf.mxu0
        %1867 = vmatprep.mubr.f32.mxu0 %v1721
        %1868 = vmatmul.mubr.f32.gmra.mxu0 %v1719
        %v1869 = vpop.f32.mrf.mxu0
        %v1870 = vadd.f32 %v1795, %v1869
        %v1871 = vpop.f32.mrf.mxu0
        %1872 = vdwg.mxu0
        %v1873 = vmul.f32 %v1865, 0.00390625
        %v1874 = vmul.f32 %v1870, 0.00390625
        %v1875 = vmul.f32 %v1672, %v1672
        %v1876 = vmul.f32 %v1674, %v1674
        %v1877 = vmul.f32 %v1715, %v1715
        %v1878 = vmul.f32 %v1717, %v1717
        %v1879 = vmul.f32 %v1676, %v1676
        %v1880 = vmul.f32 %v1678, %v1678
        %v1881 = vmul.f32 %v1719, %v1719
        %v1882 = vmul.f32 %v1721, %v1721
        %1883 = vmatprep.subr.mxu0 0.0
        %1884 = vmatpush1.msra.mxu0 %v497
        %1885 = vmatprep.subr.mxu0 0.0
        %1886 = vmatpush1.msra.mxu0 %v496
        %1887 = vmatprep.subr.mxu0 0.0
        %1888 = vmatpush1.msra.mxu0 %v495
        %1889 = vmatprep.subr.mxu0 0.0
        %1890 = vmatpush1.msra.mxu0 %v494
        %1891 = vmatprep.subr.mxu0 0.0
        %1892 = vmatpush1.msra.mxu0 %v493
        %1893 = vmatprep.subr.mxu0 0.0
        %1894 = vmatpush1.msra.mxu0 %v492
        %1895 = vmatprep.subr.mxu0 0.0
        %1896 = vmatpush1.msra.mxu0 %v491
        %1897 = vmatprep.subr.mxu0 0.0
        %1898 = vmatpush1.msra.mxu0 %v490
        %1899 = vmatprep.subr.mxu0 0.0
        %1900 = vmatpush1.msra.mxu0 %v489
        %1901 = vmatprep.subr.mxu0 0.0
        %1902 = vmatpush1.msra.mxu0 %v488
        %1903 = vmatprep.subr.mxu0 0.0
        %1904 = vmatpush1.msra.mxu0 %v487
        %1905 = vmatprep.subr.mxu0 0.0
        %1906 = vmatpush1.msra.mxu0 %v486
        %1907 = vmatprep.subr.mxu0 0.0
        %1908 = vmatpush1.msra.mxu0 %v485
        %1909 = vmatprep.subr.mxu0 0.0
        %1910 = vmatpush1.msra.mxu0 %v484
        %1911 = vmatprep.subr.mxu0 0.0
        %1912 = vmatpush1.msra.mxu0 %v483
        %1913 = vmatprep.subr.mxu0 0.0
        %1914 = vmatpush1.msra.mxu0 %v482
        %1915 = vmatprep.subr.mxu0 0.0
        %1916 = vmatpush2.msra.mxu0 %v513
        %1917 = vmatprep.subr.mxu0 0.0
        %1918 = vmatpush2.msra.mxu0 %v512
        %1919 = vmatprep.subr.mxu0 0.0
        %1920 = vmatpush2.msra.mxu0 %v511
        %1921 = vmatprep.subr.mxu0 0.0
        %1922 = vmatpush2.msra.mxu0 %v510
        %1923 = vmatprep.subr.mxu0 0.0
        %1924 = vmatpush2.msra.mxu0 %v509
        %1925 = vmatprep.subr.mxu0 0.0
        %1926 = vmatpush2.msra.mxu0 %v508
        %1927 = vmatprep.subr.mxu0 0.0
        %1928 = vmatpush2.msra.mxu0 %v507
        %1929 = vmatprep.subr.mxu0 0.0
        %1930 = vmatpush2.msra.mxu0 %v506
        %1931 = vmatprep.subr.mxu0 0.0
        %1932 = vmatpush2.msra.mxu0 %v505
        %1933 = vmatprep.subr.mxu0 0.0
        %1934 = vmatpush2.msra.mxu0 %v504
        %1935 = vmatprep.subr.mxu0 0.0
        %1936 = vmatpush2.msra.mxu0 %v503
        %1937 = vmatprep.subr.mxu0 0.0
        %1938 = vmatpush2.msra.mxu0 %v502
        %1939 = vmatprep.subr.mxu0 0.0
        %1940 = vmatpush2.msra.mxu0 %v501
        %1941 = vmatprep.subr.mxu0 0.0
        %1942 = vmatpush2.msra.mxu0 %v500
        %1943 = vmatprep.subr.mxu0 0.0
        %1944 = vmatpush2.msra.mxu0 %v499
        %1945 = vmatprep.subr.mxu0 0.0
        %1946 = vmatpush2.msra.mxu0 %v498
        %1947 = vmatprep.mubr.f32.mxu0 %v1876
        %1948 = vmatmul.mubr.f32.gmra.mxu0 %v1875
        %v1949 = vpop.f32.mrf.mxu0
        %v1950 = vadd.f32 0.0, %v1949
        %v1951 = vpop.f32.mrf.mxu0
        %1952 = vmatprep.mubr.f32.mxu0 %v1880
        %1953 = vmatmul.mubr.f32.gmra.mxu0 %v1879
        %v1954 = vpop.f32.mrf.mxu0
        %v1955 = vadd.f32 0.0, %v1954
        %v1956 = vpop.f32.mrf.mxu0
        %1957 = vdwg.mxu0
        %1958 = vmatprep.subr.mxu0 0.0
        %1959 = vmatpush1.msra.mxu0 %v529
        %1960 = vmatprep.subr.mxu0 0.0
        %1961 = vmatpush1.msra.mxu0 %v528
        %1962 = vmatprep.subr.mxu0 0.0
        %1963 = vmatpush1.msra.mxu0 %v527
        %1964 = vmatprep.subr.mxu0 0.0
        %1965 = vmatpush1.msra.mxu0 %v526
        %1966 = vmatprep.subr.mxu0 0.0
        %1967 = vmatpush1.msra.mxu0 %v525
        %1968 = vmatprep.subr.mxu0 0.0
        %1969 = vmatpush1.msra.mxu0 %v524
        %1970 = vmatprep.subr.mxu0 0.0
        %1971 = vmatpush1.msra.mxu0 %v523
        %1972 = vmatprep.subr.mxu0 0.0
        %1973 = vmatpush1.msra.mxu0 %v522
        %1974 = vmatprep.subr.mxu0 0.0
        %1975 = vmatpush1.msra.mxu0 %v521
        %1976 = vmatprep.subr.mxu0 0.0
        %1977 = vmatpush1.msra.mxu0 %v520
        %1978 = vmatprep.subr.mxu0 0.0
        %1979 = vmatpush1.msra.mxu0 %v519
        %1980 = vmatprep.subr.mxu0 0.0
        %1981 = vmatpush1.msra.mxu0 %v518
        %1982 = vmatprep.subr.mxu0 0.0
        %1983 = vmatpush1.msra.mxu0 %v517
        %1984 = vmatprep.subr.mxu0 0.0
        %1985 = vmatpush1.msra.mxu0 %v516
        %1986 = vmatprep.subr.mxu0 0.0
        %1987 = vmatpush1.msra.mxu0 %v515
        %1988 = vmatprep.subr.mxu0 0.0
        %1989 = vmatpush1.msra.mxu0 %v514
        %1990 = vmatprep.subr.mxu0 0.0
        %1991 = vmatpush2.msra.mxu0 %v545
        %1992 = vmatprep.subr.mxu0 0.0
        %1993 = vmatpush2.msra.mxu0 %v544
        %1994 = vmatprep.subr.mxu0 0.0
        %1995 = vmatpush2.msra.mxu0 %v543
        %1996 = vmatprep.subr.mxu0 0.0
        %1997 = vmatpush2.msra.mxu0 %v542
        %1998 = vmatprep.subr.mxu0 0.0
        %1999 = vmatpush2.msra.mxu0 %v541
        %2000 = vmatprep.subr.mxu0 0.0
        %2001 = vmatpush2.msra.mxu0 %v540
        %2002 = vmatprep.subr.mxu0 0.0
        %2003 = vmatpush2.msra.mxu0 %v539
        %2004 = vmatprep.subr.mxu0 0.0
        %2005 = vmatpush2.msra.mxu0 %v538
        %2006 = vmatprep.subr.mxu0 0.0
        %2007 = vmatpush2.msra.mxu0 %v537
        %2008 = vmatprep.subr.mxu0 0.0
        %2009 = vmatpush2.msra.mxu0 %v536
        %2010 = vmatprep.subr.mxu0 0.0
        %2011 = vmatpush2.msra.mxu0 %v535
        %2012 = vmatprep.subr.mxu0 0.0
        %2013 = vmatpush2.msra.mxu0 %v534
        %2014 = vmatprep.subr.mxu0 0.0
        %2015 = vmatpush2.msra.mxu0 %v533
        %2016 = vmatprep.subr.mxu0 0.0
        %2017 = vmatpush2.msra.mxu0 %v532
        %2018 = vmatprep.subr.mxu0 0.0
        %2019 = vmatpush2.msra.mxu0 %v531
        %2020 = vmatprep.subr.mxu0 0.0
        %2021 = vmatpush2.msra.mxu0 %v530
        %2022 = vmatprep.mubr.f32.mxu0 %v1878
        %2023 = vmatmul.mubr.f32.gmra.mxu0 %v1877
        %v2024 = vpop.f32.mrf.mxu0
        %v2025 = vadd.f32 %v1950, %v2024
        %v2026 = vpop.f32.mrf.mxu0
        %2027 = vmatprep.mubr.f32.mxu0 %v1882
        %2028 = vmatmul.mubr.f32.gmra.mxu0 %v1881
        %v2029 = vpop.f32.mrf.mxu0
        %v2030 = vadd.f32 %v1955, %v2029
        %v2031 = vpop.f32.mrf.mxu0
        %2032 = vdwg.mxu0
        %v2033 = vmul.f32 %v2025, 0.00390625
        %v2034 = vmul.f32 %v2030, 0.00390625
        %v2035 = vmul.f32 %v1873, %v1873
        %v2036 = vmul.f32 %v1874, %v1874
        %v2037 = vsub.f32 %v2033, %v2035
        %v2038 = vsub.f32 %v2034, %v2036
        %v2039 = vadd.f32 %v2037, 1e-05
        %v2040 = vadd.f32 %v2038, 1e-05
        %v2041 = vrsqrt.pop %v2039
        %v2042 = vrsqrt.pop %v2040
        %2044 = vset.pattern.permute.xlu0 0
        %2045 = vperm.xlu0 %2044, %v1618
        %v2046 = vpop.permute.xlu0 %2045
        %2049 = vset.pattern.permute.xlu0 0
        %2050 = vperm.xlu0 %2049, %v1619
        %v2051 = vpop.permute.xlu0 %2050
        %v2053 = vmul.f32 %v2046, %v2041
        %v2054 = vmul.f32 %v2051, %v2042
        %v2055 = vmul.f32 %v2053, %v1873
        %v2056 = vmul.f32 %v2054, %v1874
        %2058 = vset.pattern.permute.xlu0 0
        %2059 = vperm.xlu0 %2058, %v1620
        %v2060 = vpop.permute.xlu0 %2059
        %2063 = vset.pattern.permute.xlu0 0
        %2064 = vperm.xlu0 %2063, %v1621
        %v2065 = vpop.permute.xlu0 %2064
        %v2067 = vsub.f32 %v2060, %v2055
        %v2068 = vsub.f32 %v2065, %v2056
        %v2070 = vsel %vm1045, %v2053, 0
        %v2073 = vsel %vm1045, %v2054, 0
        %2075 = vmatprep.subr.mxu0 0.0
        %2076 = vmatpush1.msra.mxu0 0.0
        %2077 = vmatprep.subr.mxu0 0.0
        %2078 = vmatpush1.msra.mxu0 0.0
        %2079 = vmatprep.subr.mxu0 0.0
        %2080 = vmatpush1.msra.mxu0 0.0
        %2081 = vmatprep.subr.mxu0 0.0
        %2082 = vmatpush1.msra.mxu0 0.0
        %2083 = vmatprep.subr.mxu0 0.0
        %2084 = vmatpush1.msra.mxu0 0.0
        %2085 = vmatprep.subr.mxu0 0.0
        %2086 = vmatpush1.msra.mxu0 0.0
        %2087 = vmatprep.subr.mxu0 0.0
        %2088 = vmatpush1.msra.mxu0 0.0
        %2089 = vmatprep.subr.mxu0 0.0
        %2090 = vmatpush1.msra.mxu0 0.0
        %2091 = vmatprep.subr.mxu0 0.0
        %2092 = vmatpush1.msra.mxu0 0.0
        %2093 = vmatprep.subr.mxu0 0.0
        %2094 = vmatpush1.msra.mxu0 0.0
        %2095 = vmatprep.subr.mxu0 0.0
        %2096 = vmatpush1.msra.mxu0 0.0
        %2097 = vmatprep.subr.mxu0 0.0
        %2098 = vmatpush1.msra.mxu0 0.0
        %2099 = vmatprep.subr.mxu0 0.0
        %2100 = vmatpush1.msra.mxu0 0.0
        %2101 = vmatprep.subr.mxu0 0.0
        %2102 = vmatpush1.msra.mxu0 0.0
        %2103 = vmatprep.subr.mxu0 0.0
        %2104 = vmatpush1.msra.mxu0 0.0
        %2105 = vmatprep.subr.mxu0 %v547
        %2106 = vmatpush1.msra.mxu0 %v546
        %2107 = vmatprep.subr.mxu0 0.0
        %2108 = vmatpush2.msra.mxu0 0.0
        %2109 = vmatprep.subr.mxu0 0.0
        %2110 = vmatpush2.msra.mxu0 0.0
        %2111 = vmatprep.subr.mxu0 0.0
        %2112 = vmatpush2.msra.mxu0 0.0
        %2113 = vmatprep.subr.mxu0 0.0
        %2114 = vmatpush2.msra.mxu0 0.0
        %2115 = vmatprep.subr.mxu0 0.0
        %2116 = vmatpush2.msra.mxu0 0.0
        %2117 = vmatprep.subr.mxu0 0.0
        %2118 = vmatpush2.msra.mxu0 0.0
        %2119 = vmatprep.subr.mxu0 0.0
        %2120 = vmatpush2.msra.mxu0 0.0
        %2121 = vmatprep.subr.mxu0 0.0
        %2122 = vmatpush2.msra.mxu0 0.0
        %2123 = vmatprep.subr.mxu0 0.0
        %2124 = vmatpush2.msra.mxu0 0.0
        %2125 = vmatprep.subr.mxu0 0.0
        %2126 = vmatpush2.msra.mxu0 0.0
        %2127 = vmatprep.subr.mxu0 0.0
        %2128 = vmatpush2.msra.mxu0 0.0
        %2129 = vmatprep.subr.mxu0 0.0
        %2130 = vmatpush2.msra.mxu0 0.0
        %2131 = vmatprep.subr.mxu0 0.0
        %2132 = vmatpush2.msra.mxu0 0.0
        %2133 = vmatprep.subr.mxu0 0.0
        %2134 = vmatpush2.msra.mxu0 0.0
        %2135 = vmatprep.subr.mxu0 0.0
        %2136 = vmatpush2.msra.mxu0 0.0
        %2137 = vmatprep.subr.mxu0 0.0
        %2138 = vmatpush2.msra.mxu0 0.0
        %2139 = vmatprep.mubr.f32.mxu0 0.0
        %2140 = vmatmul.mubr.f32.gmra.mxu0 %v2070
        %v2141 = vpop.f32.mrf.mxu0
        %v2142 = vadd.f32 0.0, %v2141
        %v2143 = vpop.f32.mrf.mxu0
        %v2144 = vadd.f32 0.0, %v2143
        %2145 = vmatprep.mubr.f32.mxu0 0.0
        %2146 = vmatmul.mubr.f32.gmra.mxu0 %v2073
        %v2147 = vpop.f32.mrf.mxu0
        %v2148 = vadd.f32 0.0, %v2147
        %v2149 = vpop.f32.mrf.mxu0
        %v2150 = vadd.f32 0.0, %v2149
        %2151 = vdwg.mxu0
        %2152 = vmatprep.subr.mxu0 0.0
        %2153 = vmatpush1.msra.mxu0 0.0
        %2154 = vmatprep.subr.mxu0 0.0
        %2155 = vmatpush1.msra.mxu0 0.0
        %2156 = vmatprep.subr.mxu0 0.0
        %2157 = vmatpush1.msra.mxu0 0.0
        %2158 = vmatprep.subr.mxu0 0.0
        %2159 = vmatpush1.msra.mxu0 0.0
        %2160 = vmatprep.subr.mxu0 0.0
        %2161 = vmatpush1.msra.mxu0 0.0
        %2162 = vmatprep.subr.mxu0 0.0
        %2163 = vmatpush1.msra.mxu0 0.0
        %2164 = vmatprep.subr.mxu0 0.0
        %2165 = vmatpush1.msra.mxu0 0.0
        %2166 = vmatprep.subr.mxu0 0.0
        %2167 = vmatpush1.msra.mxu0 0.0
        %2168 = vmatprep.subr.mxu0 0.0
        %2169 = vmatpush1.msra.mxu0 0.0
        %2170 = vmatprep.subr.mxu0 0.0
        %2171 = vmatpush1.msra.mxu0 0.0
        %2172 = vmatprep.subr.mxu0 0.0
        %2173 = vmatpush1.msra.mxu0 0.0
        %2174 = vmatprep.subr.mxu0 0.0
        %2175 = vmatpush1.msra.mxu0 0.0
        %2176 = vmatprep.subr.mxu0 0.0
        %2177 = vmatpush1.msra.mxu0 0.0
        %2178 = vmatprep.subr.mxu0 0.0
        %2179 = vmatpush1.msra.mxu0 0.0
        %2180 = vmatprep.subr.mxu0 0.0
        %2181 = vmatpush1.msra.mxu0 0.0
        %2182 = vmatprep.subr.mxu0 %v549
        %2183 = vmatpush1.msra.mxu0 %v548
        %2184 = vmatprep.subr.mxu0 0.0
        %2185 = vmatpush2.msra.mxu0 0.0
        %2186 = vmatprep.subr.mxu0 0.0
        %2187 = vmatpush2.msra.mxu0 0.0
        %2188 = vmatprep.subr.mxu0 0.0
        %2189 = vmatpush2.msra.mxu0 0.0
        %2190 = vmatprep.subr.mxu0 0.0
        %2191 = vmatpush2.msra.mxu0 0.0
        %2192 = vmatprep.subr.mxu0 0.0
        %2193 = vmatpush2.msra.mxu0 0.0
        %2194 = vmatprep.subr.mxu0 0.0
        %2195 = vmatpush2.msra.mxu0 0.0
        %2196 = vmatprep.subr.mxu0 0.0
        %2197 = vmatpush2.msra.mxu0 0.0
        %2198 = vmatprep.subr.mxu0 0.0
        %2199 = vmatpush2.msra.mxu0 0.0
        %2200 = vmatprep.subr.mxu0 0.0
        %2201 = vmatpush2.msra.mxu0 0.0
        %2202 = vmatprep.subr.mxu0 0.0
        %2203 = vmatpush2.msra.mxu0 0.0
        %2204 = vmatprep.subr.mxu0 0.0
        %2205 = vmatpush2.msra.mxu0 0.0
        %2206 = vmatprep.subr.mxu0 0.0
        %2207 = vmatpush2.msra.mxu0 0.0
        %2208 = vmatprep.subr.mxu0 0.0
        %2209 = vmatpush2.msra.mxu0 0.0
        %2210 = vmatprep.subr.mxu0 0.0
        %2211 = vmatpush2.msra.mxu0 0.0
        %2212 = vmatprep.subr.mxu0 0.0
        %2213 = vmatpush2.msra.mxu0 0.0
        %2214 = vmatprep.subr.mxu0 0.0
        %2215 = vmatpush2.msra.mxu0 0.0
        %2216 = vmatprep.mubr.f32.mxu0 0.0
        %2217 = vmatmul.mubr.f32.gmra.mxu0 %v2070
        %v2218 = vpop.f32.mrf.mxu0
        %v2219 = vadd.f32 0.0, %v2218
        %v2220 = vpop.f32.mrf.mxu0
        %v2221 = vadd.f32 0.0, %v2220
        %2222 = vmatprep.mubr.f32.mxu0 0.0
        %2223 = vmatmul.mubr.f32.gmra.mxu0 %v2073
        %v2224 = vpop.f32.mrf.mxu0
        %v2225 = vadd.f32 0.0, %v2224
        %v2226 = vpop.f32.mrf.mxu0
        %v2227 = vadd.f32 0.0, %v2226
        %2228 = vdwg.mxu0
        %v2229 = vmul.f32 %v1672, %v2142
        %v2230 = vmul.f32 %v1674, %v2144
        %v2231 = vmul.f32 %v1715, %v2219
        %v2232 = vmul.f32 %v1717, %v2221
        %v2233 = vmul.f32 %v1676, %v2148
        %v2234 = vmul.f32 %v1678, %v2150
        %v2235 = vmul.f32 %v1719, %v2225
        %v2236 = vmul.f32 %v1721, %v2227
        %v2238 = vsel %vm1045, %v2067, 0
        %v2241 = vsel %vm1045, %v2068, 0
        %2243 = vmatprep.subr.mxu0 0.0
        %2244 = vmatpush1.msra.mxu0 0.0
        %2245 = vmatprep.subr.mxu0 0.0
        %2246 = vmatpush1.msra.mxu0 0.0
        %2247 = vmatprep.subr.mxu0 0.0
        %2248 = vmatpush1.msra.mxu0 0.0
        %2249 = vmatprep.subr.mxu0 0.0
        %2250 = vmatpush1.msra.mxu0 0.0
        %2251 = vmatprep.subr.mxu0 0.0
        %2252 = vmatpush1.msra.mxu0 0.0
        %2253 = vmatprep.subr.mxu0 0.0
        %2254 = vmatpush1.msra.mxu0 0.0
        %2255 = vmatprep.subr.mxu0 0.0
        %2256 = vmatpush1.msra.mxu0 0.0
        %2257 = vmatprep.subr.mxu0 0.0
        %2258 = vmatpush1.msra.mxu0 0.0
        %2259 = vmatprep.subr.mxu0 0.0
        %2260 = vmatpush1.msra.mxu0 0.0
        %2261 = vmatprep.subr.mxu0 0.0
        %2262 = vmatpush1.msra.mxu0 0.0
        %2263 = vmatprep.subr.mxu0 0.0
        %2264 = vmatpush1.msra.mxu0 0.0
        %2265 = vmatprep.subr.mxu0 0.0
        %2266 = vmatpush1.msra.mxu0 0.0
        %2267 = vmatprep.subr.mxu0 0.0
        %2268 = vmatpush1.msra.mxu0 0.0
        %2269 = vmatprep.subr.mxu0 0.0
        %2270 = vmatpush1.msra.mxu0 0.0
        %2271 = vmatprep.subr.mxu0 0.0
        %2272 = vmatpush1.msra.mxu0 0.0
        %2273 = vmatprep.subr.mxu0 %v547
        %2274 = vmatpush1.msra.mxu0 %v546
        %2275 = vmatprep.subr.mxu0 0.0
        %2276 = vmatpush2.msra.mxu0 0.0
        %2277 = vmatprep.subr.mxu0 0.0
        %2278 = vmatpush2.msra.mxu0 0.0
        %2279 = vmatprep.subr.mxu0 0.0
        %2280 = vmatpush2.msra.mxu0 0.0
        %2281 = vmatprep.subr.mxu0 0.0
        %2282 = vmatpush2.msra.mxu0 0.0
        %2283 = vmatprep.subr.mxu0 0.0
        %2284 = vmatpush2.msra.mxu0 0.0
        %2285 = vmatprep.subr.mxu0 0.0
        %2286 = vmatpush2.msra.mxu0 0.0
        %2287 = vmatprep.subr.mxu0 0.0
        %2288 = vmatpush2.msra.mxu0 0.0
        %2289 = vmatprep.subr.mxu0 0.0
        %2290 = vmatpush2.msra.mxu0 0.0
        %2291 = vmatprep.subr.mxu0 0.0
        %2292 = vmatpush2.msra.mxu0 0.0
        %2293 = vmatprep.subr.mxu0 0.0
        %2294 = vmatpush2.msra.mxu0 0.0
        %2295 = vmatprep.subr.mxu0 0.0
        %2296 = vmatpush2.msra.mxu0 0.0
        %2297 = vmatprep.subr.mxu0 0.0
        %2298 = vmatpush2.msra.mxu0 0.0
        %2299 = vmatprep.subr.mxu0 0.0
        %2300 = vmatpush2.msra.mxu0 0.0
        %2301 = vmatprep.subr.mxu0 0.0
        %2302 = vmatpush2.msra.mxu0 0.0
        %2303 = vmatprep.subr.mxu0 0.0
        %2304 = vmatpush2.msra.mxu0 0.0
        %2305 = vmatprep.subr.mxu0 0.0
        %2306 = vmatpush2.msra.mxu0 0.0
        %2307 = vmatprep.mubr.f32.mxu0 0.0
        %2308 = vmatmul.mubr.f32.gmra.mxu0 %v2238
        %v2309 = vpop.f32.mrf.mxu0
        %v2310 = vadd.f32 0.0, %v2309
        %v2311 = vpop.f32.mrf.mxu0
        %v2312 = vadd.f32 0.0, %v2311
        %2313 = vmatprep.mubr.f32.mxu0 0.0
        %2314 = vmatmul.mubr.f32.gmra.mxu0 %v2241
        %v2315 = vpop.f32.mrf.mxu0
        %v2316 = vadd.f32 0.0, %v2315
        %v2317 = vpop.f32.mrf.mxu0
        %v2318 = vadd.f32 0.0, %v2317
        %2319 = vdwg.mxu0
        %2320 = vmatprep.subr.mxu0 0.0
        %2321 = vmatpush1.msra.mxu0 0.0
        %2322 = vmatprep.subr.mxu0 0.0
        %2323 = vmatpush1.msra.mxu0 0.0
        %2324 = vmatprep.subr.mxu0 0.0
        %2325 = vmatpush1.msra.mxu0 0.0
        %2326 = vmatprep.subr.mxu0 0.0
        %2327 = vmatpush1.msra.mxu0 0.0
        %2328 = vmatprep.subr.mxu0 0.0
        %2329 = vmatpush1.msra.mxu0 0.0
        %2330 = vmatprep.subr.mxu0 0.0
        %2331 = vmatpush1.msra.mxu0 0.0
        %2332 = vmatprep.subr.mxu0 0.0
        %2333 = vmatpush1.msra.mxu0 0.0
        %2334 = vmatprep.subr.mxu0 0.0
        %2335 = vmatpush1.msra.mxu0 0.0
        %2336 = vmatprep.subr.mxu0 0.0
        %2337 = vmatpush1.msra.mxu0 0.0
        %2338 = vmatprep.subr.mxu0 0.0
        %2339 = vmatpush1.msra.mxu0 0.0
        %2340 = vmatprep.subr.mxu0 0.0
        %2341 = vmatpush1.msra.mxu0 0.0
        %2342 = vmatprep.subr.mxu0 0.0
        %2343 = vmatpush1.msra.mxu0 0.0
        %2344 = vmatprep.subr.mxu0 0.0
        %2345 = vmatpush1.msra.mxu0 0.0
        %2346 = vmatprep.subr.mxu0 0.0
        %2347 = vmatpush1.msra.mxu0 0.0
        %2348 = vmatprep.subr.mxu0 0.0
        %2349 = vmatpush1.msra.mxu0 0.0
        %2350 = vmatprep.subr.mxu0 %v549
        %2351 = vmatpush1.msra.mxu0 %v548
        %2352 = vmatprep.subr.mxu0 0.0
        %2353 = vmatpush2.msra.mxu0 0.0
        %2354 = vmatprep.subr.mxu0 0.0
        %2355 = vmatpush2.msra.mxu0 0.0
        %2356 = vmatprep.subr.mxu0 0.0
        %2357 = vmatpush2.msra.mxu0 0.0
        %2358 = vmatprep.subr.mxu0 0.0
        %2359 = vmatpush2.msra.mxu0 0.0
        %2360 = vmatprep.subr.mxu0 0.0
        %2361 = vmatpush2.msra.mxu0 0.0
        %2362 = vmatprep.subr.mxu0 0.0
        %2363 = vmatpush2.msra.mxu0 0.0
        %2364 = vmatprep.subr.mxu0 0.0
        %2365 = vmatpush2.msra.mxu0 0.0
        %2366 = vmatprep.subr.mxu0 0.0
        %2367 = vmatpush2.msra.mxu0 0.0
        %2368 = vmatprep.subr.mxu0 0.0
        %2369 = vmatpush2.msra.mxu0 0.0
        %2370 = vmatprep.subr.mxu0 0.0
        %2371 = vmatpush2.msra.mxu0 0.0
        %2372 = vmatprep.subr.mxu0 0.0
        %2373 = vmatpush2.msra.mxu0 0.0
        %2374 = vmatprep.subr.mxu0 0.0
        %2375 = vmatpush2.msra.mxu0 0.0
        %2376 = vmatprep.subr.mxu0 0.0
        %2377 = vmatpush2.msra.mxu0 0.0
        %2378 = vmatprep.subr.mxu0 0.0
        %2379 = vmatpush2.msra.mxu0 0.0
        %2380 = vmatprep.subr.mxu0 0.0
        %2381 = vmatpush2.msra.mxu0 0.0
        %2382 = vmatprep.subr.mxu0 0.0
        %2383 = vmatpush2.msra.mxu0 0.0
        %2384 = vmatprep.mubr.f32.mxu0 0.0
        %2385 = vmatmul.mubr.f32.gmra.mxu0 %v2238
        %v2386 = vpop.f32.mrf.mxu0
        %v2387 = vadd.f32 0.0, %v2386
        %v2388 = vpop.f32.mrf.mxu0
        %v2389 = vadd.f32 0.0, %v2388
        %2390 = vmatprep.mubr.f32.mxu0 0.0
        %2391 = vmatmul.mubr.f32.gmra.mxu0 %v2241
        %v2392 = vpop.f32.mrf.mxu0
        %v2393 = vadd.f32 0.0, %v2392
        %v2394 = vpop.f32.mrf.mxu0
        %v2395 = vadd.f32 0.0, %v2394
        %2396 = vdwg.mxu0
        %v2397 = vadd.f32 %v2229, %v2310
        %v2398 = vadd.f32 %v2230, %v2312
        %v2399 = vadd.f32 %v2231, %v2387
        %v2400 = vadd.f32 %v2232, %v2389
        %v2401 = vadd.f32 %v2233, %v2316
        %v2402 = vadd.f32 %v2234, %v2318
        %v2403 = vadd.f32 %v2235, %v2393
        %v2404 = vadd.f32 %v2236, %v2395
        %v2405 = vmul.f32 %v2397, 0.5
        %v2406 = vmul.f32 %v2398, 0.5
        %v2407 = vmul.f32 %v2399, 0.5
        %v2408 = vmul.f32 %v2400, 0.5
        %v2409 = vmul.f32 %v2401, 0.5
        %v2410 = vmul.f32 %v2402, 0.5
        %v2411 = vmul.f32 %v2403, 0.5
        %v2412 = vmul.f32 %v2404, 0.5
        %v2413 = vmul.f32 %v2397, 0.70710677
        %v2414 = vmul.f32 %v2398, 0.70710677
        %v2415 = vmul.f32 %v2399, 0.70710677
        %v2416 = vmul.f32 %v2400, 0.70710677
        %v2417 = vmul.f32 %v2401, 0.70710677
        %v2418 = vmul.f32 %v2402, 0.70710677
        %v2419 = vmul.f32 %v2403, 0.70710677
        %v2420 = vmul.f32 %v2404, 0.70710677
        %v2421 = vand.u32 2147483647, %v2413
        %v2422 = vand.u32 2147483647, %v2414
        %v2423 = vand.u32 2147483647, %v2415
        %v2424 = vand.u32 2147483647, %v2416
        %v2425 = vand.u32 2147483647, %v2417
        %v2426 = vand.u32 2147483647, %v2418
        %v2427 = vand.u32 2147483647, %v2419
        %v2428 = vand.u32 2147483647, %v2420
        %v2429 = vmul.f32 %v2421, 0.3275911
        %v2430 = vmul.f32 %v2422, 0.3275911
        %v2431 = vmul.f32 %v2423, 0.3275911
        %v2432 = vmul.f32 %v2424, 0.3275911
        %v2433 = vmul.f32 %v2425, 0.3275911
        %v2434 = vmul.f32 %v2426, 0.3275911
        %v2435 = vmul.f32 %v2427, 0.3275911
        %v2436 = vmul.f32 %v2428, 0.3275911
        %v2437 = vadd.f32 %v2429, 1.0
        %v2438 = vadd.f32 %v2430, 1.0
        %v2439 = vadd.f32 %v2431, 1.0
        %v2440 = vadd.f32 %v2432, 1.0
        %v2441 = vadd.f32 %v2433, 1.0
        %v2442 = vadd.f32 %v2434, 1.0
        %v2443 = vadd.f32 %v2435, 1.0
        %v2444 = vadd.f32 %v2436, 1.0
        %v2445 = vrcp.pop %v2437
        %v2446 = vmul.f32 1.0, %v2445
        %v2447 = vrcp.pop %v2438
        %v2448 = vmul.f32 1.0, %v2447
        %v2449 = vrcp.pop %v2439
        %v2450 = vmul.f32 1.0, %v2449
        %v2451 = vrcp.pop %v2440
        %v2452 = vmul.f32 1.0, %v2451
        %v2453 = vrcp.pop %v2441
        %v2454 = vmul.f32 1.0, %v2453
        %v2455 = vrcp.pop %v2442
        %v2456 = vmul.f32 1.0, %v2455
        %v2457 = vrcp.pop %v2443
        %v2458 = vmul.f32 1.0, %v2457
        %v2459 = vrcp.pop %v2444
        %v2460 = vmul.f32 1.0, %v2459
        %v2461 = vmul.f32 %v2446, 1.0614054
        %v2462 = vmul.f32 %v2448, 1.0614054
        %v2463 = vmul.f32 %v2450, 1.0614054
        %v2464 = vmul.f32 %v2452, 1.0614054
        %v2465 = vmul.f32 %v2454, 1.0614054
        %v2466 = vmul.f32 %v2456, 1.0614054
        %v2467 = vmul.f32 %v2458, 1.0614054
        %v2468 = vmul.f32 %v2460, 1.0614054
        %v2469 = vadd.f32 %v2461, -1.4531521
        %v2470 = vadd.f32 %v2462, -1.4531521
        %v2471 = vadd.f32 %v2463, -1.4531521
        %v2472 = vadd.f32 %v2464, -1.4531521
        %v2473 = vadd.f32 %v2465, -1.4531521
        %v2474 = vadd.f32 %v2466, -1.4531521
        %v2475 = vadd.f32 %v2467, -1.4531521
        %v2476 = vadd.f32 %v2468, -1.4531521
        %v2477 = vmul.f32 %v2469, %v2446
        %v2478 = vmul.f32 %v2470, %v2448
        %v2479 = vmul.f32 %v2471, %v2450
        %v2480 = vmul.f32 %v2472, %v2452
        %v2481 = vmul.f32 %v2473, %v2454
        %v2482 = vmul.f32 %v2474, %v2456
        %v2483 = vmul.f32 %v2475, %v2458
        %v2484 = vmul.f32 %v2476, %v2460
        %v2485 = vadd.f32 %v2477, 1.4214138
        %v2486 = vadd.f32 %v2478, 1.4214138
        %v2487 = vadd.f32 %v2479, 1.4214138
        %v2488 = vadd.f32 %v2480, 1.4214138
        %v2489 = vadd.f32 %v2481, 1.4214138
        %v2490 = vadd.f32 %v2482, 1.4214138
        %v2491 = vadd.f32 %v2483, 1.4214138
        %v2492 = vadd.f32 %v2484, 1.4214138
        %v2493 = vmul.f32 %v2485, %v2446
        %v2494 = vmul.f32 %v2486, %v2448
        %v2495 = vmul.f32 %v2487, %v2450
        %v2496 = vmul.f32 %v2488, %v2452
        %v2497 = vmul.f32 %v2489, %v2454
        %v2498 = vmul.f32 %v2490, %v2456
        %v2499 = vmul.f32 %v2491, %v2458
        %v2500 = vmul.f32 %v2492, %v2460
        %v2501 = vadd.f32 %v2493, -0.28449672
        %v2502 = vadd.f32 %v2494, -0.28449672
        %v2503 = vadd.f32 %v2495, -0.28449672
        %v2504 = vadd.f32 %v2496, -0.28449672
        %v2505 = vadd.f32 %v2497, -0.28449672
        %v2506 = vadd.f32 %v2498, -0.28449672
        %v2507 = vadd.f32 %v2499, -0.28449672
        %v2508 = vadd.f32 %v2500, -0.28449672
        %v2509 = vmul.f32 %v2501, %v2446
        %v2510 = vmul.f32 %v2502, %v2448
        %v2511 = vmul.f32 %v2503, %v2450
        %v2512 = vmul.f32 %v2504, %v2452
        %v2513 = vmul.f32 %v2505, %v2454
        %v2514 = vmul.f32 %v2506, %v2456
        %v2515 = vmul.f32 %v2507, %v2458
        %v2516 = vmul.f32 %v2508, %v2460
        %v2517 = vadd.f32 %v2509, 0.2548296
        %v2518 = vadd.f32 %v2510, 0.2548296
        %v2519 = vadd.f32 %v2511, 0.2548296
        %v2520 = vadd.f32 %v2512, 0.2548296
        %v2521 = vadd.f32 %v2513, 0.2548296
        %v2522 = vadd.f32 %v2514, 0.2548296
        %v2523 = vadd.f32 %v2515, 0.2548296
        %v2524 = vadd.f32 %v2516, 0.2548296
        %v2525 = vmul.f32 %v2517, %v2446
        %v2526 = vmul.f32 %v2518, %v2448
        %v2527 = vmul.f32 %v2519, %v2450
        %v2528 = vmul.f32 %v2520, %v2452
        %v2529 = vmul.f32 %v2521, %v2454
        %v2530 = vmul.f32 %v2522, %v2456
        %v2531 = vmul.f32 %v2523, %v2458
        %v2532 = vmul.f32 %v2524, %v2460
        %v2533 = vsub.f32 0.0, %v2421
        %v2534 = vsub.f32 0.0, %v2422
        %v2535 = vsub.f32 0.0, %v2423
        %v2536 = vsub.f32 0.0, %v2424
        %v2537 = vsub.f32 0.0, %v2425
        %v2538 = vsub.f32 0.0, %v2426
        %v2539 = vsub.f32 0.0, %v2427
        %v2540 = vsub.f32 0.0, %v2428
        %v2541 = vmul.f32 %v2533, %v2421
        %v2542 = vmul.f32 %v2534, %v2422
        %v2543 = vmul.f32 %v2535, %v2423
        %v2544 = vmul.f32 %v2536, %v2424
        %v2545 = vmul.f32 %v2537, %v2425
        %v2546 = vmul.f32 %v2538, %v2426
        %v2547 = vmul.f32 %v2539, %v2427
        %v2548 = vmul.f32 %v2540, %v2428
        %v2549 = vmul.f32 %v2541, 1.442695
        %v2550 = vpow.pop %v2549
        %v2551 = vmul.f32 %v2542, 1.442695
        %v2552 = vpow.pop %v2551
        %v2553 = vmul.f32 %v2543, 1.442695
        %v2554 = vpow.pop %v2553
        %v2555 = vmul.f32 %v2544, 1.442695
        %v2556 = vpow.pop %v2555
        %v2557 = vmul.f32 %v2545, 1.442695
        %v2558 = vpow.pop %v2557
        %v2559 = vmul.f32 %v2546, 1.442695
        %v2560 = vpow.pop %v2559
        %v2561 = vmul.f32 %v2547, 1.442695
        %v2562 = vpow.pop %v2561
        %v2563 = vmul.f32 %v2548, 1.442695
        %v2564 = vpow.pop %v2563
        %v2565 = vmul.f32 %v2525, %v2550
        %v2566 = vmul.f32 %v2526, %v2552
        %v2567 = vmul.f32 %v2527, %v2554
        %v2568 = vmul.f32 %v2528, %v2556
        %v2569 = vmul.f32 %v2529, %v2558
        %v2570 = vmul.f32 %v2530, %v2560
        %v2571 = vmul.f32 %v2531, %v2562
        %v2572 = vmul.f32 %v2532, %v2564
        %v2573 = vsub.f32 1.0, %v2565
        %v2574 = vsub.f32 1.0, %v2566
        %v2575 = vsub.f32 1.0, %v2567
        %v2576 = vsub.f32 1.0, %v2568
        %v2577 = vsub.f32 1.0, %v2569
        %v2578 = vsub.f32 1.0, %v2570
        %v2579 = vsub.f32 1.0, %v2571
        %v2580 = vsub.f32 1.0, %v2572
        %vm2581 = vcmp.ge.f32.partialorder %v2413, 0.0
        %vm2582 = vcmp.ge.f32.partialorder %v2414, 0.0
        %vm2583 = vcmp.ge.f32.partialorder %v2415, 0.0
        %vm2584 = vcmp.ge.f32.partialorder %v2416, 0.0
        %vm2585 = vcmp.ge.f32.partialorder %v2417, 0.0
        %vm2586 = vcmp.ge.f32.partialorder %v2418, 0.0
        %vm2587 = vcmp.ge.f32.partialorder %v2419, 0.0
        %vm2588 = vcmp.ge.f32.partialorder %v2420, 0.0
        %v2589 = vsub.f32 0.0, %v2573
        %v2590 = vsub.f32 0.0, %v2574
        %v2591 = vsub.f32 0.0, %v2575
        %v2592 = vsub.f32 0.0, %v2576
        %v2593 = vsub.f32 0.0, %v2577
        %v2594 = vsub.f32 0.0, %v2578
        %v2595 = vsub.f32 0.0, %v2579
        %v2596 = vsub.f32 0.0, %v2580
        %v2597 = vsel %vm2581, %v2573, %v2589
        %v2598 = vsel %vm2582, %v2574, %v2590
        %v2599 = vsel %vm2583, %v2575, %v2591
        %v2600 = vsel %vm2584, %v2576, %v2592
        %v2601 = vsel %vm2585, %v2577, %v2593
        %v2602 = vsel %vm2586, %v2578, %v2594
        %v2603 = vsel %vm2587, %v2579, %v2595
        %v2604 = vsel %vm2588, %v2580, %v2596
        %v2605 = vadd.f32 %v2597, 1.0
        %v2606 = vadd.f32 %v2598, 1.0
        %v2607 = vadd.f32 %v2599, 1.0
        %v2608 = vadd.f32 %v2600, 1.0
        %v2609 = vadd.f32 %v2601, 1.0
        %v2610 = vadd.f32 %v2602, 1.0
        %v2611 = vadd.f32 %v2603, 1.0
        %v2612 = vadd.f32 %v2604, 1.0
        %v2613 = vmul.f32 %v2405, %v2605
        %v2614 = vmul.f32 %v2406, %v2606
        %v2615 = vmul.f32 %v2407, %v2607
        %v2616 = vmul.f32 %v2408, %v2608
        %v2617 = vmul.f32 %v2409, %v2609
        %v2618 = vmul.f32 %v2410, %v2610
        %v2619 = vmul.f32 %v2411, %v2611
        %v2620 = vmul.f32 %v2412, %v2612
        %v2621 = vld [vmem:[%s431 + $0x20] sm:$0xff]
        %v2622 = vld [vmem:[%s431 + $0x28] sm:$0xff]
        %v2623 = vld [vmem:[%s431 + $0x30] sm:$0xff]
        %v2624 = vld [vmem:[%s431 + $0x38] sm:$0xff]
        %v2625 = vunpack.c.l.bf16 %v2621
        %v2626 = vunpack.c.h.bf16 %v2621
        %v2627 = vunpack.c.l.bf16 %v2622
        %v2628 = vunpack.c.h.bf16 %v2622
        %v2629 = vunpack.c.l.bf16 %v2623
        %v2630 = vunpack.c.h.bf16 %v2623
        %v2631 = vunpack.c.l.bf16 %v2624
        %v2632 = vunpack.c.h.bf16 %v2624
        %v2633 = vadd.f32 %v2613, %v2625
        %v2634 = vadd.f32 %v2614, %v2626
        %v2635 = vadd.f32 %v2615, %v2627
        %v2636 = vadd.f32 %v2616, %v2628
        %v2637 = vadd.f32 %v2617, %v2629
        %v2638 = vadd.f32 %v2618, %v2630
        %v2639 = vadd.f32 %v2619, %v2631
        %v2640 = vadd.f32 %v2620, %v2632
        %v2641 = vld [vmem:[%s7 + $0x40] sm:$0xff]
        %v2642 = vld [vmem:[%s7 + $0x48] sm:$0xff]
        %v2643 = vld [vmem:[%s4] sm:$0xf]
        %v2644 = vpack.c.bf16 %v2637, %v2633
        %v2645 = vpack.c.bf16 %v2638, %v2634
        %v2646 = vpack.c.bf16 %v2639, %v2635
        %v2647 = vpack.c.bf16 %v2640, %v2636
        %v2649 = vsel %vm1633, %v2643, 0
        %2651 = vmatprep.subr.bf16.mxu0 0
        %2652 = vmatpush1.bf16.msra.mxu0 0
        %2653 = vmatprep.subr.bf16.mxu0 0
        %2654 = vmatpush1.bf16.msra.mxu0 0
        %2655 = vmatprep.subr.bf16.mxu0 0
        %2656 = vmatpush1.bf16.msra.mxu0 0
        %2657 = vmatprep.subr.bf16.mxu0 0
        %2658 = vmatpush1.bf16.msra.mxu0 0
        %2659 = vmatprep.subr.bf16.mxu0 0
        %2660 = vmatpush1.bf16.msra.mxu0 0
        %2661 = vmatprep.subr.bf16.mxu0 0
        %2662 = vmatpush1.bf16.msra.mxu0 0
        %2663 = vmatprep.subr.bf16.mxu0 0
        %2664 = vmatpush1.bf16.msra.mxu0 0
        %2665 = vmatprep.subr.bf16.mxu0 %v2645
        %2666 = vmatpush1.bf16.msra.mxu0 %v2644
        %2667 = vmatprep.subr.bf16.mxu0 0
        %2668 = vmatpush2.bf16.msra.mxu0 0
        %2669 = vmatprep.subr.bf16.mxu0 0
        %2670 = vmatpush2.bf16.msra.mxu0 0
        %2671 = vmatprep.subr.bf16.mxu0 0
        %2672 = vmatpush2.bf16.msra.mxu0 0
        %2673 = vmatprep.subr.bf16.mxu0 0
        %2674 = vmatpush2.bf16.msra.mxu0 0
        %2675 = vmatprep.subr.bf16.mxu0 0
        %2676 = vmatpush2.bf16.msra.mxu0 0
        %2677 = vmatprep.subr.bf16.mxu0 0
        %2678 = vmatpush2.bf16.msra.mxu0 0
        %2679 = vmatprep.subr.bf16.mxu0 0
        %2680 = vmatpush2.bf16.msra.mxu0 0
        %2681 = vmatprep.subr.bf16.mxu0 0
        %2682 = vmatpush2.bf16.msra.mxu0 0
        %2683 = vmatprep.mubr.bf16.mxu0 0
        %2684 = vmatmul.mubr.bf16.gmra.mxu0 %v2649
        %v2685 = vpop.f32.mrf.mxu0
        %v2686 = vadd.f32 0.0, %v2685
        %v2687 = vpop.f32.mrf.mxu0
        %v2688 = vadd.f32 0.0, %v2687
        %v2689 = vpop.f32.mrf.mxu0
        %v2690 = vpop.f32.mrf.mxu0
        %2691 = vdwg.mxu0
        %2692 = vmatprep.subr.bf16.mxu0 0
        %2693 = vmatpush1.bf16.msra.mxu0 0
        %2694 = vmatprep.subr.bf16.mxu0 0
        %2695 = vmatpush1.bf16.msra.mxu0 0
        %2696 = vmatprep.subr.bf16.mxu0 0
        %2697 = vmatpush1.bf16.msra.mxu0 0
        %2698 = vmatprep.subr.bf16.mxu0 0
        %2699 = vmatpush1.bf16.msra.mxu0 0
        %2700 = vmatprep.subr.bf16.mxu0 0
        %2701 = vmatpush1.bf16.msra.mxu0 0
        %2702 = vmatprep.subr.bf16.mxu0 0
        %2703 = vmatpush1.bf16.msra.mxu0 0
        %2704 = vmatprep.subr.bf16.mxu0 0
        %2705 = vmatpush1.bf16.msra.mxu0 0
        %2706 = vmatprep.subr.bf16.mxu0 %v2647
        %2707 = vmatpush1.bf16.msra.mxu0 %v2646
        %2708 = vmatprep.subr.bf16.mxu0 0
        %2709 = vmatpush2.bf16.msra.mxu0 0
        %2710 = vmatprep.subr.bf16.mxu0 0
        %2711 = vmatpush2.bf16.msra.mxu0 0
        %2712 = vmatprep.subr.bf16.mxu0 0
        %2713 = vmatpush2.bf16.msra.mxu0 0
        %2714 = vmatprep.subr.bf16.mxu0 0
        %2715 = vmatpush2.bf16.msra.mxu0 0
        %2716 = vmatprep.subr.bf16.mxu0 0
        %2717 = vmatpush2.bf16.msra.mxu0 0
        %2718 = vmatprep.subr.bf16.mxu0 0
        %2719 = vmatpush2.bf16.msra.mxu0 0
        %2720 = vmatprep.subr.bf16.mxu0 0
        %2721 = vmatpush2.bf16.msra.mxu0 0
        %2722 = vmatprep.subr.bf16.mxu0 0
        %2723 = vmatpush2.bf16.msra.mxu0 0
        %2724 = vmatprep.mubr.bf16.mxu0 0
        %2725 = vmatmul.mubr.bf16.gmra.mxu0 %v2649
        %v2726 = vpop.f32.mrf.mxu0
        %v2727 = vadd.f32 0.0, %v2726
        %v2728 = vpop.f32.mrf.mxu0
        %v2729 = vadd.f32 0.0, %v2728
        %v2730 = vpop.f32.mrf.mxu0
        %v2731 = vpop.f32.mrf.mxu0
        %2732 = vdwg.mxu0
        %2733 = vmatprep.subr.mxu0 0.0
        %2734 = vmatpush1.msra.mxu0 %v497
        %2735 = vmatprep.subr.mxu0 0.0
        %2736 = vmatpush1.msra.mxu0 %v496
        %2737 = vmatprep.subr.mxu0 0.0
        %2738 = vmatpush1.msra.mxu0 %v495
        %2739 = vmatprep.subr.mxu0 0.0
        %2740 = vmatpush1.msra.mxu0 %v494
        %2741 = vmatprep.subr.mxu0 0.0
        %2742 = vmatpush1.msra.mxu0 %v493
        %2743 = vmatprep.subr.mxu0 0.0
        %2744 = vmatpush1.msra.mxu0 %v492
        %2745 = vmatprep.subr.mxu0 0.0
        %2746 = vmatpush1.msra.mxu0 %v491
        %2747 = vmatprep.subr.mxu0 0.0
        %2748 = vmatpush1.msra.mxu0 %v490
        %2749 = vmatprep.subr.mxu0 0.0
        %2750 = vmatpush1.msra.mxu0 %v489
        %2751 = vmatprep.subr.mxu0 0.0
        %2752 = vmatpush1.msra.mxu0 %v488
        %2753 = vmatprep.subr.mxu0 0.0
        %2754 = vmatpush1.msra.mxu0 %v487
        %2755 = vmatprep.subr.mxu0 0.0
        %2756 = vmatpush1.msra.mxu0 %v486
        %2757 = vmatprep.subr.mxu0 0.0
        %2758 = vmatpush1.msra.mxu0 %v485
        %2759 = vmatprep.subr.mxu0 0.0
        %2760 = vmatpush1.msra.mxu0 %v484
        %2761 = vmatprep.subr.mxu0 0.0
        %2762 = vmatpush1.msra.mxu0 %v483
        %2763 = vmatprep.subr.mxu0 0.0
        %2764 = vmatpush1.msra.mxu0 %v482
        %2765 = vmatprep.subr.mxu0 0.0
        %2766 = vmatpush2.msra.mxu0 %v513
        %2767 = vmatprep.subr.mxu0 0.0
        %2768 = vmatpush2.msra.mxu0 %v512
        %2769 = vmatprep.subr.mxu0 0.0
        %2770 = vmatpush2.msra.mxu0 %v511
        %2771 = vmatprep.subr.mxu0 0.0
        %2772 = vmatpush2.msra.mxu0 %v510
        %2773 = vmatprep.subr.mxu0 0.0
        %2774 = vmatpush2.msra.mxu0 %v509
        %2775 = vmatprep.subr.mxu0 0.0
        %2776 = vmatpush2.msra.mxu0 %v508
        %2777 = vmatprep.subr.mxu0 0.0
        %2778 = vmatpush2.msra.mxu0 %v507
        %2779 = vmatprep.subr.mxu0 0.0
        %2780 = vmatpush2.msra.mxu0 %v506
        %2781 = vmatprep.subr.mxu0 0.0
        %2782 = vmatpush2.msra.mxu0 %v505
        %2783 = vmatprep.subr.mxu0 0.0
        %2784 = vmatpush2.msra.mxu0 %v504
        %2785 = vmatprep.subr.mxu0 0.0
        %2786 = vmatpush2.msra.mxu0 %v503
        %2787 = vmatprep.subr.mxu0 0.0
        %2788 = vmatpush2.msra.mxu0 %v502
        %2789 = vmatprep.subr.mxu0 0.0
        %2790 = vmatpush2.msra.mxu0 %v501
        %2791 = vmatprep.subr.mxu0 0.0
        %2792 = vmatpush2.msra.mxu0 %v500
        %2793 = vmatprep.subr.mxu0 0.0
        %2794 = vmatpush2.msra.mxu0 %v499
        %2795 = vmatprep.subr.mxu0 0.0
        %2796 = vmatpush2.msra.mxu0 %v498
        %2797 = vmatprep.mubr.f32.mxu0 %v2688
        %2798 = vmatmul.mubr.f32.gmra.mxu0 %v2686
        %v2799 = vpop.f32.mrf.mxu0
        %v2800 = vadd.f32 0.0, %v2799
        %v2801 = vpop.f32.mrf.mxu0
        %2802 = vdwg.mxu0
        %2803 = vmatprep.subr.mxu0 0.0
        %2804 = vmatpush1.msra.mxu0 %v529
        %2805 = vmatprep.subr.mxu0 0.0
        %2806 = vmatpush1.msra.mxu0 %v528
        %2807 = vmatprep.subr.mxu0 0.0
        %2808 = vmatpush1.msra.mxu0 %v527
        %2809 = vmatprep.subr.mxu0 0.0
        %2810 = vmatpush1.msra.mxu0 %v526
        %2811 = vmatprep.subr.mxu0 0.0
        %2812 = vmatpush1.msra.mxu0 %v525
        %2813 = vmatprep.subr.mxu0 0.0
        %2814 = vmatpush1.msra.mxu0 %v524
        %2815 = vmatprep.subr.mxu0 0.0
        %2816 = vmatpush1.msra.mxu0 %v523
        %2817 = vmatprep.subr.mxu0 0.0
        %2818 = vmatpush1.msra.mxu0 %v522
        %2819 = vmatprep.subr.mxu0 0.0
        %2820 = vmatpush1.msra.mxu0 %v521
        %2821 = vmatprep.subr.mxu0 0.0
        %2822 = vmatpush1.msra.mxu0 %v520
        %2823 = vmatprep.subr.mxu0 0.0
        %2824 = vmatpush1.msra.mxu0 %v519
        %2825 = vmatprep.subr.mxu0 0.0
        %2826 = vmatpush1.msra.mxu0 %v518
        %2827 = vmatprep.subr.mxu0 0.0
        %2828 = vmatpush1.msra.mxu0 %v517
        %2829 = vmatprep.subr.mxu0 0.0
        %2830 = vmatpush1.msra.mxu0 %v516
        %2831 = vmatprep.subr.mxu0 0.0
        %2832 = vmatpush1.msra.mxu0 %v515
        %2833 = vmatprep.subr.mxu0 0.0
        %2834 = vmatpush1.msra.mxu0 %v514
        %2835 = vmatprep.subr.mxu0 0.0
        %2836 = vmatpush2.msra.mxu0 %v545
        %2837 = vmatprep.subr.mxu0 0.0
        %2838 = vmatpush2.msra.mxu0 %v544
        %2839 = vmatprep.subr.mxu0 0.0
        %2840 = vmatpush2.msra.mxu0 %v543
        %2841 = vmatprep.subr.mxu0 0.0
        %2842 = vmatpush2.msra.mxu0 %v542
        %2843 = vmatprep.subr.mxu0 0.0
        %2844 = vmatpush2.msra.mxu0 %v541
        %2845 = vmatprep.subr.mxu0 0.0
        %2846 = vmatpush2.msra.mxu0 %v540
        %2847 = vmatprep.subr.mxu0 0.0
        %2848 = vmatpush2.msra.mxu0 %v539
        %2849 = vmatprep.subr.mxu0 0.0
        %2850 = vmatpush2.msra.mxu0 %v538
        %2851 = vmatprep.subr.mxu0 0.0
        %2852 = vmatpush2.msra.mxu0 %v537
        %2853 = vmatprep.subr.mxu0 0.0
        %2854 = vmatpush2.msra.mxu0 %v536
        %2855 = vmatprep.subr.mxu0 0.0
        %2856 = vmatpush2.msra.mxu0 %v535
        %2857 = vmatprep.subr.mxu0 0.0
        %2858 = vmatpush2.msra.mxu0 %v534
        %2859 = vmatprep.subr.mxu0 0.0
        %2860 = vmatpush2.msra.mxu0 %v533
        %2861 = vmatprep.subr.mxu0 0.0
        %2862 = vmatpush2.msra.mxu0 %v532
        %2863 = vmatprep.subr.mxu0 0.0
        %2864 = vmatpush2.msra.mxu0 %v531
        %2865 = vmatprep.subr.mxu0 0.0
        %2866 = vmatpush2.msra.mxu0 %v530
        %2867 = vmatprep.mubr.f32.mxu0 %v2729
        %2868 = vmatmul.mubr.f32.gmra.mxu0 %v2727
        %v2869 = vpop.f32.mrf.mxu0
        %v2870 = vadd.f32 %v2800, %v2869
        %v2871 = vpop.f32.mrf.mxu0
        %2872 = vdwg.mxu0
        %v2873 = vmul.f32 %v2870, 0.00390625
        %v2874 = vmul.f32 %v2686, %v2686
        %v2875 = vmul.f32 %v2688, %v2688
        %v2876 = vmul.f32 %v2727, %v2727
        %v2877 = vmul.f32 %v2729, %v2729
        %2878 = vmatprep.subr.mxu0 0.0
        %2879 = vmatpush1.msra.mxu0 %v497
        %2880 = vmatprep.subr.mxu0 0.0
        %2881 = vmatpush1.msra.mxu0 %v496
        %2882 = vmatprep.subr.mxu0 0.0
        %2883 = vmatpush1.msra.mxu0 %v495
        %2884 = vmatprep.subr.mxu0 0.0
        %2885 = vmatpush1.msra.mxu0 %v494
        %2886 = vmatprep.subr.mxu0 0.0
        %2887 = vmatpush1.msra.mxu0 %v493
        %2888 = vmatprep.subr.mxu0 0.0
        %2889 = vmatpush1.msra.mxu0 %v492
        %2890 = vmatprep.subr.mxu0 0.0
        %2891 = vmatpush1.msra.mxu0 %v491
        %2892 = vmatprep.subr.mxu0 0.0
        %2893 = vmatpush1.msra.mxu0 %v490
        %2894 = vmatprep.subr.mxu0 0.0
        %2895 = vmatpush1.msra.mxu0 %v489
        %2896 = vmatprep.subr.mxu0 0.0
        %2897 = vmatpush1.msra.mxu0 %v488
        %2898 = vmatprep.subr.mxu0 0.0
        %2899 = vmatpush1.msra.mxu0 %v487
        %2900 = vmatprep.subr.mxu0 0.0
        %2901 = vmatpush1.msra.mxu0 %v486
        %2902 = vmatprep.subr.mxu0 0.0
        %2903 = vmatpush1.msra.mxu0 %v485
        %2904 = vmatprep.subr.mxu0 0.0
        %2905 = vmatpush1.msra.mxu0 %v484
        %2906 = vmatprep.subr.mxu0 0.0
        %2907 = vmatpush1.msra.mxu0 %v483
        %2908 = vmatprep.subr.mxu0 0.0
        %2909 = vmatpush1.msra.mxu0 %v482
        %2910 = vmatprep.subr.mxu0 0.0
        %2911 = vmatpush2.msra.mxu0 %v513
        %2912 = vmatprep.subr.mxu0 0.0
        %2913 = vmatpush2.msra.mxu0 %v512
        %2914 = vmatprep.subr.mxu0 0.0
        %2915 = vmatpush2.msra.mxu0 %v511
        %2916 = vmatprep.subr.mxu0 0.0
        %2917 = vmatpush2.msra.mxu0 %v510
        %2918 = vmatprep.subr.mxu0 0.0
        %2919 = vmatpush2.msra.mxu0 %v509
        %2920 = vmatprep.subr.mxu0 0.0
        %2921 = vmatpush2.msra.mxu0 %v508
        %2922 = vmatprep.subr.mxu0 0.0
        %2923 = vmatpush2.msra.mxu0 %v507
        %2924 = vmatprep.subr.mxu0 0.0
        %2925 = vmatpush2.msra.mxu0 %v506
        %2926 = vmatprep.subr.mxu0 0.0
        %2927 = vmatpush2.msra.mxu0 %v505
        %2928 = vmatprep.subr.mxu0 0.0
        %2929 = vmatpush2.msra.mxu0 %v504
        %2930 = vmatprep.subr.mxu0 0.0
        %2931 = vmatpush2.msra.mxu0 %v503
        %2932 = vmatprep.subr.mxu0 0.0
        %2933 = vmatpush2.msra.mxu0 %v502
        %2934 = vmatprep.subr.mxu0 0.0
        %2935 = vmatpush2.msra.mxu0 %v501
        %2936 = vmatprep.subr.mxu0 0.0
        %2937 = vmatpush2.msra.mxu0 %v500
        %2938 = vmatprep.subr.mxu0 0.0
        %2939 = vmatpush2.msra.mxu0 %v499
        %2940 = vmatprep.subr.mxu0 0.0
        %2941 = vmatpush2.msra.mxu0 %v498
        %2942 = vmatprep.mubr.f32.mxu0 %v2875
        %2943 = vmatmul.mubr.f32.gmra.mxu0 %v2874
        %v2944 = vpop.f32.mrf.mxu0
        %v2945 = vadd.f32 0.0, %v2944
        %v2946 = vpop.f32.mrf.mxu0
        %2947 = vdwg.mxu0
        %2948 = vmatprep.subr.mxu0 0.0
        %2949 = vmatpush1.msra.mxu0 %v529
        %2950 = vmatprep.subr.mxu0 0.0
        %2951 = vmatpush1.msra.mxu0 %v528
        %2952 = vmatprep.subr.mxu0 0.0
        %2953 = vmatpush1.msra.mxu0 %v527
        %2954 = vmatprep.subr.mxu0 0.0
        %2955 = vmatpush1.msra.mxu0 %v526
        %2956 = vmatprep.subr.mxu0 0.0
        %2957 = vmatpush1.msra.mxu0 %v525
        %2958 = vmatprep.subr.mxu0 0.0
        %2959 = vmatpush1.msra.mxu0 %v524
        %2960 = vmatprep.subr.mxu0 0.0
        %2961 = vmatpush1.msra.mxu0 %v523
        %2962 = vmatprep.subr.mxu0 0.0
        %2963 = vmatpush1.msra.mxu0 %v522
        %2964 = vmatprep.subr.mxu0 0.0
        %2965 = vmatpush1.msra.mxu0 %v521
        %2966 = vmatprep.subr.mxu0 0.0
        %2967 = vmatpush1.msra.mxu0 %v520
        %2968 = vmatprep.subr.mxu0 0.0
        %2969 = vmatpush1.msra.mxu0 %v519
        %2970 = vmatprep.subr.mxu0 0.0
        %2971 = vmatpush1.msra.mxu0 %v518
        %2972 = vmatprep.subr.mxu0 0.0
        %2973 = vmatpush1.msra.mxu0 %v517
        %2974 = vmatprep.subr.mxu0 0.0
        %2975 = vmatpush1.msra.mxu0 %v516
        %2976 = vmatprep.subr.mxu0 0.0
        %2977 = vmatpush1.msra.mxu0 %v515
        %2978 = vmatprep.subr.mxu0 0.0
        %2979 = vmatpush1.msra.mxu0 %v514
        %2980 = vmatprep.subr.mxu0 0.0
        %2981 = vmatpush2.msra.mxu0 %v545
        %2982 = vmatprep.subr.mxu0 0.0
        %2983 = vmatpush2.msra.mxu0 %v544
        %2984 = vmatprep.subr.mxu0 0.0
        %2985 = vmatpush2.msra.mxu0 %v543
        %2986 = vmatprep.subr.mxu0 0.0
        %2987 = vmatpush2.msra.mxu0 %v542
        %2988 = vmatprep.subr.mxu0 0.0
        %2989 = vmatpush2.msra.mxu0 %v541
        %2990 = vmatprep.subr.mxu0 0.0
        %2991 = vmatpush2.msra.mxu0 %v540
        %2992 = vmatprep.subr.mxu0 0.0
        %2993 = vmatpush2.msra.mxu0 %v539
        %2994 = vmatprep.subr.mxu0 0.0
        %2995 = vmatpush2.msra.mxu0 %v538
        %2996 = vmatprep.subr.mxu0 0.0
        %2997 = vmatpush2.msra.mxu0 %v537
        %2998 = vmatprep.subr.mxu0 0.0
        %2999 = vmatpush2.msra.mxu0 %v536
        %3000 = vmatprep.subr.mxu0 0.0
        %3001 = vmatpush2.msra.mxu0 %v535
        %3002 = vmatprep.subr.mxu0 0.0
        %3003 = vmatpush2.msra.mxu0 %v534
        %3004 = vmatprep.subr.mxu0 0.0
        %3005 = vmatpush2.msra.mxu0 %v533
        %3006 = vmatprep.subr.mxu0 0.0
        %3007 = vmatpush2.msra.mxu0 %v532
        %3008 = vmatprep.subr.mxu0 0.0
        %3009 = vmatpush2.msra.mxu0 %v531
        %3010 = vmatprep.subr.mxu0 0.0
        %3011 = vmatpush2.msra.mxu0 %v530
        %3012 = vmatprep.mubr.f32.mxu0 %v2877
        %3013 = vmatmul.mubr.f32.gmra.mxu0 %v2876
        %v3014 = vpop.f32.mrf.mxu0
        %v3015 = vadd.f32 %v2945, %v3014
        %v3016 = vpop.f32.mrf.mxu0
        %3017 = vdwg.mxu0
        %v3018 = vmul.f32 %v3015, 0.00390625
        %v3019 = vmul.f32 %v2873, %v2873
        %v3020 = vsub.f32 %v3018, %v3019
        %v3021 = vadd.f32 %v3020, 1e-05
        %v3022 = vrsqrt.pop %v3021
        %3024 = vset.pattern.permute.xlu0 0
        %3025 = vperm.xlu0 %3024, %v2641
        %v3026 = vpop.permute.xlu0 %3025
        %v3028 = vmul.f32 %v3026, %v3022
        %v3029 = vmul.f32 %v3028, %v2873
        %3031 = vset.pattern.permute.xlu0 0
        %3032 = vperm.xlu0 %3031, %v2642
        %v3033 = vpop.permute.xlu0 %3032
        %v3035 = vsub.f32 %v3033, %v3029
        %v3037 = vsel %vm1045, %v3028, 0
        %3039 = vmatprep.subr.mxu0 0.0
        %3040 = vmatpush1.msra.mxu0 0.0
        %3041 = vmatprep.subr.mxu0 0.0
        %3042 = vmatpush1.msra.mxu0 0.0
        %3043 = vmatprep.subr.mxu0 0.0
        %3044 = vmatpush1.msra.mxu0 0.0
        %3045 = vmatprep.subr.mxu0 0.0
        %3046 = vmatpush1.msra.mxu0 0.0
        %3047 = vmatprep.subr.mxu0 0.0
        %3048 = vmatpush1.msra.mxu0 0.0
        %3049 = vmatprep.subr.mxu0 0.0
        %3050 = vmatpush1.msra.mxu0 0.0
        %3051 = vmatprep.subr.mxu0 0.0
        %3052 = vmatpush1.msra.mxu0 0.0
        %3053 = vmatprep.subr.mxu0 0.0
        %3054 = vmatpush1.msra.mxu0 0.0
        %3055 = vmatprep.subr.mxu0 0.0
        %3056 = vmatpush1.msra.mxu0 0.0
        %3057 = vmatprep.subr.mxu0 0.0
        %3058 = vmatpush1.msra.mxu0 0.0
        %3059 = vmatprep.subr.mxu0 0.0
        %3060 = vmatpush1.msra.mxu0 0.0
        %3061 = vmatprep.subr.mxu0 0.0
        %3062 = vmatpush1.msra.mxu0 0.0
        %3063 = vmatprep.subr.mxu0 0.0
        %3064 = vmatpush1.msra.mxu0 0.0
        %3065 = vmatprep.subr.mxu0 0.0
        %3066 = vmatpush1.msra.mxu0 0.0
        %3067 = vmatprep.subr.mxu0 0.0
        %3068 = vmatpush1.msra.mxu0 0.0
        %3069 = vmatprep.subr.mxu0 %v547
        %3070 = vmatpush1.msra.mxu0 %v546
        %3071 = vmatprep.subr.mxu0 0.0
        %3072 = vmatpush2.msra.mxu0 0.0
        %3073 = vmatprep.subr.mxu0 0.0
        %3074 = vmatpush2.msra.mxu0 0.0
        %3075 = vmatprep.subr.mxu0 0.0
        %3076 = vmatpush2.msra.mxu0 0.0
        %3077 = vmatprep.subr.mxu0 0.0
        %3078 = vmatpush2.msra.mxu0 0.0
        %3079 = vmatprep.subr.mxu0 0.0
        %3080 = vmatpush2.msra.mxu0 0.0
        %3081 = vmatprep.subr.mxu0 0.0
        %3082 = vmatpush2.msra.mxu0 0.0
        %3083 = vmatprep.subr.mxu0 0.0
        %3084 = vmatpush2.msra.mxu0 0.0
        %3085 = vmatprep.subr.mxu0 0.0
        %3086 = vmatpush2.msra.mxu0 0.0
        %3087 = vmatprep.subr.mxu0 0.0
        %3088 = vmatpush2.msra.mxu0 0.0
        %3089 = vmatprep.subr.mxu0 0.0
        %3090 = vmatpush2.msra.mxu0 0.0
        %3091 = vmatprep.subr.mxu0 0.0
        %3092 = vmatpush2.msra.mxu0 0.0
        %3093 = vmatprep.subr.mxu0 0.0
        %3094 = vmatpush2.msra.mxu0 0.0
        %3095 = vmatprep.subr.mxu0 0.0
        %3096 = vmatpush2.msra.mxu0 0.0
        %3097 = vmatprep.subr.mxu0 0.0
        %3098 = vmatpush2.msra.mxu0 0.0
        %3099 = vmatprep.subr.mxu0 0.0
        %3100 = vmatpush2.msra.mxu0 0.0
        %3101 = vmatprep.subr.mxu0 0.0
        %3102 = vmatpush2.msra.mxu0 0.0
        %3103 = vmatprep.mubr.f32.mxu0 0.0
        %3104 = vmatmul.mubr.f32.gmra.mxu0 %v3037
        %v3105 = vpop.f32.mrf.mxu0
        %v3106 = vadd.f32 0.0, %v3105
        %v3107 = vpop.f32.mrf.mxu0
        %v3108 = vadd.f32 0.0, %v3107
        %3109 = vdwg.mxu0
        %3110 = vmatprep.subr.mxu0 0.0
        %3111 = vmatpush1.msra.mxu0 0.0
        %3112 = vmatprep.subr.mxu0 0.0
        %3113 = vmatpush1.msra.mxu0 0.0
        %3114 = vmatprep.subr.mxu0 0.0
        %3115 = vmatpush1.msra.mxu0 0.0
        %3116 = vmatprep.subr.mxu0 0.0
        %3117 = vmatpush1.msra.mxu0 0.0
        %3118 = vmatprep.subr.mxu0 0.0
        %3119 = vmatpush1.msra.mxu0 0.0
        %3120 = vmatprep.subr.mxu0 0.0
        %3121 = vmatpush1.msra.mxu0 0.0
        %3122 = vmatprep.subr.mxu0 0.0
        %3123 = vmatpush1.msra.mxu0 0.0
        %3124 = vmatprep.subr.mxu0 0.0
        %3125 = vmatpush1.msra.mxu0 0.0
        %3126 = vmatprep.subr.mxu0 0.0
        %3127 = vmatpush1.msra.mxu0 0.0
        %3128 = vmatprep.subr.mxu0 0.0
        %3129 = vmatpush1.msra.mxu0 0.0
        %3130 = vmatprep.subr.mxu0 0.0
        %3131 = vmatpush1.msra.mxu0 0.0
        %3132 = vmatprep.subr.mxu0 0.0
        %3133 = vmatpush1.msra.mxu0 0.0
        %3134 = vmatprep.subr.mxu0 0.0
        %3135 = vmatpush1.msra.mxu0 0.0
        %3136 = vmatprep.subr.mxu0 0.0
        %3137 = vmatpush1.msra.mxu0 0.0
        %3138 = vmatprep.subr.mxu0 0.0
        %3139 = vmatpush1.msra.mxu0 0.0
        %3140 = vmatprep.subr.mxu0 %v549
        %3141 = vmatpush1.msra.mxu0 %v548
        %3142 = vmatprep.subr.mxu0 0.0
        %3143 = vmatpush2.msra.mxu0 0.0
        %3144 = vmatprep.subr.mxu0 0.0
        %3145 = vmatpush2.msra.mxu0 0.0
        %3146 = vmatprep.subr.mxu0 0.0
        %3147 = vmatpush2.msra.mxu0 0.0
        %3148 = vmatprep.subr.mxu0 0.0
        %3149 = vmatpush2.msra.mxu0 0.0
        %3150 = vmatprep.subr.mxu0 0.0
        %3151 = vmatpush2.msra.mxu0 0.0
        %3152 = vmatprep.subr.mxu0 0.0
        %3153 = vmatpush2.msra.mxu0 0.0
        %3154 = vmatprep.subr.mxu0 0.0
        %3155 = vmatpush2.msra.mxu0 0.0
        %3156 = vmatprep.subr.mxu0 0.0
        %3157 = vmatpush2.msra.mxu0 0.0
        %3158 = vmatprep.subr.mxu0 0.0
        %3159 = vmatpush2.msra.mxu0 0.0
        %3160 = vmatprep.subr.mxu0 0.0
        %3161 = vmatpush2.msra.mxu0 0.0
        %3162 = vmatprep.subr.mxu0 0.0
        %3163 = vmatpush2.msra.mxu0 0.0
        %3164 = vmatprep.subr.mxu0 0.0
        %3165 = vmatpush2.msra.mxu0 0.0
        %3166 = vmatprep.subr.mxu0 0.0
        %3167 = vmatpush2.msra.mxu0 0.0
        %3168 = vmatprep.subr.mxu0 0.0
        %3169 = vmatpush2.msra.mxu0 0.0
        %3170 = vmatprep.subr.mxu0 0.0
        %3171 = vmatpush2.msra.mxu0 0.0
        %3172 = vmatprep.subr.mxu0 0.0
        %3173 = vmatpush2.msra.mxu0 0.0
        %3174 = vmatprep.mubr.f32.mxu0 0.0
        %3175 = vmatmul.mubr.f32.gmra.mxu0 %v3037
        %v3176 = vpop.f32.mrf.mxu0
        %v3177 = vadd.f32 0.0, %v3176
        %v3178 = vpop.f32.mrf.mxu0
        %v3179 = vadd.f32 0.0, %v3178
        %3180 = vdwg.mxu0
        %v3181 = vmul.f32 %v2686, %v3106
        %v3182 = vmul.f32 %v2688, %v3108
        %v3183 = vmul.f32 %v2727, %v3177
        %v3184 = vmul.f32 %v2729, %v3179
        %v3186 = vsel %vm1045, %v3035, 0
        %3188 = vmatprep.subr.mxu0 0.0
        %3189 = vmatpush1.msra.mxu0 0.0
        %3190 = vmatprep.subr.mxu0 0.0
        %3191 = vmatpush1.msra.mxu0 0.0
        %3192 = vmatprep.subr.mxu0 0.0
        %3193 = vmatpush1.msra.mxu0 0.0
        %3194 = vmatprep.subr.mxu0 0.0
        %3195 = vmatpush1.msra.mxu0 0.0
        %3196 = vmatprep.subr.mxu0 0.0
        %3197 = vmatpush1.msra.mxu0 0.0
        %3198 = vmatprep.subr.mxu0 0.0
        %3199 = vmatpush1.msra.mxu0 0.0
        %3200 = vmatprep.subr.mxu0 0.0
        %3201 = vmatpush1.msra.mxu0 0.0
        %3202 = vmatprep.subr.mxu0 0.0
        %3203 = vmatpush1.msra.mxu0 0.0
        %3204 = vmatprep.subr.mxu0 0.0
        %3205 = vmatpush1.msra.mxu0 0.0
        %3206 = vmatprep.subr.mxu0 0.0
        %3207 = vmatpush1.msra.mxu0 0.0
        %3208 = vmatprep.subr.mxu0 0.0
        %3209 = vmatpush1.msra.mxu0 0.0
        %3210 = vmatprep.subr.mxu0 0.0
        %3211 = vmatpush1.msra.mxu0 0.0
        %3212 = vmatprep.subr.mxu0 0.0
        %3213 = vmatpush1.msra.mxu0 0.0
        %3214 = vmatprep.subr.mxu0 0.0
        %3215 = vmatpush1.msra.mxu0 0.0
        %3216 = vmatprep.subr.mxu0 0.0
        %3217 = vmatpush1.msra.mxu0 0.0
        %3218 = vmatprep.subr.mxu0 %v547
        %3219 = vmatpush1.msra.mxu0 %v546
        %3220 = vmatprep.subr.mxu0 0.0
        %3221 = vmatpush2.msra.mxu0 0.0
        %3222 = vmatprep.subr.mxu0 0.0
        %3223 = vmatpush2.msra.mxu0 0.0
        %3224 = vmatprep.subr.mxu0 0.0
        %3225 = vmatpush2.msra.mxu0 0.0
        %3226 = vmatprep.subr.mxu0 0.0
        %3227 = vmatpush2.msra.mxu0 0.0
        %3228 = vmatprep.subr.mxu0 0.0
        %3229 = vmatpush2.msra.mxu0 0.0
        %3230 = vmatprep.subr.mxu0 0.0
        %3231 = vmatpush2.msra.mxu0 0.0
        %3232 = vmatprep.subr.mxu0 0.0
        %3233 = vmatpush2.msra.mxu0 0.0
        %3234 = vmatprep.subr.mxu0 0.0
        %3235 = vmatpush2.msra.mxu0 0.0
        %3236 = vmatprep.subr.mxu0 0.0
        %3237 = vmatpush2.msra.mxu0 0.0
        %3238 = vmatprep.subr.mxu0 0.0
        %3239 = vmatpush2.msra.mxu0 0.0
        %3240 = vmatprep.subr.mxu0 0.0
        %3241 = vmatpush2.msra.mxu0 0.0
        %3242 = vmatprep.subr.mxu0 0.0
        %3243 = vmatpush2.msra.mxu0 0.0
        %3244 = vmatprep.subr.mxu0 0.0
        %3245 = vmatpush2.msra.mxu0 0.0
        %3246 = vmatprep.subr.mxu0 0.0
        %3247 = vmatpush2.msra.mxu0 0.0
        %3248 = vmatprep.subr.mxu0 0.0
        %3249 = vmatpush2.msra.mxu0 0.0
        %3250 = vmatprep.subr.mxu0 0.0
        %3251 = vmatpush2.msra.mxu0 0.0
        %3252 = vmatprep.mubr.f32.mxu0 0.0
        %3253 = vmatmul.mubr.f32.gmra.mxu0 %v3186
        %v3254 = vpop.f32.mrf.mxu0
        %v3255 = vadd.f32 0.0, %v3254
        %v3256 = vpop.f32.mrf.mxu0
        %v3257 = vadd.f32 0.0, %v3256
        %3258 = vdwg.mxu0
        %3259 = vmatprep.subr.mxu0 0.0
        %3260 = vmatpush1.msra.mxu0 0.0
        %3261 = vmatprep.subr.mxu0 0.0
        %3262 = vmatpush1.msra.mxu0 0.0
        %3263 = vmatprep.subr.mxu0 0.0
        %3264 = vmatpush1.msra.mxu0 0.0
        %3265 = vmatprep.subr.mxu0 0.0
        %3266 = vmatpush1.msra.mxu0 0.0
        %3267 = vmatprep.subr.mxu0 0.0
        %3268 = vmatpush1.msra.mxu0 0.0
        %3269 = vmatprep.subr.mxu0 0.0
        %3270 = vmatpush1.msra.mxu0 0.0
        %3271 = vmatprep.subr.mxu0 0.0
        %3272 = vmatpush1.msra.mxu0 0.0
        %3273 = vmatprep.subr.mxu0 0.0
        %3274 = vmatpush1.msra.mxu0 0.0
        %3275 = vmatprep.subr.mxu0 0.0
        %3276 = vmatpush1.msra.mxu0 0.0
        %3277 = vmatprep.subr.mxu0 0.0
        %3278 = vmatpush1.msra.mxu0 0.0
        %3279 = vmatprep.subr.mxu0 0.0
        %3280 = vmatpush1.msra.mxu0 0.0
        %3281 = vmatprep.subr.mxu0 0.0
        %3282 = vmatpush1.msra.mxu0 0.0
        %3283 = vmatprep.subr.mxu0 0.0
        %3284 = vmatpush1.msra.mxu0 0.0
        %3285 = vmatprep.subr.mxu0 0.0
        %3286 = vmatpush1.msra.mxu0 0.0
        %3287 = vmatprep.subr.mxu0 0.0
        %3288 = vmatpush1.msra.mxu0 0.0
        %3289 = vmatprep.subr.mxu0 %v549
        %3290 = vmatpush1.msra.mxu0 %v548
        %3291 = vmatprep.subr.mxu0 0.0
        %3292 = vmatpush2.msra.mxu0 0.0
        %3293 = vmatprep.subr.mxu0 0.0
        %3294 = vmatpush2.msra.mxu0 0.0
        %3295 = vmatprep.subr.mxu0 0.0
        %3296 = vmatpush2.msra.mxu0 0.0
        %3297 = vmatprep.subr.mxu0 0.0
        %3298 = vmatpush2.msra.mxu0 0.0
        %3299 = vmatprep.subr.mxu0 0.0
        %3300 = vmatpush2.msra.mxu0 0.0
        %3301 = vmatprep.subr.mxu0 0.0
        %3302 = vmatpush2.msra.mxu0 0.0
        %3303 = vmatprep.subr.mxu0 0.0
        %3304 = vmatpush2.msra.mxu0 0.0
        %3305 = vmatprep.subr.mxu0 0.0
        %3306 = vmatpush2.msra.mxu0 0.0
        %3307 = vmatprep.subr.mxu0 0.0
        %3308 = vmatpush2.msra.mxu0 0.0
        %3309 = vmatprep.subr.mxu0 0.0
        %3310 = vmatpush2.msra.mxu0 0.0
        %3311 = vmatprep.subr.mxu0 0.0
        %3312 = vmatpush2.msra.mxu0 0.0
        %3313 = vmatprep.subr.mxu0 0.0
        %3314 = vmatpush2.msra.mxu0 0.0
        %3315 = vmatprep.subr.mxu0 0.0
        %3316 = vmatpush2.msra.mxu0 0.0
        %3317 = vmatprep.subr.mxu0 0.0
        %3318 = vmatpush2.msra.mxu0 0.0
        %3319 = vmatprep.subr.mxu0 0.0
        %3320 = vmatpush2.msra.mxu0 0.0
        %3321 = vmatprep.subr.mxu0 0.0
        %3322 = vmatpush2.msra.mxu0 0.0
        %3323 = vmatprep.mubr.f32.mxu0 0.0
        %3324 = vmatmul.mubr.f32.gmra.mxu0 %v3186
        %v3325 = vpop.f32.mrf.mxu0
        %v3326 = vadd.f32 0.0, %v3325
        %v3327 = vpop.f32.mrf.mxu0
        %v3328 = vadd.f32 0.0, %v3327
        %3329 = vdwg.mxu0
        %v3330 = vadd.f32 %v3181, %v3255
        %v3331 = vadd.f32 %v3182, %v3257
        %v3332 = vadd.f32 %v3183, %v3326
        %v3333 = vadd.f32 %v3184, %v3328
        %v3334 = vmul.f32 %v3330, 0.5
        %v3335 = vmul.f32 %v3331, 0.5
        %v3336 = vmul.f32 %v3332, 0.5
        %v3337 = vmul.f32 %v3333, 0.5
        %v3338 = vmul.f32 %v3330, 0.70710677
        %v3339 = vmul.f32 %v3331, 0.70710677
        %v3340 = vmul.f32 %v3332, 0.70710677
        %v3341 = vmul.f32 %v3333, 0.70710677
        %v3342 = vand.u32 2147483647, %v3338
        %v3343 = vand.u32 2147483647, %v3339
        %v3344 = vand.u32 2147483647, %v3340
        %v3345 = vand.u32 2147483647, %v3341
        %v3346 = vmul.f32 %v3342, 0.3275911
        %v3347 = vmul.f32 %v3343, 0.3275911
        %v3348 = vmul.f32 %v3344, 0.3275911
        %v3349 = vmul.f32 %v3345, 0.3275911
        %v3350 = vadd.f32 %v3346, 1.0
        %v3351 = vadd.f32 %v3347, 1.0
        %v3352 = vadd.f32 %v3348, 1.0
        %v3353 = vadd.f32 %v3349, 1.0
        %v3354 = vrcp.pop %v3350
        %v3355 = vmul.f32 1.0, %v3354
        %v3356 = vrcp.pop %v3351
        %v3357 = vmul.f32 1.0, %v3356
        %v3358 = vrcp.pop %v3352
        %v3359 = vmul.f32 1.0, %v3358
        %v3360 = vrcp.pop %v3353
        %v3361 = vmul.f32 1.0, %v3360
        %v3362 = vmul.f32 %v3355, 1.0614054
        %v3363 = vmul.f32 %v3357, 1.0614054
        %v3364 = vmul.f32 %v3359, 1.0614054
        %v3365 = vmul.f32 %v3361, 1.0614054
        %v3366 = vadd.f32 %v3362, -1.4531521
        %v3367 = vadd.f32 %v3363, -1.4531521
        %v3368 = vadd.f32 %v3364, -1.4531521
        %v3369 = vadd.f32 %v3365, -1.4531521
        %v3370 = vmul.f32 %v3366, %v3355
        %v3371 = vmul.f32 %v3367, %v3357
        %v3372 = vmul.f32 %v3368, %v3359
        %v3373 = vmul.f32 %v3369, %v3361
        %v3374 = vadd.f32 %v3370, 1.4214138
        %v3375 = vadd.f32 %v3371, 1.4214138
        %v3376 = vadd.f32 %v3372, 1.4214138
        %v3377 = vadd.f32 %v3373, 1.4214138
        %v3378 = vmul.f32 %v3374, %v3355
        %v3379 = vmul.f32 %v3375, %v3357
        %v3380 = vmul.f32 %v3376, %v3359
        %v3381 = vmul.f32 %v3377, %v3361
        %v3382 = vadd.f32 %v3378, -0.28449672
        %v3383 = vadd.f32 %v3379, -0.28449672
        %v3384 = vadd.f32 %v3380, -0.28449672
        %v3385 = vadd.f32 %v3381, -0.28449672
        %v3386 = vmul.f32 %v3382, %v3355
        %v3387 = vmul.f32 %v3383, %v3357
        %v3388 = vmul.f32 %v3384, %v3359
        %v3389 = vmul.f32 %v3385, %v3361
        %v3390 = vadd.f32 %v3386, 0.2548296
        %v3391 = vadd.f32 %v3387, 0.2548296
        %v3392 = vadd.f32 %v3388, 0.2548296
        %v3393 = vadd.f32 %v3389, 0.2548296
        %v3394 = vmul.f32 %v3390, %v3355
        %v3395 = vmul.f32 %v3391, %v3357
        %v3396 = vmul.f32 %v3392, %v3359
        %v3397 = vmul.f32 %v3393, %v3361
        %v3398 = vsub.f32 0.0, %v3342
        %v3399 = vsub.f32 0.0, %v3343
        %v3400 = vsub.f32 0.0, %v3344
        %v3401 = vsub.f32 0.0, %v3345
        %v3402 = vmul.f32 %v3398, %v3342
        %v3403 = vmul.f32 %v3399, %v3343
        %v3404 = vmul.f32 %v3400, %v3344
        %v3405 = vmul.f32 %v3401, %v3345
        %v3406 = vmul.f32 %v3402, 1.442695
        %v3407 = vpow.pop %v3406
        %v3408 = vmul.f32 %v3403, 1.442695
        %v3409 = vpow.pop %v3408
        %v3410 = vmul.f32 %v3404, 1.442695
        %v3411 = vpow.pop %v3410
        %v3412 = vmul.f32 %v3405, 1.442695
        %v3413 = vpow.pop %v3412
        %v3414 = vmul.f32 %v3394, %v3407
        %v3415 = vmul.f32 %v3395, %v3409
        %v3416 = vmul.f32 %v3396, %v3411
        %v3417 = vmul.f32 %v3397, %v3413
        %v3418 = vsub.f32 1.0, %v3414
        %v3419 = vsub.f32 1.0, %v3415
        %v3420 = vsub.f32 1.0, %v3416
        %v3421 = vsub.f32 1.0, %v3417
        %vm3422 = vcmp.ge.f32.partialorder %v3338, 0.0
        %vm3423 = vcmp.ge.f32.partialorder %v3339, 0.0
        %vm3424 = vcmp.ge.f32.partialorder %v3340, 0.0
        %vm3425 = vcmp.ge.f32.partialorder %v3341, 0.0
        %v3426 = vsub.f32 0.0, %v3418
        %v3427 = vsub.f32 0.0, %v3419
        %v3428 = vsub.f32 0.0, %v3420
        %v3429 = vsub.f32 0.0, %v3421
        %v3430 = vsel %vm3422, %v3418, %v3426
        %v3431 = vsel %vm3423, %v3419, %v3427
        %v3432 = vsel %vm3424, %v3420, %v3428
        %v3433 = vsel %vm3425, %v3421, %v3429
        %v3434 = vadd.f32 %v3430, 1.0
        %v3435 = vadd.f32 %v3431, 1.0
        %v3436 = vadd.f32 %v3432, 1.0
        %v3437 = vadd.f32 %v3433, 1.0
        %v3438 = vmul.f32 %v3334, %v3434
        %v3439 = vmul.f32 %v3335, %v3435
        %v3440 = vmul.f32 %v3336, %v3436
        %v3441 = vmul.f32 %v3337, %v3437
        %v3442 = vld [vmem:[%s431 + $0x40] sm:$0xff]
        %v3443 = vld [vmem:[%s431 + $0x48] sm:$0xff]
        %v3444 = vunpack.c.l.bf16 %v3442
        %v3445 = vunpack.c.h.bf16 %v3442
        %v3446 = vunpack.c.l.bf16 %v3443
        %v3447 = vunpack.c.h.bf16 %v3443
        %v3448 = vadd.f32 %v3438, %v3444
        %v3449 = vadd.f32 %v3439, %v3445
        %v3450 = vadd.f32 %v3440, %v3446
        %v3451 = vadd.f32 %v3441, %v3447
        %v3452 = vld [vmem:[%s7 + $0x50] sm:$0xff]
        %v3453 = vld [vmem:[%s7 + $0x58] sm:$0xff]
        %v3454 = vld [vmem:[%s5] sm:$0xf]
        %v3455 = vpack.c.bf16 %v3448, %v3448
        %v3456 = vpack.c.bf16 %v3449, %v3449
        %v3457 = vpack.c.bf16 %v3450, %v3450
        %v3458 = vpack.c.bf16 %v3451, %v3451
        %v3460 = vsel %vm1045, %v3454, 0
        %vm3462 = vcmask 1043456
        %v3464 = vsel %vm3462, %v3455, 0
        %v3467 = vsel %vm3462, %v3456, 0
        %v3470 = vsel %vm3462, %v3457, 0
        %v3473 = vsel %vm3462, %v3458, 0
        %3475 = vmatprep.subr.bf16.mxu0 0
        %3476 = vmatpush1.bf16.msra.mxu0 0
        %3477 = vmatprep.subr.bf16.mxu0 0
        %3478 = vmatpush1.bf16.msra.mxu0 0
        %3479 = vmatprep.subr.bf16.mxu0 0
        %3480 = vmatpush1.bf16.msra.mxu0 0
        %3481 = vmatprep.subr.bf16.mxu0 0
        %3482 = vmatpush1.bf16.msra.mxu0 0
        %3483 = vmatprep.subr.bf16.mxu0 0
        %3484 = vmatpush1.bf16.msra.mxu0 0
        %3485 = vmatprep.subr.bf16.mxu0 0
        %3486 = vmatpush1.bf16.msra.mxu0 0
        %3487 = vmatprep.subr.bf16.mxu0 0
        %3488 = vmatpush1.bf16.msra.mxu0 0
        %3489 = vmatprep.subr.bf16.mxu0 %v3467
        %3490 = vmatpush1.bf16.msra.mxu0 %v3464
        %3491 = vmatprep.subr.bf16.mxu0 0
        %3492 = vmatpush2.bf16.msra.mxu0 0
        %3493 = vmatprep.subr.bf16.mxu0 0
        %3494 = vmatpush2.bf16.msra.mxu0 0
        %3495 = vmatprep.subr.bf16.mxu0 0
        %3496 = vmatpush2.bf16.msra.mxu0 0
        %3497 = vmatprep.subr.bf16.mxu0 0
        %3498 = vmatpush2.bf16.msra.mxu0 0
        %3499 = vmatprep.subr.bf16.mxu0 0
        %3500 = vmatpush2.bf16.msra.mxu0 0
        %3501 = vmatprep.subr.bf16.mxu0 0
        %3502 = vmatpush2.bf16.msra.mxu0 0
        %3503 = vmatprep.subr.bf16.mxu0 0
        %3504 = vmatpush2.bf16.msra.mxu0 0
        %3505 = vmatprep.subr.bf16.mxu0 0
        %3506 = vmatpush2.bf16.msra.mxu0 0
        %3507 = vmatprep.mubr.bf16.mxu0 0
        %3508 = vmatmul.mubr.bf16.gmra.mxu0 %v3460
        %v3509 = vpop.f32.mrf.mxu0
        %v3510 = vadd.f32 0.0, %v3509
        %v3511 = vpop.f32.mrf.mxu0
        %v3512 = vadd.f32 0.0, %v3511
        %v3513 = vpop.f32.mrf.mxu0
        %v3514 = vpop.f32.mrf.mxu0
        %3515 = vdwg.mxu0
        %3516 = vmatprep.subr.bf16.mxu0 0
        %3517 = vmatpush1.bf16.msra.mxu0 0
        %3518 = vmatprep.subr.bf16.mxu0 0
        %3519 = vmatpush1.bf16.msra.mxu0 0
        %3520 = vmatprep.subr.bf16.mxu0 0
        %3521 = vmatpush1.bf16.msra.mxu0 0
        %3522 = vmatprep.subr.bf16.mxu0 0
        %3523 = vmatpush1.bf16.msra.mxu0 0
        %3524 = vmatprep.subr.bf16.mxu0 0
        %3525 = vmatpush1.bf16.msra.mxu0 0
        %3526 = vmatprep.subr.bf16.mxu0 0
        %3527 = vmatpush1.bf16.msra.mxu0 0
        %3528 = vmatprep.subr.bf16.mxu0 0
        %3529 = vmatpush1.bf16.msra.mxu0 0
        %3530 = vmatprep.subr.bf16.mxu0 %v3473
        %3531 = vmatpush1.bf16.msra.mxu0 %v3470
        %3532 = vmatprep.subr.bf16.mxu0 0
        %3533 = vmatpush2.bf16.msra.mxu0 0
        %3534 = vmatprep.subr.bf16.mxu0 0
        %3535 = vmatpush2.bf16.msra.mxu0 0
        %3536 = vmatprep.subr.bf16.mxu0 0
        %3537 = vmatpush2.bf16.msra.mxu0 0
        %3538 = vmatprep.subr.bf16.mxu0 0
        %3539 = vmatpush2.bf16.msra.mxu0 0
        %3540 = vmatprep.subr.bf16.mxu0 0
        %3541 = vmatpush2.bf16.msra.mxu0 0
        %3542 = vmatprep.subr.bf16.mxu0 0
        %3543 = vmatpush2.bf16.msra.mxu0 0
        %3544 = vmatprep.subr.bf16.mxu0 0
        %3545 = vmatpush2.bf16.msra.mxu0 0
        %3546 = vmatprep.subr.bf16.mxu0 0
        %3547 = vmatpush2.bf16.msra.mxu0 0
        %3548 = vmatprep.mubr.bf16.mxu0 0
        %3549 = vmatmul.mubr.bf16.gmra.mxu0 %v3460
        %v3550 = vpop.f32.mrf.mxu0
        %v3551 = vadd.f32 0.0, %v3550
        %v3552 = vpop.f32.mrf.mxu0
        %v3553 = vadd.f32 0.0, %v3552
        %v3554 = vpop.f32.mrf.mxu0
        %v3555 = vpop.f32.mrf.mxu0
        %3556 = vdwg.mxu0
        %3557 = vmatprep.subr.mxu0 0.0
        %3558 = vmatpush1.msra.mxu0 %v497
        %3559 = vmatprep.subr.mxu0 0.0
        %3560 = vmatpush1.msra.mxu0 %v496
        %3561 = vmatprep.subr.mxu0 0.0
        %3562 = vmatpush1.msra.mxu0 %v495
        %3563 = vmatprep.subr.mxu0 0.0
        %3564 = vmatpush1.msra.mxu0 %v494
        %3565 = vmatprep.subr.mxu0 0.0
        %3566 = vmatpush1.msra.mxu0 %v493
        %3567 = vmatprep.subr.mxu0 0.0
        %3568 = vmatpush1.msra.mxu0 %v492
        %3569 = vmatprep.subr.mxu0 0.0
        %3570 = vmatpush1.msra.mxu0 %v491
        %3571 = vmatprep.subr.mxu0 0.0
        %3572 = vmatpush1.msra.mxu0 %v490
        %3573 = vmatprep.subr.mxu0 0.0
        %3574 = vmatpush1.msra.mxu0 %v489
        %3575 = vmatprep.subr.mxu0 0.0
        %3576 = vmatpush1.msra.mxu0 %v488
        %3577 = vmatprep.subr.mxu0 0.0
        %3578 = vmatpush1.msra.mxu0 %v487
        %3579 = vmatprep.subr.mxu0 0.0
        %3580 = vmatpush1.msra.mxu0 %v486
        %3581 = vmatprep.subr.mxu0 0.0
        %3582 = vmatpush1.msra.mxu0 %v485
        %3583 = vmatprep.subr.mxu0 0.0
        %3584 = vmatpush1.msra.mxu0 %v484
        %3585 = vmatprep.subr.mxu0 0.0
        %3586 = vmatpush1.msra.mxu0 %v483
        %3587 = vmatprep.subr.mxu0 0.0
        %3588 = vmatpush1.msra.mxu0 %v482
        %3589 = vmatprep.subr.mxu0 0.0
        %3590 = vmatpush2.msra.mxu0 %v513
        %3591 = vmatprep.subr.mxu0 0.0
        %3592 = vmatpush2.msra.mxu0 %v512
        %3593 = vmatprep.subr.mxu0 0.0
        %3594 = vmatpush2.msra.mxu0 %v511
        %3595 = vmatprep.subr.mxu0 0.0
        %3596 = vmatpush2.msra.mxu0 %v510
        %3597 = vmatprep.subr.mxu0 0.0
        %3598 = vmatpush2.msra.mxu0 %v509
        %3599 = vmatprep.subr.mxu0 0.0
        %3600 = vmatpush2.msra.mxu0 %v508
        %3601 = vmatprep.subr.mxu0 0.0
        %3602 = vmatpush2.msra.mxu0 %v507
        %3603 = vmatprep.subr.mxu0 0.0
        %3604 = vmatpush2.msra.mxu0 %v506
        %3605 = vmatprep.subr.mxu0 0.0
        %3606 = vmatpush2.msra.mxu0 %v505
        %3607 = vmatprep.subr.mxu0 0.0
        %3608 = vmatpush2.msra.mxu0 %v504
        %3609 = vmatprep.subr.mxu0 0.0
        %3610 = vmatpush2.msra.mxu0 %v503
        %3611 = vmatprep.subr.mxu0 0.0
        %3612 = vmatpush2.msra.mxu0 %v502
        %3613 = vmatprep.subr.mxu0 0.0
        %3614 = vmatpush2.msra.mxu0 %v501
        %3615 = vmatprep.subr.mxu0 0.0
        %3616 = vmatpush2.msra.mxu0 %v500
        %3617 = vmatprep.subr.mxu0 0.0
        %3618 = vmatpush2.msra.mxu0 %v499
        %3619 = vmatprep.subr.mxu0 0.0
        %3620 = vmatpush2.msra.mxu0 %v498
        %3621 = vmatprep.mubr.f32.mxu0 %v3512
        %3622 = vmatmul.mubr.f32.gmra.mxu0 %v3510
        %v3623 = vpop.f32.mrf.mxu0
        %v3624 = vadd.f32 0.0, %v3623
        %v3625 = vpop.f32.mrf.mxu0
        %3626 = vdwg.mxu0
        %3627 = vmatprep.subr.mxu0 0.0
        %3628 = vmatpush1.msra.mxu0 %v529
        %3629 = vmatprep.subr.mxu0 0.0
        %3630 = vmatpush1.msra.mxu0 %v528
        %3631 = vmatprep.subr.mxu0 0.0
        %3632 = vmatpush1.msra.mxu0 %v527
        %3633 = vmatprep.subr.mxu0 0.0
        %3634 = vmatpush1.msra.mxu0 %v526
        %3635 = vmatprep.subr.mxu0 0.0
        %3636 = vmatpush1.msra.mxu0 %v525
        %3637 = vmatprep.subr.mxu0 0.0
        %3638 = vmatpush1.msra.mxu0 %v524
        %3639 = vmatprep.subr.mxu0 0.0
        %3640 = vmatpush1.msra.mxu0 %v523
        %3641 = vmatprep.subr.mxu0 0.0
        %3642 = vmatpush1.msra.mxu0 %v522
        %3643 = vmatprep.subr.mxu0 0.0
        %3644 = vmatpush1.msra.mxu0 %v521
        %3645 = vmatprep.subr.mxu0 0.0
        %3646 = vmatpush1.msra.mxu0 %v520
        %3647 = vmatprep.subr.mxu0 0.0
        %3648 = vmatpush1.msra.mxu0 %v519
        %3649 = vmatprep.subr.mxu0 0.0
        %3650 = vmatpush1.msra.mxu0 %v518
        %3651 = vmatprep.subr.mxu0 0.0
        %3652 = vmatpush1.msra.mxu0 %v517
        %3653 = vmatprep.subr.mxu0 0.0
        %3654 = vmatpush1.msra.mxu0 %v516
        %3655 = vmatprep.subr.mxu0 0.0
        %3656 = vmatpush1.msra.mxu0 %v515
        %3657 = vmatprep.subr.mxu0 0.0
        %3658 = vmatpush1.msra.mxu0 %v514
        %3659 = vmatprep.subr.mxu0 0.0
        %3660 = vmatpush2.msra.mxu0 %v545
        %3661 = vmatprep.subr.mxu0 0.0
        %3662 = vmatpush2.msra.mxu0 %v544
        %3663 = vmatprep.subr.mxu0 0.0
        %3664 = vmatpush2.msra.mxu0 %v543
        %3665 = vmatprep.subr.mxu0 0.0
        %3666 = vmatpush2.msra.mxu0 %v542
        %3667 = vmatprep.subr.mxu0 0.0
        %3668 = vmatpush2.msra.mxu0 %v541
        %3669 = vmatprep.subr.mxu0 0.0
        %3670 = vmatpush2.msra.mxu0 %v540
        %3671 = vmatprep.subr.mxu0 0.0
        %3672 = vmatpush2.msra.mxu0 %v539
        %3673 = vmatprep.subr.mxu0 0.0
        %3674 = vmatpush2.msra.mxu0 %v538
        %3675 = vmatprep.subr.mxu0 0.0
        %3676 = vmatpush2.msra.mxu0 %v537
        %3677 = vmatprep.subr.mxu0 0.0
        %3678 = vmatpush2.msra.mxu0 %v536
        %3679 = vmatprep.subr.mxu0 0.0
        %3680 = vmatpush2.msra.mxu0 %v535
        %3681 = vmatprep.subr.mxu0 0.0
        %3682 = vmatpush2.msra.mxu0 %v534
        %3683 = vmatprep.subr.mxu0 0.0
        %3684 = vmatpush2.msra.mxu0 %v533
        %3685 = vmatprep.subr.mxu0 0.0
        %3686 = vmatpush2.msra.mxu0 %v532
        %3687 = vmatprep.subr.mxu0 0.0
        %3688 = vmatpush2.msra.mxu0 %v531
        %3689 = vmatprep.subr.mxu0 0.0
        %3690 = vmatpush2.msra.mxu0 %v530
        %3691 = vmatprep.mubr.f32.mxu0 %v3553
        %3692 = vmatmul.mubr.f32.gmra.mxu0 %v3551
        %v3693 = vpop.f32.mrf.mxu0
        %v3694 = vadd.f32 %v3624, %v3693
        %v3695 = vpop.f32.mrf.mxu0
        %3696 = vdwg.mxu0
        %v3697 = vmul.f32 %v3694, 0.00390625
        %v3698 = vmul.f32 %v3510, %v3510
        %v3699 = vmul.f32 %v3512, %v3512
        %v3700 = vmul.f32 %v3551, %v3551
        %v3701 = vmul.f32 %v3553, %v3553
        %3702 = vmatprep.subr.mxu0 0.0
        %3703 = vmatpush1.msra.mxu0 %v497
        %3704 = vmatprep.subr.mxu0 0.0
        %3705 = vmatpush1.msra.mxu0 %v496
        %3706 = vmatprep.subr.mxu0 0.0
        %3707 = vmatpush1.msra.mxu0 %v495
        %3708 = vmatprep.subr.mxu0 0.0
        %3709 = vmatpush1.msra.mxu0 %v494
        %3710 = vmatprep.subr.mxu0 0.0
        %3711 = vmatpush1.msra.mxu0 %v493
        %3712 = vmatprep.subr.mxu0 0.0
        %3713 = vmatpush1.msra.mxu0 %v492
        %3714 = vmatprep.subr.mxu0 0.0
        %3715 = vmatpush1.msra.mxu0 %v491
        %3716 = vmatprep.subr.mxu0 0.0
        %3717 = vmatpush1.msra.mxu0 %v490
        %3718 = vmatprep.subr.mxu0 0.0
        %3719 = vmatpush1.msra.mxu0 %v489
        %3720 = vmatprep.subr.mxu0 0.0
        %3721 = vmatpush1.msra.mxu0 %v488
        %3722 = vmatprep.subr.mxu0 0.0
        %3723 = vmatpush1.msra.mxu0 %v487
        %3724 = vmatprep.subr.mxu0 0.0
        %3725 = vmatpush1.msra.mxu0 %v486
        %3726 = vmatprep.subr.mxu0 0.0
        %3727 = vmatpush1.msra.mxu0 %v485
        %3728 = vmatprep.subr.mxu0 0.0
        %3729 = vmatpush1.msra.mxu0 %v484
        %3730 = vmatprep.subr.mxu0 0.0
        %3731 = vmatpush1.msra.mxu0 %v483
        %3732 = vmatprep.subr.mxu0 0.0
        %3733 = vmatpush1.msra.mxu0 %v482
        %3734 = vmatprep.subr.mxu0 0.0
        %3735 = vmatpush2.msra.mxu0 %v513
        %3736 = vmatprep.subr.mxu0 0.0
        %3737 = vmatpush2.msra.mxu0 %v512
        %3738 = vmatprep.subr.mxu0 0.0
        %3739 = vmatpush2.msra.mxu0 %v511
        %3740 = vmatprep.subr.mxu0 0.0
        %3741 = vmatpush2.msra.mxu0 %v510
        %3742 = vmatprep.subr.mxu0 0.0
        %3743 = vmatpush2.msra.mxu0 %v509
        %3744 = vmatprep.subr.mxu0 0.0
        %3745 = vmatpush2.msra.mxu0 %v508
        %3746 = vmatprep.subr.mxu0 0.0
        %3747 = vmatpush2.msra.mxu0 %v507
        %3748 = vmatprep.subr.mxu0 0.0
        %3749 = vmatpush2.msra.mxu0 %v506
        %3750 = vmatprep.subr.mxu0 0.0
        %3751 = vmatpush2.msra.mxu0 %v505
        %3752 = vmatprep.subr.mxu0 0.0
        %3753 = vmatpush2.msra.mxu0 %v504
        %3754 = vmatprep.subr.mxu0 0.0
        %3755 = vmatpush2.msra.mxu0 %v503
        %3756 = vmatprep.subr.mxu0 0.0
        %3757 = vmatpush2.msra.mxu0 %v502
        %3758 = vmatprep.subr.mxu0 0.0
        %3759 = vmatpush2.msra.mxu0 %v501
        %3760 = vmatprep.subr.mxu0 0.0
        %3761 = vmatpush2.msra.mxu0 %v500
        %3762 = vmatprep.subr.mxu0 0.0
        %3763 = vmatpush2.msra.mxu0 %v499
        %3764 = vmatprep.subr.mxu0 0.0
        %3765 = vmatpush2.msra.mxu0 %v498
        %3766 = vmatprep.mubr.f32.mxu0 %v3699
        %3767 = vmatmul.mubr.f32.gmra.mxu0 %v3698
        %v3768 = vpop.f32.mrf.mxu0
        %v3769 = vadd.f32 0.0, %v3768
        %v3770 = vpop.f32.mrf.mxu0
        %3771 = vdwg.mxu0
        %3772 = vmatprep.subr.mxu0 0.0
        %3773 = vmatpush1.msra.mxu0 %v529
        %3774 = vmatprep.subr.mxu0 0.0
        %3775 = vmatpush1.msra.mxu0 %v528
        %3776 = vmatprep.subr.mxu0 0.0
        %3777 = vmatpush1.msra.mxu0 %v527
        %3778 = vmatprep.subr.mxu0 0.0
        %3779 = vmatpush1.msra.mxu0 %v526
        %3780 = vmatprep.subr.mxu0 0.0
        %3781 = vmatpush1.msra.mxu0 %v525
        %3782 = vmatprep.subr.mxu0 0.0
        %3783 = vmatpush1.msra.mxu0 %v524
        %3784 = vmatprep.subr.mxu0 0.0
        %3785 = vmatpush1.msra.mxu0 %v523
        %3786 = vmatprep.subr.mxu0 0.0
        %3787 = vmatpush1.msra.mxu0 %v522
        %3788 = vmatprep.subr.mxu0 0.0
        %3789 = vmatpush1.msra.mxu0 %v521
        %3790 = vmatprep.subr.mxu0 0.0
        %3791 = vmatpush1.msra.mxu0 %v520
        %3792 = vmatprep.subr.mxu0 0.0
        %3793 = vmatpush1.msra.mxu0 %v519
        %3794 = vmatprep.subr.mxu0 0.0
        %3795 = vmatpush1.msra.mxu0 %v518
        %3796 = vmatprep.subr.mxu0 0.0
        %3797 = vmatpush1.msra.mxu0 %v517
        %3798 = vmatprep.subr.mxu0 0.0
        %3799 = vmatpush1.msra.mxu0 %v516
        %3800 = vmatprep.subr.mxu0 0.0
        %3801 = vmatpush1.msra.mxu0 %v515
        %3802 = vmatprep.subr.mxu0 0.0
        %3803 = vmatpush1.msra.mxu0 %v514
        %3804 = vmatprep.subr.mxu0 0.0
        %3805 = vmatpush2.msra.mxu0 %v545
        %3806 = vmatprep.subr.mxu0 0.0
        %3807 = vmatpush2.msra.mxu0 %v544
        %3808 = vmatprep.subr.mxu0 0.0
        %3809 = vmatpush2.msra.mxu0 %v543
        %3810 = vmatprep.subr.mxu0 0.0
        %3811 = vmatpush2.msra.mxu0 %v542
        %3812 = vmatprep.subr.mxu0 0.0
        %3813 = vmatpush2.msra.mxu0 %v541
        %3814 = vmatprep.subr.mxu0 0.0
        %3815 = vmatpush2.msra.mxu0 %v540
        %3816 = vmatprep.subr.mxu0 0.0
        %3817 = vmatpush2.msra.mxu0 %v539
        %3818 = vmatprep.subr.mxu0 0.0
        %3819 = vmatpush2.msra.mxu0 %v538
        %3820 = vmatprep.subr.mxu0 0.0
        %3821 = vmatpush2.msra.mxu0 %v537
        %3822 = vmatprep.subr.mxu0 0.0
        %3823 = vmatpush2.msra.mxu0 %v536
        %3824 = vmatprep.subr.mxu0 0.0
        %3825 = vmatpush2.msra.mxu0 %v535
        %3826 = vmatprep.subr.mxu0 0.0
        %3827 = vmatpush2.msra.mxu0 %v534
        %3828 = vmatprep.subr.mxu0 0.0
        %3829 = vmatpush2.msra.mxu0 %v533
        %3830 = vmatprep.subr.mxu0 0.0
        %3831 = vmatpush2.msra.mxu0 %v532
        %3832 = vmatprep.subr.mxu0 0.0
        %3833 = vmatpush2.msra.mxu0 %v531
        %3834 = vmatprep.subr.mxu0 0.0
        %3835 = vmatpush2.msra.mxu0 %v530
        %3836 = vmatprep.mubr.f32.mxu0 %v3701
        %3837 = vmatmul.mubr.f32.gmra.mxu0 %v3700
        %v3838 = vpop.f32.mrf.mxu0
        %v3839 = vadd.f32 %v3769, %v3838
        %v3840 = vpop.f32.mrf.mxu0
        %3841 = vdwg.mxu0
        %v3842 = vmul.f32 %v3839, 0.00390625
        %v3843 = vmul.f32 %v3697, %v3697
        %v3844 = vsub.f32 %v3842, %v3843
        %v3845 = vadd.f32 %v3844, 1e-05
        %v3846 = vrsqrt.pop %v3845
        %3848 = vset.pattern.permute.xlu0 0
        %3849 = vperm.xlu0 %3848, %v3452
        %v3850 = vpop.permute.xlu0 %3849
        %v3852 = vmul.f32 %v3850, %v3846
        %v3853 = vmul.f32 %v3852, %v3697
        %3855 = vset.pattern.permute.xlu0 0
        %3856 = vperm.xlu0 %3855, %v3453
        %v3857 = vpop.permute.xlu0 %3856
        %v3859 = vsub.f32 %v3857, %v3853
        %v3861 = vsel %vm1045, %v3852, 0
        %3863 = vmatprep.subr.mxu0 0.0
        %3864 = vmatpush1.msra.mxu0 0.0
        %3865 = vmatprep.subr.mxu0 0.0
        %3866 = vmatpush1.msra.mxu0 0.0
        %3867 = vmatprep.subr.mxu0 0.0
        %3868 = vmatpush1.msra.mxu0 0.0
        %3869 = vmatprep.subr.mxu0 0.0
        %3870 = vmatpush1.msra.mxu0 0.0
        %3871 = vmatprep.subr.mxu0 0.0
        %3872 = vmatpush1.msra.mxu0 0.0
        %3873 = vmatprep.subr.mxu0 0.0
        %3874 = vmatpush1.msra.mxu0 0.0
        %3875 = vmatprep.subr.mxu0 0.0
        %3876 = vmatpush1.msra.mxu0 0.0
        %3877 = vmatprep.subr.mxu0 0.0
        %3878 = vmatpush1.msra.mxu0 0.0
        %3879 = vmatprep.subr.mxu0 0.0
        %3880 = vmatpush1.msra.mxu0 0.0
        %3881 = vmatprep.subr.mxu0 0.0
        %3882 = vmatpush1.msra.mxu0 0.0
        %3883 = vmatprep.subr.mxu0 0.0
        %3884 = vmatpush1.msra.mxu0 0.0
        %3885 = vmatprep.subr.mxu0 0.0
        %3886 = vmatpush1.msra.mxu0 0.0
        %3887 = vmatprep.subr.mxu0 0.0
        %3888 = vmatpush1.msra.mxu0 0.0
        %3889 = vmatprep.subr.mxu0 0.0
        %3890 = vmatpush1.msra.mxu0 0.0
        %3891 = vmatprep.subr.mxu0 0.0
        %3892 = vmatpush1.msra.mxu0 0.0
        %3893 = vmatprep.subr.mxu0 %v547
        %3894 = vmatpush1.msra.mxu0 %v546
        %3895 = vmatprep.subr.mxu0 0.0
        %3896 = vmatpush2.msra.mxu0 0.0
        %3897 = vmatprep.subr.mxu0 0.0
        %3898 = vmatpush2.msra.mxu0 0.0
        %3899 = vmatprep.subr.mxu0 0.0
        %3900 = vmatpush2.msra.mxu0 0.0
        %3901 = vmatprep.subr.mxu0 0.0
        %3902 = vmatpush2.msra.mxu0 0.0
        %3903 = vmatprep.subr.mxu0 0.0
        %3904 = vmatpush2.msra.mxu0 0.0
        %3905 = vmatprep.subr.mxu0 0.0
        %3906 = vmatpush2.msra.mxu0 0.0
        %3907 = vmatprep.subr.mxu0 0.0
        %3908 = vmatpush2.msra.mxu0 0.0
        %3909 = vmatprep.subr.mxu0 0.0
        %3910 = vmatpush2.msra.mxu0 0.0
        %3911 = vmatprep.subr.mxu0 0.0
        %3912 = vmatpush2.msra.mxu0 0.0
        %3913 = vmatprep.subr.mxu0 0.0
        %3914 = vmatpush2.msra.mxu0 0.0
        %3915 = vmatprep.subr.mxu0 0.0
        %3916 = vmatpush2.msra.mxu0 0.0
        %3917 = vmatprep.subr.mxu0 0.0
        %3918 = vmatpush2.msra.mxu0 0.0
        %3919 = vmatprep.subr.mxu0 0.0
        %3920 = vmatpush2.msra.mxu0 0.0
        %3921 = vmatprep.subr.mxu0 0.0
        %3922 = vmatpush2.msra.mxu0 0.0
        %3923 = vmatprep.subr.mxu0 0.0
        %3924 = vmatpush2.msra.mxu0 0.0
        %3925 = vmatprep.subr.mxu0 0.0
        %3926 = vmatpush2.msra.mxu0 0.0
        %3927 = vmatprep.mubr.f32.mxu0 0.0
        %3928 = vmatmul.mubr.f32.gmra.mxu0 %v3861
        %v3929 = vpop.f32.mrf.mxu0
        %v3930 = vadd.f32 0.0, %v3929
        %v3931 = vpop.f32.mrf.mxu0
        %v3932 = vadd.f32 0.0, %v3931
        %3933 = vdwg.mxu0
        %3934 = vmatprep.subr.mxu0 0.0
        %3935 = vmatpush1.msra.mxu0 0.0
        %3936 = vmatprep.subr.mxu0 0.0
        %3937 = vmatpush1.msra.mxu0 0.0
        %3938 = vmatprep.subr.mxu0 0.0
        %3939 = vmatpush1.msra.mxu0 0.0
        %3940 = vmatprep.subr.mxu0 0.0
        %3941 = vmatpush1.msra.mxu0 0.0
        %3942 = vmatprep.subr.mxu0 0.0
        %3943 = vmatpush1.msra.mxu0 0.0
        %3944 = vmatprep.subr.mxu0 0.0
        %3945 = vmatpush1.msra.mxu0 0.0
        %3946 = vmatprep.subr.mxu0 0.0
        %3947 = vmatpush1.msra.mxu0 0.0
        %3948 = vmatprep.subr.mxu0 0.0
        %3949 = vmatpush1.msra.mxu0 0.0
        %3950 = vmatprep.subr.mxu0 0.0
        %3951 = vmatpush1.msra.mxu0 0.0
        %3952 = vmatprep.subr.mxu0 0.0
        %3953 = vmatpush1.msra.mxu0 0.0
        %3954 = vmatprep.subr.mxu0 0.0
        %3955 = vmatpush1.msra.mxu0 0.0
        %3956 = vmatprep.subr.mxu0 0.0
        %3957 = vmatpush1.msra.mxu0 0.0
        %3958 = vmatprep.subr.mxu0 0.0
        %3959 = vmatpush1.msra.mxu0 0.0
        %3960 = vmatprep.subr.mxu0 0.0
        %3961 = vmatpush1.msra.mxu0 0.0
        %3962 = vmatprep.subr.mxu0 0.0
        %3963 = vmatpush1.msra.mxu0 0.0
        %3964 = vmatprep.subr.mxu0 %v549
        %3965 = vmatpush1.msra.mxu0 %v548
        %3966 = vmatprep.subr.mxu0 0.0
        %3967 = vmatpush2.msra.mxu0 0.0
        %3968 = vmatprep.subr.mxu0 0.0
        %3969 = vmatpush2.msra.mxu0 0.0
        %3970 = vmatprep.subr.mxu0 0.0
        %3971 = vmatpush2.msra.mxu0 0.0
        %3972 = vmatprep.subr.mxu0 0.0
        %3973 = vmatpush2.msra.mxu0 0.0
        %3974 = vmatprep.subr.mxu0 0.0
        %3975 = vmatpush2.msra.mxu0 0.0
        %3976 = vmatprep.subr.mxu0 0.0
        %3977 = vmatpush2.msra.mxu0 0.0
        %3978 = vmatprep.subr.mxu0 0.0
        %3979 = vmatpush2.msra.mxu0 0.0
        %3980 = vmatprep.subr.mxu0 0.0
        %3981 = vmatpush2.msra.mxu0 0.0
        %3982 = vmatprep.subr.mxu0 0.0
        %3983 = vmatpush2.msra.mxu0 0.0
        %3984 = vmatprep.subr.mxu0 0.0
        %3985 = vmatpush2.msra.mxu0 0.0
        %3986 = vmatprep.subr.mxu0 0.0
        %3987 = vmatpush2.msra.mxu0 0.0
        %3988 = vmatprep.subr.mxu0 0.0
        %3989 = vmatpush2.msra.mxu0 0.0
        %3990 = vmatprep.subr.mxu0 0.0
        %3991 = vmatpush2.msra.mxu0 0.0
        %3992 = vmatprep.subr.mxu0 0.0
        %3993 = vmatpush2.msra.mxu0 0.0
        %3994 = vmatprep.subr.mxu0 0.0
        %3995 = vmatpush2.msra.mxu0 0.0
        %3996 = vmatprep.subr.mxu0 0.0
        %3997 = vmatpush2.msra.mxu0 0.0
        %3998 = vmatprep.mubr.f32.mxu0 0.0
        %3999 = vmatmul.mubr.f32.gmra.mxu0 %v3861
        %v4000 = vpop.f32.mrf.mxu0
        %v4001 = vadd.f32 0.0, %v4000
        %v4002 = vpop.f32.mrf.mxu0
        %v4003 = vadd.f32 0.0, %v4002
        %4004 = vdwg.mxu0
        %v4005 = vmul.f32 %v3510, %v3930
        %v4006 = vmul.f32 %v3512, %v3932
        %v4007 = vmul.f32 %v3551, %v4001
        %v4008 = vmul.f32 %v3553, %v4003
        %v4010 = vsel %vm1045, %v3859, 0
        %4012 = vmatprep.subr.mxu0 0.0
        %4013 = vmatpush1.msra.mxu0 0.0
        %4014 = vmatprep.subr.mxu0 0.0
        %4015 = vmatpush1.msra.mxu0 0.0
        %4016 = vmatprep.subr.mxu0 0.0
        %4017 = vmatpush1.msra.mxu0 0.0
        %4018 = vmatprep.subr.mxu0 0.0
        %4019 = vmatpush1.msra.mxu0 0.0
        %4020 = vmatprep.subr.mxu0 0.0
        %4021 = vmatpush1.msra.mxu0 0.0
        %4022 = vmatprep.subr.mxu0 0.0
        %4023 = vmatpush1.msra.mxu0 0.0
        %4024 = vmatprep.subr.mxu0 0.0
        %4025 = vmatpush1.msra.mxu0 0.0
        %4026 = vmatprep.subr.mxu0 0.0
        %4027 = vmatpush1.msra.mxu0 0.0
        %4028 = vmatprep.subr.mxu0 0.0
        %4029 = vmatpush1.msra.mxu0 0.0
        %4030 = vmatprep.subr.mxu0 0.0
        %4031 = vmatpush1.msra.mxu0 0.0
        %4032 = vmatprep.subr.mxu0 0.0
        %4033 = vmatpush1.msra.mxu0 0.0
        %4034 = vmatprep.subr.mxu0 0.0
        %4035 = vmatpush1.msra.mxu0 0.0
        %4036 = vmatprep.subr.mxu0 0.0
        %4037 = vmatpush1.msra.mxu0 0.0
        %4038 = vmatprep.subr.mxu0 0.0
        %4039 = vmatpush1.msra.mxu0 0.0
        %4040 = vmatprep.subr.mxu0 0.0
        %4041 = vmatpush1.msra.mxu0 0.0
        %4042 = vmatprep.subr.mxu0 %v547
        %4043 = vmatpush1.msra.mxu0 %v546
        %4044 = vmatprep.subr.mxu0 0.0
        %4045 = vmatpush2.msra.mxu0 0.0
        %4046 = vmatprep.subr.mxu0 0.0
        %4047 = vmatpush2.msra.mxu0 0.0
        %4048 = vmatprep.subr.mxu0 0.0
        %4049 = vmatpush2.msra.mxu0 0.0
        %4050 = vmatprep.subr.mxu0 0.0
        %4051 = vmatpush2.msra.mxu0 0.0
        %4052 = vmatprep.subr.mxu0 0.0
        %4053 = vmatpush2.msra.mxu0 0.0
        %4054 = vmatprep.subr.mxu0 0.0
        %4055 = vmatpush2.msra.mxu0 0.0
        %4056 = vmatprep.subr.mxu0 0.0
        %4057 = vmatpush2.msra.mxu0 0.0
        %4058 = vmatprep.subr.mxu0 0.0
        %4059 = vmatpush2.msra.mxu0 0.0
        %4060 = vmatprep.subr.mxu0 0.0
        %4061 = vmatpush2.msra.mxu0 0.0
        %4062 = vmatprep.subr.mxu0 0.0
        %4063 = vmatpush2.msra.mxu0 0.0
        %4064 = vmatprep.subr.mxu0 0.0
        %4065 = vmatpush2.msra.mxu0 0.0
        %4066 = vmatprep.subr.mxu0 0.0
        %4067 = vmatpush2.msra.mxu0 0.0
        %4068 = vmatprep.subr.mxu0 0.0
        %4069 = vmatpush2.msra.mxu0 0.0
        %4070 = vmatprep.subr.mxu0 0.0
        %4071 = vmatpush2.msra.mxu0 0.0
        %4072 = vmatprep.subr.mxu0 0.0
        %4073 = vmatpush2.msra.mxu0 0.0
        %4074 = vmatprep.subr.mxu0 0.0
        %4075 = vmatpush2.msra.mxu0 0.0
        %4076 = vmatprep.mubr.f32.mxu0 0.0
        %4077 = vmatmul.mubr.f32.gmra.mxu0 %v4010
        %v4078 = vpop.f32.mrf.mxu0
        %v4079 = vadd.f32 0.0, %v4078
        %v4080 = vpop.f32.mrf.mxu0
        %v4081 = vadd.f32 0.0, %v4080
        %4082 = vdwg.mxu0
        %4083 = vmatprep.subr.mxu0 0.0
        %4084 = vmatpush1.msra.mxu0 0.0
        %4085 = vmatprep.subr.mxu0 0.0
        %4086 = vmatpush1.msra.mxu0 0.0
        %4087 = vmatprep.subr.mxu0 0.0
        %4088 = vmatpush1.msra.mxu0 0.0
        %4089 = vmatprep.subr.mxu0 0.0
        %4090 = vmatpush1.msra.mxu0 0.0
        %4091 = vmatprep.subr.mxu0 0.0
        %4092 = vmatpush1.msra.mxu0 0.0
        %4093 = vmatprep.subr.mxu0 0.0
        %4094 = vmatpush1.msra.mxu0 0.0
        %4095 = vmatprep.subr.mxu0 0.0
        %4096 = vmatpush1.msra.mxu0 0.0
        %4097 = vmatprep.subr.mxu0 0.0
        %4098 = vmatpush1.msra.mxu0 0.0
        %4099 = vmatprep.subr.mxu0 0.0
        %4100 = vmatpush1.msra.mxu0 0.0
        %4101 = vmatprep.subr.mxu0 0.0
        %4102 = vmatpush1.msra.mxu0 0.0
        %4103 = vmatprep.subr.mxu0 0.0
        %4104 = vmatpush1.msra.mxu0 0.0
        %4105 = vmatprep.subr.mxu0 0.0
        %4106 = vmatpush1.msra.mxu0 0.0
        %4107 = vmatprep.subr.mxu0 0.0
        %4108 = vmatpush1.msra.mxu0 0.0
        %4109 = vmatprep.subr.mxu0 0.0
        %4110 = vmatpush1.msra.mxu0 0.0
        %4111 = vmatprep.subr.mxu0 0.0
        %4112 = vmatpush1.msra.mxu0 0.0
        %4113 = vmatprep.subr.mxu0 %v549
        %4114 = vmatpush1.msra.mxu0 %v548
        %4115 = vmatprep.subr.mxu0 0.0
        %4116 = vmatpush2.msra.mxu0 0.0
        %4117 = vmatprep.subr.mxu0 0.0
        %4118 = vmatpush2.msra.mxu0 0.0
        %4119 = vmatprep.subr.mxu0 0.0
        %4120 = vmatpush2.msra.mxu0 0.0
        %4121 = vmatprep.subr.mxu0 0.0
        %4122 = vmatpush2.msra.mxu0 0.0
        %4123 = vmatprep.subr.mxu0 0.0
        %4124 = vmatpush2.msra.mxu0 0.0
        %4125 = vmatprep.subr.mxu0 0.0
        %4126 = vmatpush2.msra.mxu0 0.0
        %4127 = vmatprep.subr.mxu0 0.0
        %4128 = vmatpush2.msra.mxu0 0.0
        %4129 = vmatprep.subr.mxu0 0.0
        %4130 = vmatpush2.msra.mxu0 0.0
        %4131 = vmatprep.subr.mxu0 0.0
        %4132 = vmatpush2.msra.mxu0 0.0
        %4133 = vmatprep.subr.mxu0 0.0
        %4134 = vmatpush2.msra.mxu0 0.0
        %4135 = vmatprep.subr.mxu0 0.0
        %4136 = vmatpush2.msra.mxu0 0.0
        %4137 = vmatprep.subr.mxu0 0.0
        %4138 = vmatpush2.msra.mxu0 0.0
        %4139 = vmatprep.subr.mxu0 0.0
        %4140 = vmatpush2.msra.mxu0 0.0
        %4141 = vmatprep.subr.mxu0 0.0
        %4142 = vmatpush2.msra.mxu0 0.0
        %4143 = vmatprep.subr.mxu0 0.0
        %4144 = vmatpush2.msra.mxu0 0.0
        %4145 = vmatprep.subr.mxu0 0.0
        %4146 = vmatpush2.msra.mxu0 0.0
        %4147 = vmatprep.mubr.f32.mxu0 0.0
        %4148 = vmatmul.mubr.f32.gmra.mxu0 %v4010
        %v4149 = vpop.f32.mrf.mxu0
        %v4150 = vadd.f32 0.0, %v4149
        %v4151 = vpop.f32.mrf.mxu0
        %v4152 = vadd.f32 0.0, %v4151
        %4153 = vdwg.mxu0
        %v4154 = vadd.f32 %v4005, %v4079
        %v4155 = vadd.f32 %v4006, %v4081
        %v4156 = vadd.f32 %v4007, %v4150
        %v4157 = vadd.f32 %v4008, %v4152
        %v4158 = vmul.f32 %v4154, 0.5
        %v4159 = vmul.f32 %v4155, 0.5
        %v4160 = vmul.f32 %v4156, 0.5
        %v4161 = vmul.f32 %v4157, 0.5
        %v4162 = vmul.f32 %v4154, 0.70710677
        %v4163 = vmul.f32 %v4155, 0.70710677
        %v4164 = vmul.f32 %v4156, 0.70710677
        %v4165 = vmul.f32 %v4157, 0.70710677
        %v4166 = vand.u32 2147483647, %v4162
        %v4167 = vand.u32 2147483647, %v4163
        %v4168 = vand.u32 2147483647, %v4164
        %v4169 = vand.u32 2147483647, %v4165
        %v4170 = vmul.f32 %v4166, 0.3275911
        %v4171 = vmul.f32 %v4167, 0.3275911
        %v4172 = vmul.f32 %v4168, 0.3275911
        %v4173 = vmul.f32 %v4169, 0.3275911
        %v4174 = vadd.f32 %v4170, 1.0
        %v4175 = vadd.f32 %v4171, 1.0
        %v4176 = vadd.f32 %v4172, 1.0
        %v4177 = vadd.f32 %v4173, 1.0
        %v4178 = vrcp.pop %v4174
        %v4179 = vmul.f32 1.0, %v4178
        %v4180 = vrcp.pop %v4175
        %v4181 = vmul.f32 1.0, %v4180
        %v4182 = vrcp.pop %v4176
        %v4183 = vmul.f32 1.0, %v4182
        %v4184 = vrcp.pop %v4177
        %v4185 = vmul.f32 1.0, %v4184
        %v4186 = vmul.f32 %v4179, 1.0614054
        %v4187 = vmul.f32 %v4181, 1.0614054
        %v4188 = vmul.f32 %v4183, 1.0614054
        %v4189 = vmul.f32 %v4185, 1.0614054
        %v4190 = vadd.f32 %v4186, -1.4531521
        %v4191 = vadd.f32 %v4187, -1.4531521
        %v4192 = vadd.f32 %v4188, -1.4531521
        %v4193 = vadd.f32 %v4189, -1.4531521
        %v4194 = vmul.f32 %v4190, %v4179
        %v4195 = vmul.f32 %v4191, %v4181
        %v4196 = vmul.f32 %v4192, %v4183
        %v4197 = vmul.f32 %v4193, %v4185
        %v4198 = vadd.f32 %v4194, 1.4214138
        %v4199 = vadd.f32 %v4195, 1.4214138
        %v4200 = vadd.f32 %v4196, 1.4214138
        %v4201 = vadd.f32 %v4197, 1.4214138
        %v4202 = vmul.f32 %v4198, %v4179
        %v4203 = vmul.f32 %v4199, %v4181
        %v4204 = vmul.f32 %v4200, %v4183
        %v4205 = vmul.f32 %v4201, %v4185
        %v4206 = vadd.f32 %v4202, -0.28449672
        %v4207 = vadd.f32 %v4203, -0.28449672
        %v4208 = vadd.f32 %v4204, -0.28449672
        %v4209 = vadd.f32 %v4205, -0.28449672
        %v4210 = vmul.f32 %v4206, %v4179
        %v4211 = vmul.f32 %v4207, %v4181
        %v4212 = vmul.f32 %v4208, %v4183
        %v4213 = vmul.f32 %v4209, %v4185
        %v4214 = vadd.f32 %v4210, 0.2548296
        %v4215 = vadd.f32 %v4211, 0.2548296
        %v4216 = vadd.f32 %v4212, 0.2548296
        %v4217 = vadd.f32 %v4213, 0.2548296
        %v4218 = vmul.f32 %v4214, %v4179
        %v4219 = vmul.f32 %v4215, %v4181
        %v4220 = vmul.f32 %v4216, %v4183
        %v4221 = vmul.f32 %v4217, %v4185
        %v4222 = vsub.f32 0.0, %v4166
        %v4223 = vsub.f32 0.0, %v4167
        %v4224 = vsub.f32 0.0, %v4168
        %v4225 = vsub.f32 0.0, %v4169
        %v4226 = vmul.f32 %v4222, %v4166
        %v4227 = vmul.f32 %v4223, %v4167
        %v4228 = vmul.f32 %v4224, %v4168
        %v4229 = vmul.f32 %v4225, %v4169
        %v4230 = vmul.f32 %v4226, 1.442695
        %v4231 = vpow.pop %v4230
        %v4232 = vmul.f32 %v4227, 1.442695
        %v4233 = vpow.pop %v4232
        %v4234 = vmul.f32 %v4228, 1.442695
        %v4235 = vpow.pop %v4234
        %v4236 = vmul.f32 %v4229, 1.442695
        %v4237 = vpow.pop %v4236
        %v4238 = vmul.f32 %v4218, %v4231
        %v4239 = vmul.f32 %v4219, %v4233
        %v4240 = vmul.f32 %v4220, %v4235
        %v4241 = vmul.f32 %v4221, %v4237
        %v4242 = vsub.f32 1.0, %v4238
        %v4243 = vsub.f32 1.0, %v4239
        %v4244 = vsub.f32 1.0, %v4240
        %v4245 = vsub.f32 1.0, %v4241
        %vm4246 = vcmp.ge.f32.partialorder %v4162, 0.0
        %vm4247 = vcmp.ge.f32.partialorder %v4163, 0.0
        %vm4248 = vcmp.ge.f32.partialorder %v4164, 0.0
        %vm4249 = vcmp.ge.f32.partialorder %v4165, 0.0
        %v4250 = vsub.f32 0.0, %v4242
        %v4251 = vsub.f32 0.0, %v4243
        %v4252 = vsub.f32 0.0, %v4244
        %v4253 = vsub.f32 0.0, %v4245
        %v4254 = vsel %vm4246, %v4242, %v4250
        %v4255 = vsel %vm4247, %v4243, %v4251
        %v4256 = vsel %vm4248, %v4244, %v4252
        %v4257 = vsel %vm4249, %v4245, %v4253
        %v4258 = vadd.f32 %v4254, 1.0
        %v4259 = vadd.f32 %v4255, 1.0
        %v4260 = vadd.f32 %v4256, 1.0
        %v4261 = vadd.f32 %v4257, 1.0
        %v4262 = vmul.f32 %v4158, %v4258
        %v4263 = vmul.f32 %v4159, %v4259
        %v4264 = vmul.f32 %v4160, %v4260
        %v4265 = vmul.f32 %v4161, %v4261
        %v4266 = vld [vmem:[#allocation7] sm:$0xf]
        %v4267 = vpack.c.bf16 %v4262, %v4262
        %v4268 = vpack.c.bf16 %v4263, %v4263
        %v4269 = vpack.c.bf16 %v4264, %v4264
        %v4270 = vpack.c.bf16 %v4265, %v4265
        %v4271 = vld [vmem:[%s7 + $0x60] sm:$0xff]
        %4273 = vset.pattern.permute.xlu0 0
        %4274 = vperm.xlu0 %4273, %v4271
        %v4275 = vpop.permute.xlu0 %4274
        %v4278 = vsel %vm1045, %v4266, 0
        %v4281 = vsel %vm3462, %v4267, 0
        %v4284 = vsel %vm3462, %v4268, 0
        %v4287 = vsel %vm3462, %v4269, 0
        %v4290 = vsel %vm3462, %v4270, 0
        %4292 = vmatprep.subr.bf16.mxu0 0
        %4293 = vmatpush1.bf16.msra.mxu0 0
        %4294 = vmatprep.subr.bf16.mxu0 0
        %4295 = vmatpush1.bf16.msra.mxu0 0
        %4296 = vmatprep.subr.bf16.mxu0 0
        %4297 = vmatpush1.bf16.msra.mxu0 0
        %4298 = vmatprep.subr.bf16.mxu0 0
        %4299 = vmatpush1.bf16.msra.mxu0 0
        %4300 = vmatprep.subr.bf16.mxu0 0
        %4301 = vmatpush1.bf16.msra.mxu0 0
        %4302 = vmatprep.subr.bf16.mxu0 0
        %4303 = vmatpush1.bf16.msra.mxu0 0
        %4304 = vmatprep.subr.bf16.mxu0 0
        %4305 = vmatpush1.bf16.msra.mxu0 0
        %4306 = vmatprep.subr.bf16.mxu0 %v4284
        %4307 = vmatpush1.bf16.msra.mxu0 %v4281
        %4308 = vmatprep.subr.bf16.mxu0 0
        %4309 = vmatpush2.bf16.msra.mxu0 0
        %4310 = vmatprep.subr.bf16.mxu0 0
        %4311 = vmatpush2.bf16.msra.mxu0 0
        %4312 = vmatprep.subr.bf16.mxu0 0
        %4313 = vmatpush2.bf16.msra.mxu0 0
        %4314 = vmatprep.subr.bf16.mxu0 0
        %4315 = vmatpush2.bf16.msra.mxu0 0
        %4316 = vmatprep.subr.bf16.mxu0 0
        %4317 = vmatpush2.bf16.msra.mxu0 0
        %4318 = vmatprep.subr.bf16.mxu0 0
        %4319 = vmatpush2.bf16.msra.mxu0 0
        %4320 = vmatprep.subr.bf16.mxu0 0
        %4321 = vmatpush2.bf16.msra.mxu0 0
        %4322 = vmatprep.subr.bf16.mxu0 0
        %4323 = vmatpush2.bf16.msra.mxu0 0
        %4324 = vmatprep.mubr.bf16.mxu0 0
        %4325 = vmatmul.mubr.bf16.gmra.mxu0 %v4278
        %v4326 = vpop.f32.mrf.mxu0
        %v4327 = vadd.f32 %v4275, %v4326
        %v4328 = vpop.f32.mrf.mxu0
        %v4329 = vadd.f32 %v4275, %v4328
        %v4330 = vpop.f32.mrf.mxu0
        %v4331 = vpop.f32.mrf.mxu0
        %4332 = vdwg.mxu0
        %4333 = vmatprep.subr.bf16.mxu0 0
        %4334 = vmatpush1.bf16.msra.mxu0 0
        %4335 = vmatprep.subr.bf16.mxu0 0
        %4336 = vmatpush1.bf16.msra.mxu0 0
        %4337 = vmatprep.subr.bf16.mxu0 0
        %4338 = vmatpush1.bf16.msra.mxu0 0
        %4339 = vmatprep.subr.bf16.mxu0 0
        %4340 = vmatpush1.bf16.msra.mxu0 0
        %4341 = vmatprep.subr.bf16.mxu0 0
        %4342 = vmatpush1.bf16.msra.mxu0 0
        %4343 = vmatprep.subr.bf16.mxu0 0
        %4344 = vmatpush1.bf16.msra.mxu0 0
        %4345 = vmatprep.subr.bf16.mxu0 0
        %4346 = vmatpush1.bf16.msra.mxu0 0
        %4347 = vmatprep.subr.bf16.mxu0 %v4290
        %4348 = vmatpush1.bf16.msra.mxu0 %v4287
        %4349 = vmatprep.subr.bf16.mxu0 0
        %4350 = vmatpush2.bf16.msra.mxu0 0
        %4351 = vmatprep.subr.bf16.mxu0 0
        %4352 = vmatpush2.bf16.msra.mxu0 0
        %4353 = vmatprep.subr.bf16.mxu0 0
        %4354 = vmatpush2.bf16.msra.mxu0 0
        %4355 = vmatprep.subr.bf16.mxu0 0
        %4356 = vmatpush2.bf16.msra.mxu0 0
        %4357 = vmatprep.subr.bf16.mxu0 0
        %4358 = vmatpush2.bf16.msra.mxu0 0
        %4359 = vmatprep.subr.bf16.mxu0 0
        %4360 = vmatpush2.bf16.msra.mxu0 0
        %4361 = vmatprep.subr.bf16.mxu0 0
        %4362 = vmatpush2.bf16.msra.mxu0 0
        %4363 = vmatprep.subr.bf16.mxu0 0
        %4364 = vmatpush2.bf16.msra.mxu0 0
        %4365 = vmatprep.mubr.bf16.mxu0 0
        %4366 = vmatmul.mubr.bf16.gmra.mxu0 %v4278
        %v4367 = vpop.f32.mrf.mxu0
        %v4368 = vadd.f32 %v4275, %v4367
        %v4369 = vpop.f32.mrf.mxu0
        %v4370 = vadd.f32 %v4275, %v4369
        %v4371 = vpop.f32.mrf.mxu0
        %v4372 = vpop.f32.mrf.mxu0
        %4373 = vdwg.mxu0
        %4374 = vst [vmem:[%s477] sm:$0xff] %v4327
        %4375 = vst [vmem:[%s477 + $0x8] sm:$0xff] %v4329
        %4376 = vst [vmem:[%s477 + $0x10] sm:$0xff] %v4368
        %4377 = vst [vmem:[%s477 + $0x18] sm:$0xff] %v4370
        %s4378 = sand.u32 %s254, 1
        %s4379 = scalar_lea.sflag [#allocation6], %s4378
        %s4380 = sand.u32 %s254, 1
        %s4381 = smul.addr %s4380, 32
        %s4382 = scalar_lea.vmem [#allocation9], %s4381
        // Predicated region
        $region115: #{tpu_custom_call.1} parent=97 // pred_check
          %p4383 = pneg %p264
        $region116: #{tpu_custom_call.1} parent=97 // pred_check_branch
          %4385 = sbr.rel (%p4383) target = $region118
        $region117: #{tpu_custom_call.1} parent=97 // pred_region
          %s4386 = smul.u32 4, %s26
          %s4388 = ssub.s32 512, 512
          %4389 = vsyncadd %s4379, %s4388
          %s4390 = smul.addr %s4386, 128
          %s4391 = scalar_lea.hbm %s10, %s4390
          %s4393 = sshll.u32 %s4382, 4
          %s4394 = int_to_ptr.vmem [resolvable:$true] %s4393
          %4396 = dma.vmem_to_hbm [thread:$0]  %s4394, 512, %s4391, %s4379
        $region118: #{tpu_custom_call.1} parent=97 // pred_fallthru
          _
      $region98: #{tpu_custom_call.1} parent=5 // pred_fallthru
        _
      %p4397 = scmp.le.s32.totalorder 2, %s21
      // Predicated region
      $region119: #{tpu_custom_call.1} parent=5 // pred_check
        %p4398 = pneg %p4397
      $region120: #{tpu_custom_call.1} parent=5 // pred_check_branch
        %4400 = sbr.rel (%p4398) target = $region122
      $region121: #{tpu_custom_call.1} parent=5 // pred_region
        %s4401 = ssub.s32 %s21, 2
        // Predicated region
        $region123: #{tpu_custom_call.1} parent=121 // pred_check
          %p4402 = pneg %p270
        $region124: #{tpu_custom_call.1} parent=121 // pred_check_branch
          %4404 = sbr.rel (%p4402) target = $region126
        $region125: #{tpu_custom_call.1} parent=121 // pred_region
          %s4405 = sand.u32 %s255, 1
          %s4406 = scalar_lea.sflag [#allocation6], %s4405
          %s4407 = sand.u32 %s255, 1
          %s4408 = smul.addr %s4407, 32
          %s4409 = scalar_lea.vmem [#allocation9], %s4408
          %4410 = dma.done %s4406, 512
        $region126: #{tpu_custom_call.1} parent=121 // pred_fallthru
          _
      $region122: #{tpu_custom_call.1} parent=5 // pred_fallthru
        _
    $region6: #{tpu_custom_call.1} parent=1 // loop_footer
      %s25 = sadd.s32 1, %s21
    $region7: #{tpu_custom_call.1} parent=1 // loop_footer_branch
      %20 = sbr.rel target = $region3
    $region8: #{tpu_custom_call.1} parent=1 // loop_exit
      _
    %4411 = vsyncpa [#allocation5], 1
    %s4412 = scalar_lea.sflag [#allocation5], 1
    %4413 = vsyncpa %s4412, 1
    %4414 = vsyncpa [#allocation8], 1
    %4415 = vsyncpa [#allocation6], 1
    %s4416 = scalar_lea.sflag [#allocation6], 1
    %4417 = vsyncpa %s4416, 1

</llo_original>
